<compile_context>
chip_gen: v5e
topology: v5e:2x2
jax: 0.10.0
libtpu: 0.0.40
codegen_flags: <defaults>
</compile_context>

<pallas_src>
import math
from functools import partial

import jax
import jax.numpy as jnp
from jax.experimental import pallas as pl
from jax.experimental.pallas import tpu as pltpu

EPS = 1e-5  # nn.LayerNorm default


# ---------------------------------------------------------------------------
# shared math helpers (usable inside the kernel and in the pure-JAX reference)
# ---------------------------------------------------------------------------
def _layernorm(x, g, b):
    mu = jnp.mean(x, axis=-1, keepdims=True)
    var = jnp.mean(jnp.square(x - mu), axis=-1, keepdims=True)
    return (x - mu) * jax.lax.rsqrt(var + EPS) * g + b


def _ffn(x, w1, b1, w2, b2):
    # Linear(D,4D) -> ReLU -> Linear(4D,D); Dropout(0.2) is identity at inference.
    # TODO(synk): nn.Dropout(0.2) in pfnn not applied (inference semantics).
    h = jnp.maximum(jnp.dot(x, w1, preferred_element_type=jnp.float32) + b1, 0.0)
    return jnp.dot(h, w2, preferred_element_type=jnp.float32) + b2


# ---------------------------------------------------------------------------
# in-kernel attention (2-D activations: (S, D) per batch element)
# ---------------------------------------------------------------------------
def _attn(xq, xkv, wq, wk, wv, wo, bq, bk, bv, bo, o_scr, num_heads):
    """Multi-head attention with fused full-width QKV / out projections."""
    Sq, D = xq.shape
    Dh = D // num_heads
    scale = 1.0 / math.sqrt(Dh)
    f32 = jnp.float32

    # Full-width projections (K = N = D): good MXU utilization, bias added once.
    q = jnp.dot(xq, wq, preferred_element_type=f32) + bq
    k = jnp.dot(xkv, wk, preferred_element_type=f32) + bk
    v = jnp.dot(xkv, wv, preferred_element_type=f32) + bv

    # Per-head score / softmax / PV; head outputs assembled in VMEM scratch.
    for h in range(num_heads):
        sl = slice(h * Dh, (h + 1) * Dh)
        qh, kh, vh = q[:, sl], k[:, sl], v[:, sl]
        s = jax.lax.dot_general(qh, kh, (((1,), (1,)), ((), ())),
                                preferred_element_type=f32) * scale
        s = s - jnp.max(s, axis=-1, keepdims=True)
        p = jnp.exp(s)
        p = p * pl.reciprocal(jnp.sum(p, axis=-1, keepdims=True), approx=True)
        o_scr[:, sl] = jnp.dot(p, vh, preferred_element_type=f32)

    # Single full-width output projection.
    return jnp.dot(o_scr[...], wo, preferred_element_type=f32) + bo


# ---------------------------------------------------------------------------
# Pallas kernels
# ---------------------------------------------------------------------------
def decoder_stack_kernel(
    x_ref, enc_ref,
    swq, swk, swv, swo, sbq, sbk, sbv, sbo,          # self-attention (stacked over L)
    cwq, cwk, cwv, cwo, cbq, cbk, cbv, cbo,          # cross-attention
    g1, b1, g2, b2,                                   # layer norms
    fw1, fb1, fw2, fb2,                               # position-wise FFN
    out_ref,
    x_scr, o_scr,                                     # VMEM scratch
    *, num_heads):
    l = pl.program_id(1)

    @pl.when(l == 0)
    def _():
        x_scr[...] = x_ref[0]                         # load embedded input (S, D)

    x = x_scr[...]                                    # activation carried across layers
    enc = enc_ref[0]                                  # (S_enc, D)

    # self attention + residual + LN1
    a = _attn(x, x, swq[0], swk[0], swv[0], swo[0],
              sbq[0], sbk[0], sbv[0], sbo[0], o_scr, num_heads)
    h1 = _layernorm(a + x, g1[0], b1[0])

    # cross attention + residual + LN2
    c = _attn(h1, enc, cwq[0], cwk[0], cwv[0], cwo[0],
              cbq[0], cbk[0], cbv[0], cbo[0], o_scr, num_heads)
    h2 = _layernorm(c + h1, g2[0], b2[0])

    # position-wise feed-forward (no residual after FFN, per the module)
    y = _ffn(h2, fw1[0], fb1[0], fw2[0], fb2[0])
    x_scr[...] = y                                    # carry to next layer

    @pl.when(l == pl.num_programs(1) - 1)
    def _():
        out_ref[0] = y


def tied_proj_kernel(x_ref, wt_ref, out_ref):
    # out = x @ embed.T, embed pre-transposed in the wrapper (no in-kernel transpose).
    out_ref[0] = jnp.dot(x_ref[0], wt_ref[...], preferred_element_type=jnp.float32)


# ---------------------------------------------------------------------------
# wrappers
# ---------------------------------------------------------------------------
_VMEM_LIMIT = 48 * 1024 * 1024   # fits v7x's 64 MiB physical VMEM with headroom

_W_KEYS = ('s_wq', 's_wk', 's_wv', 's_wo', 's_bq', 's_bk', 's_bv', 's_bo',
           'c_wq', 'c_wk', 'c_wv', 'c_wo', 'c_bq', 'c_bk', 'c_bv', 'c_bo',
           'ln1_g', 'ln1_b', 'ln2_g', 'ln2_b',
           'f_w1', 'f_b1', 'f_w2', 'f_b2')


def run_decoder_stack(x, enc, params, num_heads):
    B, S, D = x.shape
    S_enc = enc.shape[1]
    L = params['s_wq'].shape[0]

    w_args = [params[k] for k in _W_KEYS]
    widx = lambda b, l: (l, 0, 0)                       # weights indexed by layer only
    w_specs = [pl.BlockSpec((1,) + params[k].shape[1:], widx) for k in _W_KEYS]

    return pl.pallas_call(
        partial(decoder_stack_kernel, num_heads=num_heads),
        out_shape=jax.ShapeDtypeStruct((B, S, D), jnp.float32),
        grid_spec=pltpu.PrefetchScalarGridSpec(
            num_scalar_prefetch=0,
            grid=(B, L),
            in_specs=[pl.BlockSpec((1, S, D), lambda b, l: (b, 0, 0)),
                      pl.BlockSpec((1, S_enc, D), lambda b, l: (b, 0, 0))] + w_specs,
            out_specs=pl.BlockSpec((1, S, D), lambda b, l: (b, 0, 0)),
            scratch_shapes=[pltpu.VMEM((S, D), jnp.float32),     # layer-to-layer carry
                            pltpu.VMEM((S, D), jnp.float32)]),   # attention head assembly
        compiler_params=pltpu.CompilerParams(
            dimension_semantics=("parallel", "arbitrary"),
            vmem_limit_bytes=_VMEM_LIMIT),
    )(x, enc, *w_args)


def run_tied_proj(x, embed):
    B, S, D = x.shape
    V = embed.shape[0]
    embed_t = embed.T                                   # transpose in the wrapper

    if V % 256 == 0:
        TV = 256
    elif V % 128 == 0:
        TV = 128
    else:
        TV = V                                          # tiny vocab: single lane-dense block
    nv = V // TV

    return pl.pallas_call(
        tied_proj_kernel,
        out_shape=jax.ShapeDtypeStruct((B, S, V), jnp.float32),
        grid_spec=pltpu.PrefetchScalarGridSpec(
            num_scalar_prefetch=0,
            grid=(B, nv),
            in_specs=[pl.BlockSpec((1, S, D), lambda b, v: (b, 0, 0)),
                      pl.BlockSpec((D, TV), lambda b, v: (0, v))],
            out_specs=pl.BlockSpec((1, S, TV), lambda b, v: (b, 0, v))),
        compiler_params=pltpu.CompilerParams(
            dimension_semantics=("parallel", "parallel"),
            vmem_limit_bytes=_VMEM_LIMIT),
    )(x, embed_t)


def decoder_forward(Trg, Enc_out, params, num_heads):
    B, S = Trg.shape
    E, P = params['embed'], params['pos']
    # embedding gathers are plain-JAX glue
    x = jnp.take(E, Trg, axis=0) + jnp.take(P, jnp.arange(S), axis=0)[None]
    x = run_decoder_stack(x, Enc_out, params, num_heads)
    return run_tied_proj(x, E)


# ---------------------------------------------------------------------------
# pure-JAX reference (same semantics; note: no causal mask, matching the module)
# ---------------------------------------------------------------------------
def _ref_mha(xq, xkv, wq, wk, wv, wo, bq, bk, bv, bo, H):
    B, Sq, D = xq.shape
    Sk = xkv.shape[1]
    Dh = D // H
    q = (jnp.einsum('bsd,de->bse', xq, wq) + bq).reshape(B, Sq, H, Dh)
    k = (jnp.einsum('bsd,de->bse', xkv, wk) + bk).reshape(B, Sk, H, Dh)
    v = (jnp.einsum('bsd,de->bse', xkv, wv) + bv).reshape(B, Sk, H, Dh)
    s = jnp.einsum('bqhd,bkhd->bhqk', q, k) / math.sqrt(Dh)
    p = jax.nn.softmax(s, axis=-1)
    o = jnp.einsum('bhqk,bkhd->bqhd', p, v).reshape(B, Sq, D)
    return jnp.einsum('bsd,de->bse', o, wo) + bo


def reference_forward(Trg, Enc_out, params, num_heads):
    B, S = Trg.shape
    E, P = params['embed'], params['pos']
    x = jnp.take(E, Trg, axis=0) + jnp.take(P, jnp.arange(S), axis=0)[None]
    L = params['s_wq'].shape[0]
    for l in range(L):
        a = _ref_mha(x, x, params['s_wq'][l], params['s_wk'][l], params['s_wv'][l],
                     params['s_wo'][l], params['s_bq'][l], params['s_bk'][l],
                     params['s_bv'][l], params['s_bo'][l], num_heads)
        h1 = _layernorm(a + x, params['ln1_g'][l], params['ln1_b'][l])
        c = _ref_mha(h1, Enc_out, params['c_wq'][l], params['c_wk'][l], params['c_wv'][l],
                     params['c_wo'][l], params['c_bq'][l], params['c_bk'][l],
                     params['c_bv'][l], params['c_bo'][l], num_heads)
        h2 = _layernorm(c + h1, params['ln2_g'][l], params['ln2_b'][l])
        x = _ffn(h2, params['f_w1'][l], params['f_b1'][l],
                 params['f_w2'][l], params['f_b2'][l])
    return jnp.einsum('bsd,vd->bsv', x, E)


# ---------------------------------------------------------------------------
# deterministic parameter init (stacked over layers; shapes match the module)
# ---------------------------------------------------------------------------
def init_params(key, num_layers, vocab, D, max_seq_len):
    def nrm(k, shape, scale=0.1):
        return (scale * jax.random.normal(k, shape)).astype(jnp.float32)

    L = num_layers
    ks = jax.random.split(key, 22)
    return {
        'embed': nrm(ks[0], (vocab, D)),              # nn.Embedding(input_size, D)
        'pos':   nrm(ks[1], (max_seq_len, D)),        # nn.Embedding(max_seq_len, D)
        # self MHA
        's_wq': nrm(ks[2], (L, D, D)), 's_wk': nrm(ks[3], (L, D, D)),
        's_wv': nrm(ks[4], (L, D, D)), 's_wo': nrm(ks[5], (L, D, D)),
        's_bq': nrm(ks[6], (L, 1, D)), 's_bk': nrm(ks[7], (L, 1, D)),
        's_bv': nrm(ks[8], (L, 1, D)), 's_bo': nrm(ks[9], (L, 1, D)),
        # cross MHA
        'c_wq': nrm(ks[10], (L, D, D)), 'c_wk': nrm(ks[11], (L, D, D)),
        'c_wv': nrm(ks[12], (L, D, D)), 'c_wo': nrm(ks[13], (L, D, D)),
        'c_bq': nrm(ks[14], (L, 1, D)), 'c_bk': nrm(ks[15], (L, 1, D)),
        'c_bv': nrm(ks[16], (L, 1, D)), 'c_bo': nrm(ks[17], (L, 1, D)),
        # layer norms
        'ln1_g': jnp.ones((L, 1, D), jnp.float32), 'ln1_b': jnp.zeros((L, 1, D), jnp.float32),
        'ln2_g': jnp.ones((L, 1, D), jnp.float32), 'ln2_b': jnp.zeros((L, 1, D), jnp.float32),
        # position-wise FFN
        'f_w1': nrm(ks[18], (L, D, 4 * D)), 'f_b1': nrm(ks[19], (L, 1, 4 * D)),
        'f_w2': nrm(ks[20], (L, 4 * D, D)), 'f_b2': nrm(ks[21], (L, 1, D)),
    }


if __name__ == "__main__":
    # small config consistent with the module's forward
    num_layers = 2
    num_heads = 4
    embed_dim = 32
    vocab = 16            # input_size == output_dim (weight tying)
    max_seq_len = 16
    batch = 2
    seq = 8
    enc_seq = 8           # enc_embed_dim must equal embed_dim for cross-attn

    key = jax.random.PRNGKey(0)
    k_p, k_trg, k_enc = jax.random.split(key, 3)

    params = init_params(k_p, num_layers, vocab, embed_dim, max_seq_len)
    Trg = jax.random.randint(k_trg, (batch, seq), 0, vocab, dtype=jnp.int32)
    Enc_out = (0.1 * jax.random.normal(k_enc, (batch, enc_seq, embed_dim))).astype(jnp.float32)

    out = jax.block_until_ready(decoder_forward(Trg, Enc_out, params, num_heads))
    ref = jax.block_until_ready(reference_forward(Trg, Enc_out, params, num_heads))

    assert out.shape == (batch, seq, vocab), out.shape
    assert jnp.allclose(out, ref, atol=5e-2, rtol=5e-2), float(jnp.max(jnp.abs(out - ref)))

    print("KERNEL_OK")
</pallas_src>

<mosaic_0001>
module attributes {stable_mosaic.version = 11 : i64} {
  func.func @decoder_stack_kernel(%arg0: i32, %arg1: i32, %arg2: memref<1x8x32xf32, #tpu.memory_space<vmem>>, %arg3: memref<1x8x32xf32, #tpu.memory_space<vmem>>, %arg4: memref<1x32x32xf32, #tpu.memory_space<vmem>>, %arg5: memref<1x32x32xf32, #tpu.memory_space<vmem>>, %arg6: memref<1x32x32xf32, #tpu.memory_space<vmem>>, %arg7: memref<1x32x32xf32, #tpu.memory_space<vmem>>, %arg8: memref<1x1x32xf32, #tpu.memory_space<vmem>>, %arg9: memref<1x1x32xf32, #tpu.memory_space<vmem>>, %arg10: memref<1x1x32xf32, #tpu.memory_space<vmem>>, %arg11: memref<1x1x32xf32, #tpu.memory_space<vmem>>, %arg12: memref<1x32x32xf32, #tpu.memory_space<vmem>>, %arg13: memref<1x32x32xf32, #tpu.memory_space<vmem>>, %arg14: memref<1x32x32xf32, #tpu.memory_space<vmem>>, %arg15: memref<1x32x32xf32, #tpu.memory_space<vmem>>, %arg16: memref<1x1x32xf32, #tpu.memory_space<vmem>>, %arg17: memref<1x1x32xf32, #tpu.memory_space<vmem>>, %arg18: memref<1x1x32xf32, #tpu.memory_space<vmem>>, %arg19: memref<1x1x32xf32, #tpu.memory_space<vmem>>, %arg20: memref<1x1x32xf32, #tpu.memory_space<vmem>>, %arg21: memref<1x1x32xf32, #tpu.memory_space<vmem>>, %arg22: memref<1x1x32xf32, #tpu.memory_space<vmem>>, %arg23: memref<1x1x32xf32, #tpu.memory_space<vmem>>, %arg24: memref<1x32x128xf32, #tpu.memory_space<vmem>>, %arg25: memref<1x1x128xf32, #tpu.memory_space<vmem>>, %arg26: memref<1x128x32xf32, #tpu.memory_space<vmem>>, %arg27: memref<1x1x32xf32, #tpu.memory_space<vmem>>, %arg28: memref<1x8x32xf32, #tpu.memory_space<vmem>>, %arg29: memref<8x32xf32, #tpu.memory_space<vmem>>, %arg30: memref<8x32xf32, #tpu.memory_space<vmem>>) attributes {dimension_semantics = [#tpu.dimension_semantics<parallel>, #tpu.dimension_semantics<arbitrary>], iteration_bounds = array<i64: 2, 2>, scalar_prefetch = 0 : i64, scratch_operands = 2 : i64, tpu.core_type = #tpu.core_type<tc>, window_params = [{transform_indices = @transform_0, window_bounds = array<i64: 1, 8, 32>}, {transform_indices = @transform_1, window_bounds = array<i64: 1, 8, 32>}, {transform_indices = @transform_2, window_bounds = array<i64: 1, 32, 32>}, {transform_indices = @transform_3, window_bounds = array<i64: 1, 32, 32>}, {transform_indices = @transform_4, window_bounds = array<i64: 1, 32, 32>}, {transform_indices = @transform_5, window_bounds = array<i64: 1, 32, 32>}, {transform_indices = @transform_6, window_bounds = array<i64: 1, 1, 32>}, {transform_indices = @transform_7, window_bounds = array<i64: 1, 1, 32>}, {transform_indices = @transform_8, window_bounds = array<i64: 1, 1, 32>}, {transform_indices = @transform_9, window_bounds = array<i64: 1, 1, 32>}, {transform_indices = @transform_10, window_bounds = array<i64: 1, 32, 32>}, {transform_indices = @transform_11, window_bounds = array<i64: 1, 32, 32>}, {transform_indices = @transform_12, window_bounds = array<i64: 1, 32, 32>}, {transform_indices = @transform_13, window_bounds = array<i64: 1, 32, 32>}, {transform_indices = @transform_14, window_bounds = array<i64: 1, 1, 32>}, {transform_indices = @transform_15, window_bounds = array<i64: 1, 1, 32>}, {transform_indices = @transform_16, window_bounds = array<i64: 1, 1, 32>}, {transform_indices = @transform_17, window_bounds = array<i64: 1, 1, 32>}, {transform_indices = @transform_18, window_bounds = array<i64: 1, 1, 32>}, {transform_indices = @transform_19, window_bounds = array<i64: 1, 1, 32>}, {transform_indices = @transform_20, window_bounds = array<i64: 1, 1, 32>}, {transform_indices = @transform_21, window_bounds = array<i64: 1, 1, 32>}, {transform_indices = @transform_22, window_bounds = array<i64: 1, 32, 128>}, {transform_indices = @transform_23, window_bounds = array<i64: 1, 1, 128>}, {transform_indices = @transform_24, window_bounds = array<i64: 1, 128, 32>}, {transform_indices = @transform_25, window_bounds = array<i64: 1, 1, 32>}, {transform_indices = @transform_26, window_bounds = array<i64: 1, 8, 32>}]} {
    %c0_i32 = arith.constant 0 : i32
    %0 = arith.cmpi eq, %arg1, %c0_i32 : i32
    %1 = arith.extui %0 : i1 to i32
    %c0_i32_0 = arith.constant 0 : i32
    %2 = arith.cmpi ne, %1, %c0_i32_0 : i32
    scf.if %2 {
      %c0_157 = arith.constant 0 : index
      %c0_158 = arith.constant 0 : index
      %c0_159 = arith.constant 0 : index
      %282 = vector.load %arg2[%c0_157, %c0_158, %c0_159] : memref<1x8x32xf32, #tpu.memory_space<vmem>>, vector<1x8x32xf32>
      %283 = vector.shape_cast %282 : vector<1x8x32xf32> to vector<8x32xf32>
      %c0_160 = arith.constant 0 : index
      %c0_161 = arith.constant 0 : index
      %284 = vector.load %arg29[%c0_160, %c0_161] : memref<8x32xf32, #tpu.memory_space<vmem>>, vector<8x32xf32>
      tpu.vector_store %arg29[%c0_160, %c0_161], %283 {strides = array<i32>} : memref<8x32xf32, #tpu.memory_space<vmem>>, vector<8x32xf32>,
    } else {
    }
    %c0 = arith.constant 0 : index
    %c0_1 = arith.constant 0 : index
    %3 = vector.load %arg29[%c0, %c0_1] : memref<8x32xf32, #tpu.memory_space<vmem>>, vector<8x32xf32>
    %c0_2 = arith.constant 0 : index
    %c0_3 = arith.constant 0 : index
    %c0_4 = arith.constant 0 : index
    %4 = vector.load %arg3[%c0_2, %c0_3, %c0_4] : memref<1x8x32xf32, #tpu.memory_space<vmem>>, vector<1x8x32xf32>
    %5 = vector.shape_cast %4 : vector<1x8x32xf32> to vector<8x32xf32>
    %c0_5 = arith.constant 0 : index
    %c0_6 = arith.constant 0 : index
    %c0_7 = arith.constant 0 : index
    %6 = vector.load %arg4[%c0_5, %c0_6, %c0_7] : memref<1x32x32xf32, #tpu.memory_space<vmem>>, vector<1x32x32xf32>
    %7 = vector.shape_cast %6 : vector<1x32x32xf32> to vector<32x32xf32>
    %c0_8 = arith.constant 0 : index
    %c0_9 = arith.constant 0 : index
    %c0_10 = arith.constant 0 : index
    %8 = vector.load %arg5[%c0_8, %c0_9, %c0_10] : memref<1x32x32xf32, #tpu.memory_space<vmem>>, vector<1x32x32xf32>
    %9 = vector.shape_cast %8 : vector<1x32x32xf32> to vector<32x32xf32>
    %c0_11 = arith.constant 0 : index
    %c0_12 = arith.constant 0 : index
    %c0_13 = arith.constant 0 : index
    %10 = vector.load %arg6[%c0_11, %c0_12, %c0_13] : memref<1x32x32xf32, #tpu.memory_space<vmem>>, vector<1x32x32xf32>
    %11 = vector.shape_cast %10 : vector<1x32x32xf32> to vector<32x32xf32>
    %c0_14 = arith.constant 0 : index
    %c0_15 = arith.constant 0 : index
    %c0_16 = arith.constant 0 : index
    %12 = vector.load %arg7[%c0_14, %c0_15, %c0_16] : memref<1x32x32xf32, #tpu.memory_space<vmem>>, vector<1x32x32xf32>
    %13 = vector.shape_cast %12 : vector<1x32x32xf32> to vector<32x32xf32>
    %c0_17 = arith.constant 0 : index
    %c0_18 = arith.constant 0 : index
    %c0_19 = arith.constant 0 : index
    %14 = vector.load %arg8[%c0_17, %c0_18, %c0_19] : memref<1x1x32xf32, #tpu.memory_space<vmem>>, vector<1x1x32xf32>
    %15 = vector.shape_cast %14 : vector<1x1x32xf32> to vector<1x32xf32>
    %c0_20 = arith.constant 0 : index
    %c0_21 = arith.constant 0 : index
    %c0_22 = arith.constant 0 : index
    %16 = vector.load %arg9[%c0_20, %c0_21, %c0_22] : memref<1x1x32xf32, #tpu.memory_space<vmem>>, vector<1x1x32xf32>
    %17 = vector.shape_cast %16 : vector<1x1x32xf32> to vector<1x32xf32>
    %c0_23 = arith.constant 0 : index
    %c0_24 = arith.constant 0 : index
    %c0_25 = arith.constant 0 : index
    %18 = vector.load %arg10[%c0_23, %c0_24, %c0_25] : memref<1x1x32xf32, #tpu.memory_space<vmem>>, vector<1x1x32xf32>
    %19 = vector.shape_cast %18 : vector<1x1x32xf32> to vector<1x32xf32>
    %c0_26 = arith.constant 0 : index
    %c0_27 = arith.constant 0 : index
    %c0_28 = arith.constant 0 : index
    %20 = vector.load %arg11[%c0_26, %c0_27, %c0_28] : memref<1x1x32xf32, #tpu.memory_space<vmem>>, vector<1x1x32xf32>
    %21 = vector.shape_cast %20 : vector<1x1x32xf32> to vector<1x32xf32>
    %cst = arith.constant dense<0.000000e+00> : vector<8x32xf32>
    %22 = tpu.matmul %3, %7, %cst {dimension_numbers = #tpu.dot_dimension_numbers<[1], [0], [0], [1], [0, 0, 1, 1], [], []>} : vector<8x32xf32>, vector<32x32xf32>, vector<8x32xf32> -> vector<8x32xf32>
    %23 = vector.broadcast %15 : vector<1x32xf32> to vector<8x32xf32>
    %24 = arith.addf %22, %23 : vector<8x32xf32>
    %cst_29 = arith.constant dense<0.000000e+00> : vector<8x32xf32>
    %25 = tpu.matmul %3, %9, %cst_29 {dimension_numbers = #tpu.dot_dimension_numbers<[1], [0], [0], [1], [0, 0, 1, 1], [], []>} : vector<8x32xf32>, vector<32x32xf32>, vector<8x32xf32> -> vector<8x32xf32>
    %26 = vector.broadcast %17 : vector<1x32xf32> to vector<8x32xf32>
    %27 = arith.addf %25, %26 : vector<8x32xf32>
    %cst_30 = arith.constant dense<0.000000e+00> : vector<8x32xf32>
    %28 = tpu.matmul %3, %11, %cst_30 {dimension_numbers = #tpu.dot_dimension_numbers<[1], [0], [0], [1], [0, 0, 1, 1], [], []>} : vector<8x32xf32>, vector<32x32xf32>, vector<8x32xf32> -> vector<8x32xf32>
    %29 = vector.broadcast %19 : vector<1x32xf32> to vector<8x32xf32>
    %30 = arith.addf %28, %29 : vector<8x32xf32>
    %31 = vector.extract_strided_slice %24 {offsets = [0, 0], sizes = [8, 8], strides = [1, 1]} : vector<8x32xf32> to vector<8x8xf32>
    %32 = vector.extract_strided_slice %27 {offsets = [0, 0], sizes = [8, 8], strides = [1, 1]} : vector<8x32xf32> to vector<8x8xf32>
    %33 = vector.extract_strided_slice %30 {offsets = [0, 0], sizes = [8, 8], strides = [1, 1]} : vector<8x32xf32> to vector<8x8xf32>
    %cst_31 = arith.constant dense<0.000000e+00> : vector<8x8xf32>
    %34 = tpu.matmul %31, %32, %cst_31 {dimension_numbers = #tpu.dot_dimension_numbers<[1], [1], [0], [0], [0, 0, 1, 0], [], []>} : vector<8x8xf32>, vector<8x8xf32>, vector<8x8xf32> -> vector<8x8xf32>
    %cst_32 = arith.constant 0.353553385 : f32
    %35 = vector.broadcast %cst_32 : f32 to vector<8x8xf32>
    %36 = arith.mulf %34, %35 : vector<8x8xf32>
    %cst_33 = arith.constant dense<0xFF800000> : vector<8xf32>
    %37 = vector.multi_reduction <maximumf>, %36, %cst_33 [1] : vector<8x8xf32> to vector<8xf32>
    %38 = vector.shape_cast %37 : vector<8xf32> to vector<8x1xf32>
    %39 = vector.broadcast %38 : vector<8x1xf32> to vector<8x8xf32>
    %40 = arith.subf %36, %39 : vector<8x8xf32>
    %41 = math.exp %40 : vector<8x8xf32>
    %cst_34 = arith.constant dense<0.000000e+00> : vector<8xf32>
    %42 = vector.multi_reduction <add>, %41, %cst_34 [1] : vector<8x8xf32> to vector<8xf32>
    %43 = vector.shape_cast %42 : vector<8xf32> to vector<8x1xf32>
    %44 = tpu.reciprocal %43 {approx = true} : vector<8x1xf32> -> vector<8x1xf32>
    %45 = vector.broadcast %44 : vector<8x1xf32> to vector<8x8xf32>
    %46 = arith.mulf %41, %45 : vector<8x8xf32>
    %cst_35 = arith.constant dense<0.000000e+00> : vector<8x8xf32>
    %47 = tpu.matmul %46, %33, %cst_35 {dimension_numbers = #tpu.dot_dimension_numbers<[1], [0], [0], [1], [0, 0, 1, 1], [], []>} : vector<8x8xf32>, vector<8x8xf32>, vector<8x8xf32> -> vector<8x8xf32>
    %c0_36 = arith.constant 0 : index
    %c0_37 = arith.constant 0 : index
    %48 = vector.load %arg30[%c0_36, %c0_37] : memref<8x32xf32, #tpu.memory_space<vmem>>, vector<8x8xf32>
    tpu.vector_store %arg30[%c0_36, %c0_37], %47 {strides = array<i32>} : memref<8x32xf32, #tpu.memory_space<vmem>>, vector<8x8xf32>,
    %49 = vector.extract_strided_slice %24 {offsets = [0, 8], sizes = [8, 8], strides = [1, 1]} : vector<8x32xf32> to vector<8x8xf32>
    %50 = vector.extract_strided_slice %27 {offsets = [0, 8], sizes = [8, 8], strides = [1, 1]} : vector<8x32xf32> to vector<8x8xf32>
    %51 = vector.extract_strided_slice %30 {offsets = [0, 8], sizes = [8, 8], strides = [1, 1]} : vector<8x32xf32> to vector<8x8xf32>
    %cst_38 = arith.constant dense<0.000000e+00> : vector<8x8xf32>
    %52 = tpu.matmul %49, %50, %cst_38 {dimension_numbers = #tpu.dot_dimension_numbers<[1], [1], [0], [0], [0, 0, 1, 0], [], []>} : vector<8x8xf32>, vector<8x8xf32>, vector<8x8xf32> -> vector<8x8xf32>
    %cst_39 = arith.constant 0.353553385 : f32
    %53 = vector.broadcast %cst_39 : f32 to vector<8x8xf32>
    %54 = arith.mulf %52, %53 : vector<8x8xf32>
    %cst_40 = arith.constant dense<0xFF800000> : vector<8xf32>
    %55 = vector.multi_reduction <maximumf>, %54, %cst_40 [1] : vector<8x8xf32> to vector<8xf32>
    %56 = vector.shape_cast %55 : vector<8xf32> to vector<8x1xf32>
    %57 = vector.broadcast %56 : vector<8x1xf32> to vector<8x8xf32>
    %58 = arith.subf %54, %57 : vector<8x8xf32>
    %59 = math.exp %58 : vector<8x8xf32>
    %cst_41 = arith.constant dense<0.000000e+00> : vector<8xf32>
    %60 = vector.multi_reduction <add>, %59, %cst_41 [1] : vector<8x8xf32> to vector<8xf32>
    %61 = vector.shape_cast %60 : vector<8xf32> to vector<8x1xf32>
    %62 = tpu.reciprocal %61 {approx = true} : vector<8x1xf32> -> vector<8x1xf32>
    %63 = vector.broadcast %62 : vector<8x1xf32> to vector<8x8xf32>
    %64 = arith.mulf %59, %63 : vector<8x8xf32>
    %cst_42 = arith.constant dense<0.000000e+00> : vector<8x8xf32>
    %65 = tpu.matmul %64, %51, %cst_42 {dimension_numbers = #tpu.dot_dimension_numbers<[1], [0], [0], [1], [0, 0, 1, 1], [], []>} : vector<8x8xf32>, vector<8x8xf32>, vector<8x8xf32> -> vector<8x8xf32>
    %c0_43 = arith.constant 0 : index
    %c8 = arith.constant 8 : index
    %66 = vector.load %arg30[%c0_43, %c8] : memref<8x32xf32, #tpu.memory_space<vmem>>, vector<8x8xf32>
    tpu.vector_store %arg30[%c0_43, %c8], %65 {strides = array<i32>} : memref<8x32xf32, #tpu.memory_space<vmem>>, vector<8x8xf32>,
    %67 = vector.extract_strided_slice %24 {offsets = [0, 16], sizes = [8, 8], strides = [1, 1]} : vector<8x32xf32> to vector<8x8xf32>
    %68 = vector.extract_strided_slice %27 {offsets = [0, 16], sizes = [8, 8], strides = [1, 1]} : vector<8x32xf32> to vector<8x8xf32>
    %69 = vector.extract_strided_slice %30 {offsets = [0, 16], sizes = [8, 8], strides = [1, 1]} : vector<8x32xf32> to vector<8x8xf32>
    %cst_44 = arith.constant dense<0.000000e+00> : vector<8x8xf32>
    %70 = tpu.matmul %67, %68, %cst_44 {dimension_numbers = #tpu.dot_dimension_numbers<[1], [1], [0], [0], [0, 0, 1, 0], [], []>} : vector<8x8xf32>, vector<8x8xf32>, vector<8x8xf32> -> vector<8x8xf32>
    %cst_45 = arith.constant 0.353553385 : f32
    %71 = vector.broadcast %cst_45 : f32 to vector<8x8xf32>
    %72 = arith.mulf %70, %71 : vector<8x8xf32>
    %cst_46 = arith.constant dense<0xFF800000> : vector<8xf32>
    %73 = vector.multi_reduction <maximumf>, %72, %cst_46 [1] : vector<8x8xf32> to vector<8xf32>
    %74 = vector.shape_cast %73 : vector<8xf32> to vector<8x1xf32>
    %75 = vector.broadcast %74 : vector<8x1xf32> to vector<8x8xf32>
    %76 = arith.subf %72, %75 : vector<8x8xf32>
    %77 = math.exp %76 : vector<8x8xf32>
    %cst_47 = arith.constant dense<0.000000e+00> : vector<8xf32>
    %78 = vector.multi_reduction <add>, %77, %cst_47 [1] : vector<8x8xf32> to vector<8xf32>
    %79 = vector.shape_cast %78 : vector<8xf32> to vector<8x1xf32>
    %80 = tpu.reciprocal %79 {approx = true} : vector<8x1xf32> -> vector<8x1xf32>
    %81 = vector.broadcast %80 : vector<8x1xf32> to vector<8x8xf32>
    %82 = arith.mulf %77, %81 : vector<8x8xf32>
    %cst_48 = arith.constant dense<0.000000e+00> : vector<8x8xf32>
    %83 = tpu.matmul %82, %69, %cst_48 {dimension_numbers = #tpu.dot_dimension_numbers<[1], [0], [0], [1], [0, 0, 1, 1], [], []>} : vector<8x8xf32>, vector<8x8xf32>, vector<8x8xf32> -> vector<8x8xf32>
    %c0_49 = arith.constant 0 : index
    %c16 = arith.constant 16 : index
    %84 = vector.load %arg30[%c0_49, %c16] : memref<8x32xf32, #tpu.memory_space<vmem>>, vector<8x8xf32>
    tpu.vector_store %arg30[%c0_49, %c16], %83 {strides = array<i32>} : memref<8x32xf32, #tpu.memory_space<vmem>>, vector<8x8xf32>,
    %85 = vector.extract_strided_slice %24 {offsets = [0, 24], sizes = [8, 8], strides = [1, 1]} : vector<8x32xf32> to vector<8x8xf32>
    %86 = vector.extract_strided_slice %27 {offsets = [0, 24], sizes = [8, 8], strides = [1, 1]} : vector<8x32xf32> to vector<8x8xf32>
    %87 = vector.extract_strided_slice %30 {offsets = [0, 24], sizes = [8, 8], strides = [1, 1]} : vector<8x32xf32> to vector<8x8xf32>
    %cst_50 = arith.constant dense<0.000000e+00> : vector<8x8xf32>
    %88 = tpu.matmul %85, %86, %cst_50 {dimension_numbers = #tpu.dot_dimension_numbers<[1], [1], [0], [0], [0, 0, 1, 0], [], []>} : vector<8x8xf32>, vector<8x8xf32>, vector<8x8xf32> -> vector<8x8xf32>
    %cst_51 = arith.constant 0.353553385 : f32
    %89 = vector.broadcast %cst_51 : f32 to vector<8x8xf32>
    %90 = arith.mulf %88, %89 : vector<8x8xf32>
    %cst_52 = arith.constant dense<0xFF800000> : vector<8xf32>
    %91 = vector.multi_reduction <maximumf>, %90, %cst_52 [1] : vector<8x8xf32> to vector<8xf32>
    %92 = vector.shape_cast %91 : vector<8xf32> to vector<8x1xf32>
    %93 = vector.broadcast %92 : vector<8x1xf32> to vector<8x8xf32>
    %94 = arith.subf %90, %93 : vector<8x8xf32>
    %95 = math.exp %94 : vector<8x8xf32>
    %cst_53 = arith.constant dense<0.000000e+00> : vector<8xf32>
    %96 = vector.multi_reduction <add>, %95, %cst_53 [1] : vector<8x8xf32> to vector<8xf32>
    %97 = vector.shape_cast %96 : vector<8xf32> to vector<8x1xf32>
    %98 = tpu.reciprocal %97 {approx = true} : vector<8x1xf32> -> vector<8x1xf32>
    %99 = vector.broadcast %98 : vector<8x1xf32> to vector<8x8xf32>
    %100 = arith.mulf %95, %99 : vector<8x8xf32>
    %cst_54 = arith.constant dense<0.000000e+00> : vector<8x8xf32>
    %101 = tpu.matmul %100, %87, %cst_54 {dimension_numbers = #tpu.dot_dimension_numbers<[1], [0], [0], [1], [0, 0, 1, 1], [], []>} : vector<8x8xf32>, vector<8x8xf32>, vector<8x8xf32> -> vector<8x8xf32>
    %c0_55 = arith.constant 0 : index
    %c24 = arith.constant 24 : index
    %102 = vector.load %arg30[%c0_55, %c24] : memref<8x32xf32, #tpu.memory_space<vmem>>, vector<8x8xf32>
    tpu.vector_store %arg30[%c0_55, %c24], %101 {strides = array<i32>} : memref<8x32xf32, #tpu.memory_space<vmem>>, vector<8x8xf32>,
    %c0_56 = arith.constant 0 : index
    %c0_57 = arith.constant 0 : index
    %103 = vector.load %arg30[%c0_56, %c0_57] : memref<8x32xf32, #tpu.memory_space<vmem>>, vector<8x32xf32>
    %cst_58 = arith.constant dense<0.000000e+00> : vector<8x32xf32>
    %104 = tpu.matmul %103, %13, %cst_58 {dimension_numbers = #tpu.dot_dimension_numbers<[1], [0], [0], [1], [0, 0, 1, 1], [], []>} : vector<8x32xf32>, vector<32x32xf32>, vector<8x32xf32> -> vector<8x32xf32>
    %105 = vector.broadcast %21 : vector<1x32xf32> to vector<8x32xf32>
    %106 = arith.addf %104, %105 : vector<8x32xf32>
    %107 = arith.addf %106, %3 : vector<8x32xf32>
    %c0_59 = arith.constant 0 : index
    %c0_60 = arith.constant 0 : index
    %c0_61 = arith.constant 0 : index
    %108 = vector.load %arg20[%c0_59, %c0_60, %c0_61] : memref<1x1x32xf32, #tpu.memory_space<vmem>>, vector<1x1x32xf32>
    %109 = vector.shape_cast %108 : vector<1x1x32xf32> to vector<1x32xf32>
    %c0_62 = arith.constant 0 : index
    %c0_63 = arith.constant 0 : index
    %c0_64 = arith.constant 0 : index
    %110 = vector.load %arg21[%c0_62, %c0_63, %c0_64] : memref<1x1x32xf32, #tpu.memory_space<vmem>>, vector<1x1x32xf32>
    %111 = vector.shape_cast %110 : vector<1x1x32xf32> to vector<1x32xf32>
    %cst_65 = arith.constant dense<0.000000e+00> : vector<8xf32>
    %112 = vector.multi_reduction <add>, %107, %cst_65 [1] : vector<8x32xf32> to vector<8xf32>
    %113 = vector.shape_cast %112 : vector<8xf32> to vector<8x1xf32>
    %cst_66 = arith.constant 3.200000e+01 : f32
    %114 = vector.broadcast %cst_66 : f32 to vector<8x1xf32>
    %115 = arith.divf %113, %114 : vector<8x1xf32>
    %116 = vector.broadcast %115 : vector<8x1xf32> to vector<8x32xf32>
    %117 = arith.subf %107, %116 : vector<8x32xf32>
    %118 = arith.mulf %117, %117 : vector<8x32xf32>
    %cst_67 = arith.constant dense<0.000000e+00> : vector<8xf32>
    %119 = vector.multi_reduction <add>, %118, %cst_67 [1] : vector<8x32xf32> to vector<8xf32>
    %120 = vector.shape_cast %119 : vector<8xf32> to vector<8x1xf32>
    %cst_68 = arith.constant 3.200000e+01 : f32
    %121 = vector.broadcast %cst_68 : f32 to vector<8x1xf32>
    %122 = arith.divf %120, %121 : vector<8x1xf32>
    %123 = vector.broadcast %115 : vector<8x1xf32> to vector<8x32xf32>
    %124 = arith.subf %107, %123 : vector<8x32xf32>
    %cst_69 = arith.constant 9.99999974E-6 : f32
    %125 = vector.broadcast %cst_69 : f32 to vector<8x1xf32>
    %126 = arith.addf %122, %125 : vector<8x1xf32>
    %127 = math.rsqrt %126 : vector<8x1xf32>
    %128 = vector.broadcast %127 : vector<8x1xf32> to vector<8x32xf32>
    %129 = arith.mulf %124, %128 : vector<8x32xf32>
    %130 = vector.broadcast %109 : vector<1x32xf32> to vector<8x32xf32>
    %131 = arith.mulf %129, %130 : vector<8x32xf32>
    %132 = vector.broadcast %111 : vector<1x32xf32> to vector<8x32xf32>
    %133 = arith.addf %131, %132 : vector<8x32xf32>
    %c0_70 = arith.constant 0 : index
    %c0_71 = arith.constant 0 : index
    %c0_72 = arith.constant 0 : index
    %134 = vector.load %arg12[%c0_70, %c0_71, %c0_72] : memref<1x32x32xf32, #tpu.memory_space<vmem>>, vector<1x32x32xf32>
    %135 = vector.shape_cast %134 : vector<1x32x32xf32> to vector<32x32xf32>
    %c0_73 = arith.constant 0 : index
    %c0_74 = arith.constant 0 : index
    %c0_75 = arith.constant 0 : index
    %136 = vector.load %arg13[%c0_73, %c0_74, %c0_75] : memref<1x32x32xf32, #tpu.memory_space<vmem>>, vector<1x32x32xf32>
    %137 = vector.shape_cast %136 : vector<1x32x32xf32> to vector<32x32xf32>
    %c0_76 = arith.constant 0 : index
    %c0_77 = arith.constant 0 : index
    %c0_78 = arith.constant 0 : index
    %138 = vector.load %arg14[%c0_76, %c0_77, %c0_78] : memref<1x32x32xf32, #tpu.memory_space<vmem>>, vector<1x32x32xf32>
    %139 = vector.shape_cast %138 : vector<1x32x32xf32> to vector<32x32xf32>
    %c0_79 = arith.constant 0 : index
    %c0_80 = arith.constant 0 : index
    %c0_81 = arith.constant 0 : index
    %140 = vector.load %arg15[%c0_79, %c0_80, %c0_81] : memref<1x32x32xf32, #tpu.memory_space<vmem>>, vector<1x32x32xf32>
    %141 = vector.shape_cast %140 : vector<1x32x32xf32> to vector<32x32xf32>
    %c0_82 = arith.constant 0 : index
    %c0_83 = arith.constant 0 : index
    %c0_84 = arith.constant 0 : index
    %142 = vector.load %arg16[%c0_82, %c0_83, %c0_84] : memref<1x1x32xf32, #tpu.memory_space<vmem>>, vector<1x1x32xf32>
    %143 = vector.shape_cast %142 : vector<1x1x32xf32> to vector<1x32xf32>
    %c0_85 = arith.constant 0 : index
    %c0_86 = arith.constant 0 : index
    %c0_87 = arith.constant 0 : index
    %144 = vector.load %arg17[%c0_85, %c0_86, %c0_87] : memref<1x1x32xf32, #tpu.memory_space<vmem>>, vector<1x1x32xf32>
    %145 = vector.shape_cast %144 : vector<1x1x32xf32> to vector<1x32xf32>
    %c0_88 = arith.constant 0 : index
    %c0_89 = arith.constant 0 : index
    %c0_90 = arith.constant 0 : index
    %146 = vector.load %arg18[%c0_88, %c0_89, %c0_90] : memref<1x1x32xf32, #tpu.memory_space<vmem>>, vector<1x1x32xf32>
    %147 = vector.shape_cast %146 : vector<1x1x32xf32> to vector<1x32xf32>
    %c0_91 = arith.constant 0 : index
    %c0_92 = arith.constant 0 : index
    %c0_93 = arith.constant 0 : index
    %148 = vector.load %arg19[%c0_91, %c0_92, %c0_93] : memref<1x1x32xf32, #tpu.memory_space<vmem>>, vector<1x1x32xf32>
    %149 = vector.shape_cast %148 : vector<1x1x32xf32> to vector<1x32xf32>
    %cst_94 = arith.constant dense<0.000000e+00> : vector<8x32xf32>
    %150 = tpu.matmul %133, %135, %cst_94 {dimension_numbers = #tpu.dot_dimension_numbers<[1], [0], [0], [1], [0, 0, 1, 1], [], []>} : vector<8x32xf32>, vector<32x32xf32>, vector<8x32xf32> -> vector<8x32xf32>
    %151 = vector.broadcast %143 : vector<1x32xf32> to vector<8x32xf32>
    %152 = arith.addf %150, %151 : vector<8x32xf32>
    %cst_95 = arith.constant dense<0.000000e+00> : vector<8x32xf32>
    %153 = tpu.matmul %5, %137, %cst_95 {dimension_numbers = #tpu.dot_dimension_numbers<[1], [0], [0], [1], [0, 0, 1, 1], [], []>} : vector<8x32xf32>, vector<32x32xf32>, vector<8x32xf32> -> vector<8x32xf32>
    %154 = vector.broadcast %145 : vector<1x32xf32> to vector<8x32xf32>
    %155 = arith.addf %153, %154 : vector<8x32xf32>
    %cst_96 = arith.constant dense<0.000000e+00> : vector<8x32xf32>
    %156 = tpu.matmul %5, %139, %cst_96 {dimension_numbers = #tpu.dot_dimension_numbers<[1], [0], [0], [1], [0, 0, 1, 1], [], []>} : vector<8x32xf32>, vector<32x32xf32>, vector<8x32xf32> -> vector<8x32xf32>
    %157 = vector.broadcast %147 : vector<1x32xf32> to vector<8x32xf32>
    %158 = arith.addf %156, %157 : vector<8x32xf32>
    %159 = vector.extract_strided_slice %152 {offsets = [0, 0], sizes = [8, 8], strides = [1, 1]} : vector<8x32xf32> to vector<8x8xf32>
    %160 = vector.extract_strided_slice %155 {offsets = [0, 0], sizes = [8, 8], strides = [1, 1]} : vector<8x32xf32> to vector<8x8xf32>
    %161 = vector.extract_strided_slice %158 {offsets = [0, 0], sizes = [8, 8], strides = [1, 1]} : vector<8x32xf32> to vector<8x8xf32>
    %cst_97 = arith.constant dense<0.000000e+00> : vector<8x8xf32>
    %162 = tpu.matmul %159, %160, %cst_97 {dimension_numbers = #tpu.dot_dimension_numbers<[1], [1], [0], [0], [0, 0, 1, 0], [], []>} : vector<8x8xf32>, vector<8x8xf32>, vector<8x8xf32> -> vector<8x8xf32>
    %cst_98 = arith.constant 0.353553385 : f32
    %163 = vector.broadcast %cst_98 : f32 to vector<8x8xf32>
    %164 = arith.mulf %162, %163 : vector<8x8xf32>
    %cst_99 = arith.constant dense<0xFF800000> : vector<8xf32>
    %165 = vector.multi_reduction <maximumf>, %164, %cst_99 [1] : vector<8x8xf32> to vector<8xf32>
    %166 = vector.shape_cast %165 : vector<8xf32> to vector<8x1xf32>
    %167 = vector.broadcast %166 : vector<8x1xf32> to vector<8x8xf32>
    %168 = arith.subf %164, %167 : vector<8x8xf32>
    %169 = math.exp %168 : vector<8x8xf32>
    %cst_100 = arith.constant dense<0.000000e+00> : vector<8xf32>
    %170 = vector.multi_reduction <add>, %169, %cst_100 [1] : vector<8x8xf32> to vector<8xf32>
    %171 = vector.shape_cast %170 : vector<8xf32> to vector<8x1xf32>
    %172 = tpu.reciprocal %171 {approx = true} : vector<8x1xf32> -> vector<8x1xf32>
    %173 = vector.broadcast %172 : vector<8x1xf32> to vector<8x8xf32>
    %174 = arith.mulf %169, %173 : vector<8x8xf32>
    %cst_101 = arith.constant dense<0.000000e+00> : vector<8x8xf32>
    %175 = tpu.matmul %174, %161, %cst_101 {dimension_numbers = #tpu.dot_dimension_numbers<[1], [0], [0], [1], [0, 0, 1, 1], [], []>} : vector<8x8xf32>, vector<8x8xf32>, vector<8x8xf32> -> vector<8x8xf32>
    %c0_102 = arith.constant 0 : index
    %c0_103 = arith.constant 0 : index
    %176 = vector.load %arg30[%c0_102, %c0_103] : memref<8x32xf32, #tpu.memory_space<vmem>>, vector<8x8xf32>
    tpu.vector_store %arg30[%c0_102, %c0_103], %175 {strides = array<i32>} : memref<8x32xf32, #tpu.memory_space<vmem>>, vector<8x8xf32>,
    %177 = vector.extract_strided_slice %152 {offsets = [0, 8], sizes = [8, 8], strides = [1, 1]} : vector<8x32xf32> to vector<8x8xf32>
    %178 = vector.extract_strided_slice %155 {offsets = [0, 8], sizes = [8, 8], strides = [1, 1]} : vector<8x32xf32> to vector<8x8xf32>
    %179 = vector.extract_strided_slice %158 {offsets = [0, 8], sizes = [8, 8], strides = [1, 1]} : vector<8x32xf32> to vector<8x8xf32>
    %cst_104 = arith.constant dense<0.000000e+00> : vector<8x8xf32>
    %180 = tpu.matmul %177, %178, %cst_104 {dimension_numbers = #tpu.dot_dimension_numbers<[1], [1], [0], [0], [0, 0, 1, 0], [], []>} : vector<8x8xf32>, vector<8x8xf32>, vector<8x8xf32> -> vector<8x8xf32>
    %cst_105 = arith.constant 0.353553385 : f32
    %181 = vector.broadcast %cst_105 : f32 to vector<8x8xf32>
    %182 = arith.mulf %180, %181 : vector<8x8xf32>
    %cst_106 = arith.constant dense<0xFF800000> : vector<8xf32>
    %183 = vector.multi_reduction <maximumf>, %182, %cst_106 [1] : vector<8x8xf32> to vector<8xf32>
    %184 = vector.shape_cast %183 : vector<8xf32> to vector<8x1xf32>
    %185 = vector.broadcast %184 : vector<8x1xf32> to vector<8x8xf32>
    %186 = arith.subf %182, %185 : vector<8x8xf32>
    %187 = math.exp %186 : vector<8x8xf32>
    %cst_107 = arith.constant dense<0.000000e+00> : vector<8xf32>
    %188 = vector.multi_reduction <add>, %187, %cst_107 [1] : vector<8x8xf32> to vector<8xf32>
    %189 = vector.shape_cast %188 : vector<8xf32> to vector<8x1xf32>
    %190 = tpu.reciprocal %189 {approx = true} : vector<8x1xf32> -> vector<8x1xf32>
    %191 = vector.broadcast %190 : vector<8x1xf32> to vector<8x8xf32>
    %192 = arith.mulf %187, %191 : vector<8x8xf32>
    %cst_108 = arith.constant dense<0.000000e+00> : vector<8x8xf32>
    %193 = tpu.matmul %192, %179, %cst_108 {dimension_numbers = #tpu.dot_dimension_numbers<[1], [0], [0], [1], [0, 0, 1, 1], [], []>} : vector<8x8xf32>, vector<8x8xf32>, vector<8x8xf32> -> vector<8x8xf32>
    %c0_109 = arith.constant 0 : index
    %c8_110 = arith.constant 8 : index
    %194 = vector.load %arg30[%c0_109, %c8_110] : memref<8x32xf32, #tpu.memory_space<vmem>>, vector<8x8xf32>
    tpu.vector_store %arg30[%c0_109, %c8_110], %193 {strides = array<i32>} : memref<8x32xf32, #tpu.memory_space<vmem>>, vector<8x8xf32>,
    %195 = vector.extract_strided_slice %152 {offsets = [0, 16], sizes = [8, 8], strides = [1, 1]} : vector<8x32xf32> to vector<8x8xf32>
    %196 = vector.extract_strided_slice %155 {offsets = [0, 16], sizes = [8, 8], strides = [1, 1]} : vector<8x32xf32> to vector<8x8xf32>
    %197 = vector.extract_strided_slice %158 {offsets = [0, 16], sizes = [8, 8], strides = [1, 1]} : vector<8x32xf32> to vector<8x8xf32>
    %cst_111 = arith.constant dense<0.000000e+00> : vector<8x8xf32>
    %198 = tpu.matmul %195, %196, %cst_111 {dimension_numbers = #tpu.dot_dimension_numbers<[1], [1], [0], [0], [0, 0, 1, 0], [], []>} : vector<8x8xf32>, vector<8x8xf32>, vector<8x8xf32> -> vector<8x8xf32>
    %cst_112 = arith.constant 0.353553385 : f32
    %199 = vector.broadcast %cst_112 : f32 to vector<8x8xf32>
    %200 = arith.mulf %198, %199 : vector<8x8xf32>
    %cst_113 = arith.constant dense<0xFF800000> : vector<8xf32>
    %201 = vector.multi_reduction <maximumf>, %200, %cst_113 [1] : vector<8x8xf32> to vector<8xf32>
    %202 = vector.shape_cast %201 : vector<8xf32> to vector<8x1xf32>
    %203 = vector.broadcast %202 : vector<8x1xf32> to vector<8x8xf32>
    %204 = arith.subf %200, %203 : vector<8x8xf32>
    %205 = math.exp %204 : vector<8x8xf32>
    %cst_114 = arith.constant dense<0.000000e+00> : vector<8xf32>
    %206 = vector.multi_reduction <add>, %205, %cst_114 [1] : vector<8x8xf32> to vector<8xf32>
    %207 = vector.shape_cast %206 : vector<8xf32> to vector<8x1xf32>
    %208 = tpu.reciprocal %207 {approx = true} : vector<8x1xf32> -> vector<8x1xf32>
    %209 = vector.broadcast %208 : vector<8x1xf32> to vector<8x8xf32>
    %210 = arith.mulf %205, %209 : vector<8x8xf32>
    %cst_115 = arith.constant dense<0.000000e+00> : vector<8x8xf32>
    %211 = tpu.matmul %210, %197, %cst_115 {dimension_numbers = #tpu.dot_dimension_numbers<[1], [0], [0], [1], [0, 0, 1, 1], [], []>} : vector<8x8xf32>, vector<8x8xf32>, vector<8x8xf32> -> vector<8x8xf32>
    %c0_116 = arith.constant 0 : index
    %c16_117 = arith.constant 16 : index
    %212 = vector.load %arg30[%c0_116, %c16_117] : memref<8x32xf32, #tpu.memory_space<vmem>>, vector<8x8xf32>
    tpu.vector_store %arg30[%c0_116, %c16_117], %211 {strides = array<i32>} : memref<8x32xf32, #tpu.memory_space<vmem>>, vector<8x8xf32>,
    %213 = vector.extract_strided_slice %152 {offsets = [0, 24], sizes = [8, 8], strides = [1, 1]} : vector<8x32xf32> to vector<8x8xf32>
    %214 = vector.extract_strided_slice %155 {offsets = [0, 24], sizes = [8, 8], strides = [1, 1]} : vector<8x32xf32> to vector<8x8xf32>
    %215 = vector.extract_strided_slice %158 {offsets = [0, 24], sizes = [8, 8], strides = [1, 1]} : vector<8x32xf32> to vector<8x8xf32>
    %cst_118 = arith.constant dense<0.000000e+00> : vector<8x8xf32>
    %216 = tpu.matmul %213, %214, %cst_118 {dimension_numbers = #tpu.dot_dimension_numbers<[1], [1], [0], [0], [0, 0, 1, 0], [], []>} : vector<8x8xf32>, vector<8x8xf32>, vector<8x8xf32> -> vector<8x8xf32>
    %cst_119 = arith.constant 0.353553385 : f32
    %217 = vector.broadcast %cst_119 : f32 to vector<8x8xf32>
    %218 = arith.mulf %216, %217 : vector<8x8xf32>
    %cst_120 = arith.constant dense<0xFF800000> : vector<8xf32>
    %219 = vector.multi_reduction <maximumf>, %218, %cst_120 [1] : vector<8x8xf32> to vector<8xf32>
    %220 = vector.shape_cast %219 : vector<8xf32> to vector<8x1xf32>
    %221 = vector.broadcast %220 : vector<8x1xf32> to vector<8x8xf32>
    %222 = arith.subf %218, %221 : vector<8x8xf32>
    %223 = math.exp %222 : vector<8x8xf32>
    %cst_121 = arith.constant dense<0.000000e+00> : vector<8xf32>
    %224 = vector.multi_reduction <add>, %223, %cst_121 [1] : vector<8x8xf32> to vector<8xf32>
    %225 = vector.shape_cast %224 : vector<8xf32> to vector<8x1xf32>
    %226 = tpu.reciprocal %225 {approx = true} : vector<8x1xf32> -> vector<8x1xf32>
    %227 = vector.broadcast %226 : vector<8x1xf32> to vector<8x8xf32>
    %228 = arith.mulf %223, %227 : vector<8x8xf32>
    %cst_122 = arith.constant dense<0.000000e+00> : vector<8x8xf32>
    %229 = tpu.matmul %228, %215, %cst_122 {dimension_numbers = #tpu.dot_dimension_numbers<[1], [0], [0], [1], [0, 0, 1, 1], [], []>} : vector<8x8xf32>, vector<8x8xf32>, vector<8x8xf32> -> vector<8x8xf32>
    %c0_123 = arith.constant 0 : index
    %c24_124 = arith.constant 24 : index
    %230 = vector.load %arg30[%c0_123, %c24_124] : memref<8x32xf32, #tpu.memory_space<vmem>>, vector<8x8xf32>
    tpu.vector_store %arg30[%c0_123, %c24_124], %229 {strides = array<i32>} : memref<8x32xf32, #tpu.memory_space<vmem>>, vector<8x8xf32>,
    %c0_125 = arith.constant 0 : index
    %c0_126 = arith.constant 0 : index
    %231 = vector.load %arg30[%c0_125, %c0_126] : memref<8x32xf32, #tpu.memory_space<vmem>>, vector<8x32xf32>
    %cst_127 = arith.constant dense<0.000000e+00> : vector<8x32xf32>
    %232 = tpu.matmul %231, %141, %cst_127 {dimension_numbers = #tpu.dot_dimension_numbers<[1], [0], [0], [1], [0, 0, 1, 1], [], []>} : vector<8x32xf32>, vector<32x32xf32>, vector<8x32xf32> -> vector<8x32xf32>
    %233 = vector.broadcast %149 : vector<1x32xf32> to vector<8x32xf32>
    %234 = arith.addf %232, %233 : vector<8x32xf32>
    %235 = arith.addf %234, %133 : vector<8x32xf32>
    %c0_128 = arith.constant 0 : index
    %c0_129 = arith.constant 0 : index
    %c0_130 = arith.constant 0 : index
    %236 = vector.load %arg22[%c0_128, %c0_129, %c0_130] : memref<1x1x32xf32, #tpu.memory_space<vmem>>, vector<1x1x32xf32>
    %237 = vector.shape_cast %236 : vector<1x1x32xf32> to vector<1x32xf32>
    %c0_131 = arith.constant 0 : index
    %c0_132 = arith.constant 0 : index
    %c0_133 = arith.constant 0 : index
    %238 = vector.load %arg23[%c0_131, %c0_132, %c0_133] : memref<1x1x32xf32, #tpu.memory_space<vmem>>, vector<1x1x32xf32>
    %239 = vector.shape_cast %238 : vector<1x1x32xf32> to vector<1x32xf32>
    %cst_134 = arith.constant dense<0.000000e+00> : vector<8xf32>
    %240 = vector.multi_reduction <add>, %235, %cst_134 [1] : vector<8x32xf32> to vector<8xf32>
    %241 = vector.shape_cast %240 : vector<8xf32> to vector<8x1xf32>
    %cst_135 = arith.constant 3.200000e+01 : f32
    %242 = vector.broadcast %cst_135 : f32 to vector<8x1xf32>
    %243 = arith.divf %241, %242 : vector<8x1xf32>
    %244 = vector.broadcast %243 : vector<8x1xf32> to vector<8x32xf32>
    %245 = arith.subf %235, %244 : vector<8x32xf32>
    %246 = arith.mulf %245, %245 : vector<8x32xf32>
    %cst_136 = arith.constant dense<0.000000e+00> : vector<8xf32>
    %247 = vector.multi_reduction <add>, %246, %cst_136 [1] : vector<8x32xf32> to vector<8xf32>
    %248 = vector.shape_cast %247 : vector<8xf32> to vector<8x1xf32>
    %cst_137 = arith.constant 3.200000e+01 : f32
    %249 = vector.broadcast %cst_137 : f32 to vector<8x1xf32>
    %250 = arith.divf %248, %249 : vector<8x1xf32>
    %251 = vector.broadcast %243 : vector<8x1xf32> to vector<8x32xf32>
    %252 = arith.subf %235, %251 : vector<8x32xf32>
    %cst_138 = arith.constant 9.99999974E-6 : f32
    %253 = vector.broadcast %cst_138 : f32 to vector<8x1xf32>
    %254 = arith.addf %250, %253 : vector<8x1xf32>
    %255 = math.rsqrt %254 : vector<8x1xf32>
    %256 = vector.broadcast %255 : vector<8x1xf32> to vector<8x32xf32>
    %257 = arith.mulf %252, %256 : vector<8x32xf32>
    %258 = vector.broadcast %237 : vector<1x32xf32> to vector<8x32xf32>
    %259 = arith.mulf %257, %258 : vector<8x32xf32>
    %260 = vector.broadcast %239 : vector<1x32xf32> to vector<8x32xf32>
    %261 = arith.addf %259, %260 : vector<8x32xf32>
    %c0_139 = arith.constant 0 : index
    %c0_140 = arith.constant 0 : index
    %c0_141 = arith.constant 0 : index
    %262 = vector.load %arg24[%c0_139, %c0_140, %c0_141] : memref<1x32x128xf32, #tpu.memory_space<vmem>>, vector<1x32x128xf32>
    %263 = vector.shape_cast %262 : vector<1x32x128xf32> to vector<32x128xf32>
    %c0_142 = arith.constant 0 : index
    %c0_143 = arith.constant 0 : index
    %c0_144 = arith.constant 0 : index
    %264 = vector.load %arg25[%c0_142, %c0_143, %c0_144] : memref<1x1x128xf32, #tpu.memory_space<vmem>>, vector<1x1x128xf32>
    %265 = vector.shape_cast %264 : vector<1x1x128xf32> to vector<1x128xf32>
    %c0_145 = arith.constant 0 : index
    %c0_146 = arith.constant 0 : index
    %c0_147 = arith.constant 0 : index
    %266 = vector.load %arg26[%c0_145, %c0_146, %c0_147] : memref<1x128x32xf32, #tpu.memory_space<vmem>>, vector<1x128x32xf32>
    %267 = vector.shape_cast %266 : vector<1x128x32xf32> to vector<128x32xf32>
    %c0_148 = arith.constant 0 : index
    %c0_149 = arith.constant 0 : index
    %c0_150 = arith.constant 0 : index
    %268 = vector.load %arg27[%c0_148, %c0_149, %c0_150] : memref<1x1x32xf32, #tpu.memory_space<vmem>>, vector<1x1x32xf32>
    %269 = vector.shape_cast %268 : vector<1x1x32xf32> to vector<1x32xf32>
    %cst_151 = arith.constant dense<0.000000e+00> : vector<8x128xf32>
    %270 = tpu.matmul %261, %263, %cst_151 {dimension_numbers = #tpu.dot_dimension_numbers<[1], [0], [0], [1], [0, 0, 1, 1], [], []>} : vector<8x32xf32>, vector<32x128xf32>, vector<8x128xf32> -> vector<8x128xf32>
    %271 = vector.broadcast %265 : vector<1x128xf32> to vector<8x128xf32>
    %272 = arith.addf %270, %271 : vector<8x128xf32>
    %cst_152 = arith.constant 0.000000e+00 : f32
    %273 = vector.broadcast %cst_152 : f32 to vector<8x128xf32>
    %274 = arith.maximumf %272, %273 : vector<8x128xf32>
    %cst_153 = arith.constant dense<0.000000e+00> : vector<8x32xf32>
    %275 = tpu.matmul %274, %267, %cst_153 {dimension_numbers = #tpu.dot_dimension_numbers<[1], [0], [0], [1], [0, 0, 1, 1], [], []>} : vector<8x128xf32>, vector<128x32xf32>, vector<8x32xf32> -> vector<8x32xf32>
    %276 = vector.broadcast %269 : vector<1x32xf32> to vector<8x32xf32>
    %277 = arith.addf %275, %276 : vector<8x32xf32>
    %c0_154 = arith.constant 0 : index
    %c0_155 = arith.constant 0 : index
    %278 = vector.load %arg29[%c0_154, %c0_155] : memref<8x32xf32, #tpu.memory_space<vmem>>, vector<8x32xf32>
    tpu.vector_store %arg29[%c0_154, %c0_155], %277 {strides = array<i32>} : memref<8x32xf32, #tpu.memory_space<vmem>>, vector<8x32xf32>,
    %c1_i32 = arith.constant 1 : i32
    %279 = arith.cmpi eq, %arg1, %c1_i32 : i32
    %280 = arith.extui %279 : i1 to i32
    %c0_i32_156 = arith.constant 0 : i32
    %281 = arith.cmpi ne, %280, %c0_i32_156 : i32
    scf.if %281 {
      %c0_157 = arith.constant 0 : index
      %c0_158 = arith.constant 0 : index
      %c0_159 = arith.constant 0 : index
      %282 = vector.load %arg28[%c0_157, %c0_158, %c0_159] : memref<1x8x32xf32, #tpu.memory_space<vmem>>, vector<1x8x32xf32>
      %283 = vector.shape_cast %282 : vector<1x8x32xf32> to vector<8x32xf32>
      %284 = vector.shape_cast %277 : vector<8x32xf32> to vector<1x8x32xf32>
      tpu.vector_store %arg28[%c0_157, %c0_158, %c0_159], %284 {strides = array<i32>} : memref<1x8x32xf32, #tpu.memory_space<vmem>>, vector<1x8x32xf32>,
    } else {
    }
    return
  }
  func.func @transform_0(%arg0: i32, %arg1: i32) -> (i32, i32, i32) {
    %c0_i32 = arith.constant 0 : i32
    %c0_i32_0 = arith.constant 0 : i32
    %c0_i32_1 = arith.constant 0 : i32
    return %arg0, %c0_i32, %c0_i32_0 : i32, i32, i32
  }
  func.func @transform_1(%arg0: i32, %arg1: i32) -> (i32, i32, i32) {
    %c0_i32 = arith.constant 0 : i32
    %c0_i32_0 = arith.constant 0 : i32
    %c0_i32_1 = arith.constant 0 : i32
    return %arg0, %c0_i32, %c0_i32_0 : i32, i32, i32
  }
  func.func @transform_2(%arg0: i32, %arg1: i32) -> (i32, i32, i32) {
    %c0_i32 = arith.constant 0 : i32
    %c0_i32_0 = arith.constant 0 : i32
    %c0_i32_1 = arith.constant 0 : i32
    return %arg1, %c0_i32, %c0_i32_0 : i32, i32, i32
  }
  func.func @transform_3(%arg0: i32, %arg1: i32) -> (i32, i32, i32) {
    %c0_i32 = arith.constant 0 : i32
    %c0_i32_0 = arith.constant 0 : i32
    %c0_i32_1 = arith.constant 0 : i32
    return %arg1, %c0_i32, %c0_i32_0 : i32, i32, i32
  }
  func.func @transform_4(%arg0: i32, %arg1: i32) -> (i32, i32, i32) {
    %c0_i32 = arith.constant 0 : i32
    %c0_i32_0 = arith.constant 0 : i32
    %c0_i32_1 = arith.constant 0 : i32
    return %arg1, %c0_i32, %c0_i32_0 : i32, i32, i32
  }
  func.func @transform_5(%arg0: i32, %arg1: i32) -> (i32, i32, i32) {
    %c0_i32 = arith.constant 0 : i32
    %c0_i32_0 = arith.constant 0 : i32
    %c0_i32_1 = arith.constant 0 : i32
    return %arg1, %c0_i32, %c0_i32_0 : i32, i32, i32
  }
  func.func @transform_6(%arg0: i32, %arg1: i32) -> (i32, i32, i32) {
    %c0_i32 = arith.constant 0 : i32
    %c0_i32_0 = arith.constant 0 : i32
    %c0_i32_1 = arith.constant 0 : i32
    return %arg1, %c0_i32, %c0_i32_0 : i32, i32, i32
  }
  func.func @transform_7(%arg0: i32, %arg1: i32) -> (i32, i32, i32) {
    %c0_i32 = arith.constant 0 : i32
    %c0_i32_0 = arith.constant 0 : i32
    %c0_i32_1 = arith.constant 0 : i32
    return %arg1, %c0_i32, %c0_i32_0 : i32, i32, i32
  }
  func.func @transform_8(%arg0: i32, %arg1: i32) -> (i32, i32, i32) {
    %c0_i32 = arith.constant 0 : i32
    %c0_i32_0 = arith.constant 0 : i32
    %c0_i32_1 = arith.constant 0 : i32
    return %arg1, %c0_i32, %c0_i32_0 : i32, i32, i32
  }
  func.func @transform_9(%arg0: i32, %arg1: i32) -> (i32, i32, i32) {
    %c0_i32 = arith.constant 0 : i32
    %c0_i32_0 = arith.constant 0 : i32
    %c0_i32_1 = arith.constant 0 : i32
    return %arg1, %c0_i32, %c0_i32_0 : i32, i32, i32
  }
  func.func @transform_10(%arg0: i32, %arg1: i32) -> (i32, i32, i32) {
    %c0_i32 = arith.constant 0 : i32
    %c0_i32_0 = arith.constant 0 : i32
    %c0_i32_1 = arith.constant 0 : i32
    return %arg1, %c0_i32, %c0_i32_0 : i32, i32, i32
  }
  func.func @transform_11(%arg0: i32, %arg1: i32) -> (i32, i32, i32) {
    %c0_i32 = arith.constant 0 : i32
    %c0_i32_0 = arith.constant 0 : i32
    %c0_i32_1 = arith.constant 0 : i32
    return %arg1, %c0_i32, %c0_i32_0 : i32, i32, i32
  }
  func.func @transform_12(%arg0: i32, %arg1: i32) -> (i32, i32, i32) {
    %c0_i32 = arith.constant 0 : i32
    %c0_i32_0 = arith.constant 0 : i32
    %c0_i32_1 = arith.constant 0 : i32
    return %arg1, %c0_i32, %c0_i32_0 : i32, i32, i32
  }
  func.func @transform_13(%arg0: i32, %arg1: i32) -> (i32, i32, i32) {
    %c0_i32 = arith.constant 0 : i32
    %c0_i32_0 = arith.constant 0 : i32
    %c0_i32_1 = arith.constant 0 : i32
    return %arg1, %c0_i32, %c0_i32_0 : i32, i32, i32
  }
  func.func @transform_14(%arg0: i32, %arg1: i32) -> (i32, i32, i32) {
    %c0_i32 = arith.constant 0 : i32
    %c0_i32_0 = arith.constant 0 : i32
    %c0_i32_1 = arith.constant 0 : i32
    return %arg1, %c0_i32, %c0_i32_0 : i32, i32, i32
  }
  func.func @transform_15(%arg0: i32, %arg1: i32) -> (i32, i32, i32) {
    %c0_i32 = arith.constant 0 : i32
    %c0_i32_0 = arith.constant 0 : i32
    %c0_i32_1 = arith.constant 0 : i32
    return %arg1, %c0_i32, %c0_i32_0 : i32, i32, i32
  }
  func.func @transform_16(%arg0: i32, %arg1: i32) -> (i32, i32, i32) {
    %c0_i32 = arith.constant 0 : i32
    %c0_i32_0 = arith.constant 0 : i32
    %c0_i32_1 = arith.constant 0 : i32
    return %arg1, %c0_i32, %c0_i32_0 : i32, i32, i32
  }
  func.func @transform_17(%arg0: i32, %arg1: i32) -> (i32, i32, i32) {
    %c0_i32 = arith.constant 0 : i32
    %c0_i32_0 = arith.constant 0 : i32
    %c0_i32_1 = arith.constant 0 : i32
    return %arg1, %c0_i32, %c0_i32_0 : i32, i32, i32
  }
  func.func @transform_18(%arg0: i32, %arg1: i32) -> (i32, i32, i32) {
    %c0_i32 = arith.constant 0 : i32
    %c0_i32_0 = arith.constant 0 : i32
    %c0_i32_1 = arith.constant 0 : i32
    return %arg1, %c0_i32, %c0_i32_0 : i32, i32, i32
  }
  func.func @transform_19(%arg0: i32, %arg1: i32) -> (i32, i32, i32) {
    %c0_i32 = arith.constant 0 : i32
    %c0_i32_0 = arith.constant 0 : i32
    %c0_i32_1 = arith.constant 0 : i32
    return %arg1, %c0_i32, %c0_i32_0 : i32, i32, i32
  }
  func.func @transform_20(%arg0: i32, %arg1: i32) -> (i32, i32, i32) {
    %c0_i32 = arith.constant 0 : i32
    %c0_i32_0 = arith.constant 0 : i32
    %c0_i32_1 = arith.constant 0 : i32
    return %arg1, %c0_i32, %c0_i32_0 : i32, i32, i32
  }
  func.func @transform_21(%arg0: i32, %arg1: i32) -> (i32, i32, i32) {
    %c0_i32 = arith.constant 0 : i32
    %c0_i32_0 = arith.constant 0 : i32
    %c0_i32_1 = arith.constant 0 : i32
    return %arg1, %c0_i32, %c0_i32_0 : i32, i32, i32
  }
  func.func @transform_22(%arg0: i32, %arg1: i32) -> (i32, i32, i32) {
    %c0_i32 = arith.constant 0 : i32
    %c0_i32_0 = arith.constant 0 : i32
    %c0_i32_1 = arith.constant 0 : i32
    return %arg1, %c0_i32, %c0_i32_0 : i32, i32, i32
  }
  func.func @transform_23(%arg0: i32, %arg1: i32) -> (i32, i32, i32) {
    %c0_i32 = arith.constant 0 : i32
    %c0_i32_0 = arith.constant 0 : i32
    %c0_i32_1 = arith.constant 0 : i32
    return %arg1, %c0_i32, %c0_i32_0 : i32, i32, i32
  }
  func.func @transform_24(%arg0: i32, %arg1: i32) -> (i32, i32, i32) {
    %c0_i32 = arith.constant 0 : i32
    %c0_i32_0 = arith.constant 0 : i32
    %c0_i32_1 = arith.constant 0 : i32
    return %arg1, %c0_i32, %c0_i32_0 : i32, i32, i32
  }
  func.func @transform_25(%arg0: i32, %arg1: i32) -> (i32, i32, i32) {
    %c0_i32 = arith.constant 0 : i32
    %c0_i32_0 = arith.constant 0 : i32
    %c0_i32_1 = arith.constant 0 : i32
    return %arg1, %c0_i32, %c0_i32_0 : i32, i32, i32
  }
  func.func @transform_26(%arg0: i32, %arg1: i32) -> (i32, i32, i32) {
    %c0_i32 = arith.constant 0 : i32
    %c0_i32_0 = arith.constant 0 : i32
    %c0_i32_1 = arith.constant 0 : i32
    return %arg0, %c0_i32, %c0_i32_0 : i32, i32, i32
  }
}

</mosaic_0001>

<llo_original>
// kernel: tpu_custom_call.1
$region0: #{tpu_custom_call.1}
  #allocation0 [shape = 'u32[]', space=smem, size = 0x4, offset = 0x4, fixed_abs, tag = 'smem constant byte address 0x4 - core index']
  #allocation1 [shape = 'u32[72,128]{1,0:T(1,128)}', space=vmem, size = 0x9000, scoped, tag = 'internal scratch']
  #allocation2 [shape = 'f32[8,32]{1,0:T(8,128)}', space=vmem, size = 0x1000, scoped, tag = 'scratch operand']
  #allocation3 [shape = 'f32[8,32]{1,0:T(8,128)}', space=vmem, size = 0x1000, scoped, tag = 'scratch operand']
  %s0 = inlined_call_operand.hbm [shape: f32[2,8,32], index: 0, kind: input, shape index: {}]
  %s1 = inlined_call_operand.hbm [shape: f32[2,8,32], index: 1, kind: input, shape index: {}]
  %s2 = inlined_call_operand.vmem [shape: f32[2,32,32], index: 2, kind: input, shape index: {}]
  %s3 = inlined_call_operand.vmem [shape: f32[2,32,32], index: 3, kind: input, shape index: {}]
  %s4 = inlined_call_operand.vmem [shape: f32[2,32,32], index: 4, kind: input, shape index: {}]
  %s5 = inlined_call_operand.vmem [shape: f32[2,32,32], index: 5, kind: input, shape index: {}]
  %s6 = inlined_call_operand.vmem [shape: f32[2,1,32], index: 6, kind: input, shape index: {}]
  %s7 = inlined_call_operand.hbm [shape: f32[2,1,32], index: 7, kind: input, shape index: {}]
  %s8 = inlined_call_operand.vmem [shape: f32[2,1,32], index: 8, kind: input, shape index: {}]
  %s9 = inlined_call_operand.vmem [shape: f32[2,1,32], index: 9, kind: input, shape index: {}]
  %s10 = inlined_call_operand.vmem [shape: f32[2,32,32], index: 10, kind: input, shape index: {}]
  %s11 = inlined_call_operand.hbm [shape: f32[2,32,32], index: 11, kind: input, shape index: {}]
  %s12 = inlined_call_operand.hbm [shape: f32[2,32,32], index: 12, kind: input, shape index: {}]
  %s13 = inlined_call_operand.hbm [shape: f32[2,32,32], index: 13, kind: input, shape index: {}]
  %s14 = inlined_call_operand.vmem [shape: f32[2,1,32], index: 14, kind: input, shape index: {}]
  %s15 = inlined_call_operand.vmem [shape: f32[2,1,32], index: 15, kind: input, shape index: {}]
  %s16 = inlined_call_operand.vmem [shape: f32[2,1,32], index: 16, kind: input, shape index: {}]
  %s17 = inlined_call_operand.vmem [shape: f32[2,1,32], index: 17, kind: input, shape index: {}]
  %s18 = inlined_call_operand.hbm [shape: f32[2,1,32], index: 18, kind: input, shape index: {}]
  %s19 = inlined_call_operand.hbm [shape: f32[2,1,32], index: 19, kind: input, shape index: {}]
  %s20 = inlined_call_operand.vmem [shape: f32[2,1,32], index: 20, kind: input, shape index: {}]
  %s21 = inlined_call_operand.vmem [shape: f32[2,1,32], index: 21, kind: input, shape index: {}]
  %s22 = inlined_call_operand.hbm [shape: f32[2,32,128], index: 22, kind: input, shape index: {}]
  %s23 = inlined_call_operand.hbm [shape: f32[2,1,128], index: 23, kind: input, shape index: {}]
  %s24 = inlined_call_operand.vmem [shape: f32[2,128,32], index: 24, kind: input, shape index: {}]
  %s25 = inlined_call_operand.vmem [shape: f32[2,1,32], index: 25, kind: input, shape index: {}]
  %s26 = inlined_call_operand.hbm [shape: f32[2,8,32], index: 26, kind: output, shape index: {}]
  %s27 = sld [smem:[#allocation0]]
  $region185: #{tpu_custom_call.1} parent=0
    _
  %s29 = ssub.s32 1, %s27
  %s30 = scalar_select 0, %s29, %s27
  $region1: #{tpu_custom_call.1} parent=0
    #allocation4 [shape = 'u8[8192]{0}', space=vmem, size = 0x2000, scoped, tag = 'input window, operand 0']
    #allocation5 [shape = 's32[2]{0}', space=sflag, size = 0x8, scoped, tag = 'scoped memory for tpu_custom_call.1']
    #allocation6 [shape = 's32[2]{0}', space=sflag, size = 0x8, scoped, tag = 'scoped memory for tpu_custom_call.1']
    #allocation7 [shape = 'u8[8192]{0}', space=vmem, size = 0x2000, scoped, tag = 'input window, operand 1']
    #allocation8 [shape = 's32[2]{0}', space=sflag, size = 0x8, scoped, tag = 'scoped memory for tpu_custom_call.1']
    #allocation9 [shape = 'u8[1024]{0}', space=vmem, size = 0x400, scoped, tag = 'input window, operand 7']
    #allocation10 [shape = 'u8[32768]{0}', space=vmem, size = 0x8000, scoped, tag = 'input window, operand 11']
    #allocation11 [shape = 's32[2]{0}', space=sflag, size = 0x8, scoped, tag = 'scoped memory for tpu_custom_call.1']
    #allocation12 [shape = 'u8[32768]{0}', space=vmem, size = 0x8000, scoped, tag = 'input window, operand 12']
    #allocation13 [shape = 'u8[32768]{0}', space=vmem, size = 0x8000, scoped, tag = 'input window, operand 13']
    #allocation14 [shape = 's32[2]{0}', space=sflag, size = 0x8, scoped, tag = 'scoped memory for tpu_custom_call.1']
    #allocation15 [shape = 'u8[1024]{0}', space=vmem, size = 0x400, scoped, tag = 'input window, operand 18']
    #allocation16 [shape = 'u8[1024]{0}', space=vmem, size = 0x400, scoped, tag = 'input window, operand 19']
    #allocation17 [shape = 's32[2]{0}', space=sflag, size = 0x8, scoped, tag = 'scoped memory for tpu_custom_call.1']
    #allocation18 [shape = 'u8[32768]{0}', space=vmem, size = 0x8000, scoped, tag = 'input window, operand 22']
    #allocation19 [shape = 'u8[1024]{0}', space=vmem, size = 0x400, scoped, tag = 'input window, operand 23']
    #allocation20 [shape = 's32[2]{0}', space=sflag, size = 0x8, scoped, tag = 'scoped memory for tpu_custom_call.1']
    #allocation21 [shape = 'u8[8192]{0}', space=vmem, size = 0x2000, scoped, tag = 'output window, operand 0']
    %31 = vsyncpa [#allocation5], 0
    %s32 = scalar_lea.sflag [#allocation5], 1
    %33 = vsyncpa %s32, 0
    %34 = vsyncpa [#allocation8], 0
    %s35 = scalar_lea.sflag [#allocation8], 1
    %36 = vsyncpa %s35, 0
    %37 = vsyncpa [#allocation11], 0
    %s38 = scalar_lea.sflag [#allocation11], 1
    %39 = vsyncpa %s38, 0
    %40 = vsyncpa [#allocation14], 0
    %s41 = scalar_lea.sflag [#allocation14], 1
    %42 = vsyncpa %s41, 0
    %43 = vsyncpa [#allocation17], 0
    %s44 = scalar_lea.sflag [#allocation17], 1
    %45 = vsyncpa %s44, 0
    %46 = vsyncpa [#allocation20], 0
    %s47 = scalar_lea.sflag [#allocation20], 1
    %48 = vsyncpa %s47, 0
    %49 = vsyncpa [#allocation6], 0
    %s50 = scalar_lea.sflag [#allocation6], 1
    %51 = vsyncpa %s50, 0
    loop: start=0, step=1, limit=6
    $region2: #{tpu_custom_call.1} parent=1 // loop_pre_header
      _
    $region3: #{tpu_custom_call.1} parent=1 // loop_header
      %s53 = sphi 0, %s57
      %p54 = scmp.ge.s32.totalorder %s53, 6
      %s60 = sphi 0, %s72
      %s61 = sphi 0, %s68
      %s62 = sphi 0, %s60
      %s63 = sphi 0, %s61
      %s64 = sphi 0, %s62
      %s65 = sphi 0, %s63
      %s75 = sphi 0, %s77
      %s78 = sphi 0, %s75
      %s79 = sphi 0, %s78
      %s95 = sphi 0, %s79
      %s101 = sphi 0, %s103
      %s104 = sphi 0, %s101
      %s105 = sphi 0, %s104
      %s121 = sphi 0, %s105
      %s127 = sphi 0, %s129
      %s130 = sphi 0, %s127
      %s131 = sphi 0, %s130
      %s147 = sphi 0, %s131
      %s153 = sphi 0, %s155
      %s156 = sphi 0, %s153
      %s157 = sphi 0, %s156
      %s173 = sphi 0, %s157
      %s179 = sphi 0, %s181
      %s182 = sphi 0, %s179
      %s183 = sphi 0, %s182
      %s199 = sphi 0, %s183
      %s205 = sphi 0, %s207
      %s208 = sphi 0, %s205
      %s209 = sphi 0, %s208
      %s225 = sphi 0, %s209
      %s231 = sphi 0, %s233
      %s234 = sphi 0, %s231
      %s235 = sphi 0, %s234
      %s251 = sphi 0, %s235
      %s257 = sphi 0, %s259
      %s260 = sphi 0, %s257
      %s261 = sphi 0, %s260
      %s277 = sphi 0, %s261
      %s283 = sphi 0, %s285
      %s286 = sphi 0, %s283
      %s287 = sphi 0, %s286
      %s303 = sphi 0, %s287
      %s309 = sphi 0, %s311
      %s312 = sphi 0, %s309
      %s313 = sphi 0, %s312
      %s329 = sphi 0, %s313
      %s335 = sphi 0, %s337
      %s338 = sphi 0, %s335
      %s339 = sphi 0, %s338
      %s355 = sphi 0, %s339
      %s361 = sphi 0, %s363
      %s364 = sphi 0, %s361
      %s365 = sphi 0, %s364
      %s381 = sphi 0, %s365
      %s387 = sphi 0, %s389
      %s390 = sphi 0, %s387
      %s391 = sphi 0, %s390
      %s407 = sphi 0, %s391
      %s413 = sphi 0, %s415
      %s416 = sphi 0, %s413
      %s417 = sphi 0, %s416
      %s433 = sphi 0, %s417
      %s439 = sphi 0, %s441
      %s442 = sphi 0, %s439
      %s443 = sphi 0, %s442
      %s459 = sphi 0, %s443
      %s465 = sphi 0, %s467
      %s468 = sphi 0, %s465
      %s469 = sphi 0, %s468
      %s485 = sphi 0, %s469
      %s491 = sphi 0, %s493
      %s494 = sphi 0, %s491
      %s495 = sphi 0, %s494
      %s511 = sphi 0, %s495
      %s517 = sphi 0, %s519
      %s520 = sphi 0, %s517
      %s521 = sphi 0, %s520
      %s537 = sphi 0, %s521
      %s543 = sphi 0, %s545
      %s546 = sphi 0, %s543
      %s547 = sphi 0, %s546
      %s563 = sphi 0, %s547
      %s569 = sphi 0, %s571
      %s572 = sphi 0, %s569
      %s573 = sphi 0, %s572
      %s589 = sphi 0, %s573
      %s595 = sphi 0, %s597
      %s598 = sphi 0, %s595
      %s599 = sphi 0, %s598
      %s615 = sphi 0, %s599
      %s621 = sphi 0, %s623
      %s624 = sphi 0, %s621
      %s625 = sphi 0, %s624
      %s641 = sphi 0, %s625
      %s647 = sphi 0, %s649
      %s650 = sphi 0, %s647
      %s651 = sphi 0, %s650
      %s667 = sphi 0, %s651
      %s673 = sphi 0, %s675
      %s676 = sphi 0, %s673
      %s677 = sphi 0, %s676
      %s693 = sphi 0, %s677
      %s699 = sphi 0, %s701
      %s702 = sphi 0, %s699
      %s703 = sphi 0, %s702
      %s719 = sphi 0, %s703
      %s725 = sphi 0, %s727
      %s728 = sphi 0, %s725
      %s729 = sphi 0, %s728
      %s745 = sphi 0, %s729
      %s751 = sphi 0, %s753
      %s754 = sphi 0, %s751
      %s755 = sphi 0, %s754
      %s771 = sphi 0, %s755
    $region4: #{tpu_custom_call.1} parent=1 // loop_header_branch
      %56 = sbr.rel (%p54) target = $region8
    $region5: #{tpu_custom_call.1} parent=1 // loop_body
      %s58 = ssub.s32 %s53, 1
      %s59 = ssub.s32 %s53, 2
      %s66 = sadd.s32 1, %s61
      %p67 = scmp.ge.s32.totalorder %s66, 2
      %s68 = scalar_select %p67, 0, %s66
      %s69 = sadd.s32 1, %s60
      %s70 = scalar_select %p67, %s69, %s60
      %p71 = scmp.ge.s32.totalorder %s70, 2
      %s72 = scalar_select %p71, 0, %s70
      %s73 = ssub.s32 %s60, %s72
      %p74 = scmp.eq.s32.totalorder %s73, 0
      %s76 = sadd.s32 %s75, 1
      %s77 = scalar_select %p74, %s75, %s76
      %p80 = pneg %p74
      %p81 = scmp.eq.s32.totalorder %s53, 3
      %p82 = por %p80, %p81
      %p83 = scmp.ne.s32.totalorder %s75, %s78
      %p84 = scmp.eq.s32.totalorder %s53, 0
      %p85 = por %p83, %p84
      %p86 = scmp.ne.s32.totalorder %s75, %s78
      %p87 = scmp.eq.s32.totalorder %s58, 3
      %p88 = por %p86, %p87
      %p89 = scmp.ne.s32.totalorder %s78, %s79
      %p90 = scmp.eq.s32.totalorder %s58, 0
      %p91 = por %p89, %p90
      %p92 = scmp.ne.s32.totalorder %s78, %s79
      %p93 = scmp.eq.s32.totalorder %s59, 3
      %p94 = por %p92, %p93
      %p96 = scmp.ne.s32.totalorder %s79, %s95
      %p97 = scmp.eq.s32.totalorder %s59, 0
      %p98 = por %p96, %p97
      %s99 = ssub.s32 %s60, %s72
      %p100 = scmp.eq.s32.totalorder %s99, 0
      %s102 = sadd.s32 %s101, 1
      %s103 = scalar_select %p100, %s101, %s102
      %p106 = pneg %p100
      %p107 = scmp.eq.s32.totalorder %s53, 3
      %p108 = por %p106, %p107
      %p109 = scmp.ne.s32.totalorder %s101, %s104
      %p110 = scmp.eq.s32.totalorder %s53, 0
      %p111 = por %p109, %p110
      %p112 = scmp.ne.s32.totalorder %s101, %s104
      %p113 = scmp.eq.s32.totalorder %s58, 3
      %p114 = por %p112, %p113
      %p115 = scmp.ne.s32.totalorder %s104, %s105
      %p116 = scmp.eq.s32.totalorder %s58, 0
      %p117 = por %p115, %p116
      %p118 = scmp.ne.s32.totalorder %s104, %s105
      %p119 = scmp.eq.s32.totalorder %s59, 3
      %p120 = por %p118, %p119
      %p122 = scmp.ne.s32.totalorder %s105, %s121
      %p123 = scmp.eq.s32.totalorder %s59, 0
      %p124 = por %p122, %p123
      %s125 = ssub.s32 %s61, %s68
      %p126 = scmp.eq.s32.totalorder %s125, 0
      %s128 = sadd.s32 %s127, 1
      %s129 = scalar_select %p126, %s127, %s128
      %p132 = pneg %p126
      %p133 = scmp.eq.s32.totalorder %s53, 3
      %p134 = por %p132, %p133
      %p135 = scmp.ne.s32.totalorder %s127, %s130
      %p136 = scmp.eq.s32.totalorder %s53, 0
      %p137 = por %p135, %p136
      %p138 = scmp.ne.s32.totalorder %s127, %s130
      %p139 = scmp.eq.s32.totalorder %s58, 3
      %p140 = por %p138, %p139
      %p141 = scmp.ne.s32.totalorder %s130, %s131
      %p142 = scmp.eq.s32.totalorder %s58, 0
      %p143 = por %p141, %p142
      %p144 = scmp.ne.s32.totalorder %s130, %s131
      %p145 = scmp.eq.s32.totalorder %s59, 3
      %p146 = por %p144, %p145
      %p148 = scmp.ne.s32.totalorder %s131, %s147
      %p149 = scmp.eq.s32.totalorder %s59, 0
      %p150 = por %p148, %p149
      %s151 = ssub.s32 %s61, %s68
      %p152 = scmp.eq.s32.totalorder %s151, 0
      %s154 = sadd.s32 %s153, 1
      %s155 = scalar_select %p152, %s153, %s154
      %p158 = pneg %p152
      %p159 = scmp.eq.s32.totalorder %s53, 3
      %p160 = por %p158, %p159
      %p161 = scmp.ne.s32.totalorder %s153, %s156
      %p162 = scmp.eq.s32.totalorder %s53, 0
      %p163 = por %p161, %p162
      %p164 = scmp.ne.s32.totalorder %s153, %s156
      %p165 = scmp.eq.s32.totalorder %s58, 3
      %p166 = por %p164, %p165
      %p167 = scmp.ne.s32.totalorder %s156, %s157
      %p168 = scmp.eq.s32.totalorder %s58, 0
      %p169 = por %p167, %p168
      %p170 = scmp.ne.s32.totalorder %s156, %s157
      %p171 = scmp.eq.s32.totalorder %s59, 3
      %p172 = por %p170, %p171
      %p174 = scmp.ne.s32.totalorder %s157, %s173
      %p175 = scmp.eq.s32.totalorder %s59, 0
      %p176 = por %p174, %p175
      %s177 = ssub.s32 %s61, %s68
      %p178 = scmp.eq.s32.totalorder %s177, 0
      %s180 = sadd.s32 %s179, 1
      %s181 = scalar_select %p178, %s179, %s180
      %p184 = pneg %p178
      %p185 = scmp.eq.s32.totalorder %s53, 3
      %p186 = por %p184, %p185
      %p187 = scmp.ne.s32.totalorder %s179, %s182
      %p188 = scmp.eq.s32.totalorder %s53, 0
      %p189 = por %p187, %p188
      %p190 = scmp.ne.s32.totalorder %s179, %s182
      %p191 = scmp.eq.s32.totalorder %s58, 3
      %p192 = por %p190, %p191
      %p193 = scmp.ne.s32.totalorder %s182, %s183
      %p194 = scmp.eq.s32.totalorder %s58, 0
      %p195 = por %p193, %p194
      %p196 = scmp.ne.s32.totalorder %s182, %s183
      %p197 = scmp.eq.s32.totalorder %s59, 3
      %p198 = por %p196, %p197
      %p200 = scmp.ne.s32.totalorder %s183, %s199
      %p201 = scmp.eq.s32.totalorder %s59, 0
      %p202 = por %p200, %p201
      %s203 = ssub.s32 %s61, %s68
      %p204 = scmp.eq.s32.totalorder %s203, 0
      %s206 = sadd.s32 %s205, 1
      %s207 = scalar_select %p204, %s205, %s206
      %p210 = pneg %p204
      %p211 = scmp.eq.s32.totalorder %s53, 3
      %p212 = por %p210, %p211
      %p213 = scmp.ne.s32.totalorder %s205, %s208
      %p214 = scmp.eq.s32.totalorder %s53, 0
      %p215 = por %p213, %p214
      %p216 = scmp.ne.s32.totalorder %s205, %s208
      %p217 = scmp.eq.s32.totalorder %s58, 3
      %p218 = por %p216, %p217
      %p219 = scmp.ne.s32.totalorder %s208, %s209
      %p220 = scmp.eq.s32.totalorder %s58, 0
      %p221 = por %p219, %p220
      %p222 = scmp.ne.s32.totalorder %s208, %s209
      %p223 = scmp.eq.s32.totalorder %s59, 3
      %p224 = por %p222, %p223
      %p226 = scmp.ne.s32.totalorder %s209, %s225
      %p227 = scmp.eq.s32.totalorder %s59, 0
      %p228 = por %p226, %p227
      %s229 = ssub.s32 %s61, %s68
      %p230 = scmp.eq.s32.totalorder %s229, 0
      %s232 = sadd.s32 %s231, 1
      %s233 = scalar_select %p230, %s231, %s232
      %p236 = pneg %p230
      %p237 = scmp.eq.s32.totalorder %s53, 3
      %p238 = por %p236, %p237
      %p239 = scmp.ne.s32.totalorder %s231, %s234
      %p240 = scmp.eq.s32.totalorder %s53, 0
      %p241 = por %p239, %p240
      %p242 = scmp.ne.s32.totalorder %s231, %s234
      %p243 = scmp.eq.s32.totalorder %s58, 3
      %p244 = por %p242, %p243
      %p245 = scmp.ne.s32.totalorder %s234, %s235
      %p246 = scmp.eq.s32.totalorder %s58, 0
      %p247 = por %p245, %p246
      %p248 = scmp.ne.s32.totalorder %s234, %s235
      %p249 = scmp.eq.s32.totalorder %s59, 3
      %p250 = por %p248, %p249
      %p252 = scmp.ne.s32.totalorder %s235, %s251
      %p253 = scmp.eq.s32.totalorder %s59, 0
      %p254 = por %p252, %p253
      %s255 = ssub.s32 %s61, %s68
      %p256 = scmp.eq.s32.totalorder %s255, 0
      %s258 = sadd.s32 %s257, 1
      %s259 = scalar_select %p256, %s257, %s258
      %p262 = pneg %p256
      %p263 = scmp.eq.s32.totalorder %s53, 3
      %p264 = por %p262, %p263
      %p265 = scmp.ne.s32.totalorder %s257, %s260
      %p266 = scmp.eq.s32.totalorder %s53, 0
      %p267 = por %p265, %p266
      %p268 = scmp.ne.s32.totalorder %s257, %s260
      %p269 = scmp.eq.s32.totalorder %s58, 3
      %p270 = por %p268, %p269
      %p271 = scmp.ne.s32.totalorder %s260, %s261
      %p272 = scmp.eq.s32.totalorder %s58, 0
      %p273 = por %p271, %p272
      %p274 = scmp.ne.s32.totalorder %s260, %s261
      %p275 = scmp.eq.s32.totalorder %s59, 3
      %p276 = por %p274, %p275
      %p278 = scmp.ne.s32.totalorder %s261, %s277
      %p279 = scmp.eq.s32.totalorder %s59, 0
      %p280 = por %p278, %p279
      %s281 = ssub.s32 %s61, %s68
      %p282 = scmp.eq.s32.totalorder %s281, 0
      %s284 = sadd.s32 %s283, 1
      %s285 = scalar_select %p282, %s283, %s284
      %p288 = pneg %p282
      %p289 = scmp.eq.s32.totalorder %s53, 3
      %p290 = por %p288, %p289
      %p291 = scmp.ne.s32.totalorder %s283, %s286
      %p292 = scmp.eq.s32.totalorder %s53, 0
      %p293 = por %p291, %p292
      %p294 = scmp.ne.s32.totalorder %s283, %s286
      %p295 = scmp.eq.s32.totalorder %s58, 3
      %p296 = por %p294, %p295
      %p297 = scmp.ne.s32.totalorder %s286, %s287
      %p298 = scmp.eq.s32.totalorder %s58, 0
      %p299 = por %p297, %p298
      %p300 = scmp.ne.s32.totalorder %s286, %s287
      %p301 = scmp.eq.s32.totalorder %s59, 3
      %p302 = por %p300, %p301
      %p304 = scmp.ne.s32.totalorder %s287, %s303
      %p305 = scmp.eq.s32.totalorder %s59, 0
      %p306 = por %p304, %p305
      %s307 = ssub.s32 %s61, %s68
      %p308 = scmp.eq.s32.totalorder %s307, 0
      %s310 = sadd.s32 %s309, 1
      %s311 = scalar_select %p308, %s309, %s310
      %p314 = pneg %p308
      %p315 = scmp.eq.s32.totalorder %s53, 3
      %p316 = por %p314, %p315
      %p317 = scmp.ne.s32.totalorder %s309, %s312
      %p318 = scmp.eq.s32.totalorder %s53, 0
      %p319 = por %p317, %p318
      %p320 = scmp.ne.s32.totalorder %s309, %s312
      %p321 = scmp.eq.s32.totalorder %s58, 3
      %p322 = por %p320, %p321
      %p323 = scmp.ne.s32.totalorder %s312, %s313
      %p324 = scmp.eq.s32.totalorder %s58, 0
      %p325 = por %p323, %p324
      %p326 = scmp.ne.s32.totalorder %s312, %s313
      %p327 = scmp.eq.s32.totalorder %s59, 3
      %p328 = por %p326, %p327
      %p330 = scmp.ne.s32.totalorder %s313, %s329
      %p331 = scmp.eq.s32.totalorder %s59, 0
      %p332 = por %p330, %p331
      %s333 = ssub.s32 %s61, %s68
      %p334 = scmp.eq.s32.totalorder %s333, 0
      %s336 = sadd.s32 %s335, 1
      %s337 = scalar_select %p334, %s335, %s336
      %p340 = pneg %p334
      %p341 = scmp.eq.s32.totalorder %s53, 3
      %p342 = por %p340, %p341
      %p343 = scmp.ne.s32.totalorder %s335, %s338
      %p344 = scmp.eq.s32.totalorder %s53, 0
      %p345 = por %p343, %p344
      %p346 = scmp.ne.s32.totalorder %s335, %s338
      %p347 = scmp.eq.s32.totalorder %s58, 3
      %p348 = por %p346, %p347
      %p349 = scmp.ne.s32.totalorder %s338, %s339
      %p350 = scmp.eq.s32.totalorder %s58, 0
      %p351 = por %p349, %p350
      %p352 = scmp.ne.s32.totalorder %s338, %s339
      %p353 = scmp.eq.s32.totalorder %s59, 3
      %p354 = por %p352, %p353
      %p356 = scmp.ne.s32.totalorder %s339, %s355
      %p357 = scmp.eq.s32.totalorder %s59, 0
      %p358 = por %p356, %p357
      %s359 = ssub.s32 %s61, %s68
      %p360 = scmp.eq.s32.totalorder %s359, 0
      %s362 = sadd.s32 %s361, 1
      %s363 = scalar_select %p360, %s361, %s362
      %p366 = pneg %p360
      %p367 = scmp.eq.s32.totalorder %s53, 3
      %p368 = por %p366, %p367
      %p369 = scmp.ne.s32.totalorder %s361, %s364
      %p370 = scmp.eq.s32.totalorder %s53, 0
      %p371 = por %p369, %p370
      %p372 = scmp.ne.s32.totalorder %s361, %s364
      %p373 = scmp.eq.s32.totalorder %s58, 3
      %p374 = por %p372, %p373
      %p375 = scmp.ne.s32.totalorder %s364, %s365
      %p376 = scmp.eq.s32.totalorder %s58, 0
      %p377 = por %p375, %p376
      %p378 = scmp.ne.s32.totalorder %s364, %s365
      %p379 = scmp.eq.s32.totalorder %s59, 3
      %p380 = por %p378, %p379
      %p382 = scmp.ne.s32.totalorder %s365, %s381
      %p383 = scmp.eq.s32.totalorder %s59, 0
      %p384 = por %p382, %p383
      %s385 = ssub.s32 %s61, %s68
      %p386 = scmp.eq.s32.totalorder %s385, 0
      %s388 = sadd.s32 %s387, 1
      %s389 = scalar_select %p386, %s387, %s388
      %p392 = pneg %p386
      %p393 = scmp.eq.s32.totalorder %s53, 3
      %p394 = por %p392, %p393
      %p395 = scmp.ne.s32.totalorder %s387, %s390
      %p396 = scmp.eq.s32.totalorder %s53, 0
      %p397 = por %p395, %p396
      %p398 = scmp.ne.s32.totalorder %s387, %s390
      %p399 = scmp.eq.s32.totalorder %s58, 3
      %p400 = por %p398, %p399
      %p401 = scmp.ne.s32.totalorder %s390, %s391
      %p402 = scmp.eq.s32.totalorder %s58, 0
      %p403 = por %p401, %p402
      %p404 = scmp.ne.s32.totalorder %s390, %s391
      %p405 = scmp.eq.s32.totalorder %s59, 3
      %p406 = por %p404, %p405
      %p408 = scmp.ne.s32.totalorder %s391, %s407
      %p409 = scmp.eq.s32.totalorder %s59, 0
      %p410 = por %p408, %p409
      %s411 = ssub.s32 %s61, %s68
      %p412 = scmp.eq.s32.totalorder %s411, 0
      %s414 = sadd.s32 %s413, 1
      %s415 = scalar_select %p412, %s413, %s414
      %p418 = pneg %p412
      %p419 = scmp.eq.s32.totalorder %s53, 3
      %p420 = por %p418, %p419
      %p421 = scmp.ne.s32.totalorder %s413, %s416
      %p422 = scmp.eq.s32.totalorder %s53, 0
      %p423 = por %p421, %p422
      %p424 = scmp.ne.s32.totalorder %s413, %s416
      %p425 = scmp.eq.s32.totalorder %s58, 3
      %p426 = por %p424, %p425
      %p427 = scmp.ne.s32.totalorder %s416, %s417
      %p428 = scmp.eq.s32.totalorder %s58, 0
      %p429 = por %p427, %p428
      %p430 = scmp.ne.s32.totalorder %s416, %s417
      %p431 = scmp.eq.s32.totalorder %s59, 3
      %p432 = por %p430, %p431
      %p434 = scmp.ne.s32.totalorder %s417, %s433
      %p435 = scmp.eq.s32.totalorder %s59, 0
      %p436 = por %p434, %p435
      %s437 = ssub.s32 %s61, %s68
      %p438 = scmp.eq.s32.totalorder %s437, 0
      %s440 = sadd.s32 %s439, 1
      %s441 = scalar_select %p438, %s439, %s440
      %p444 = pneg %p438
      %p445 = scmp.eq.s32.totalorder %s53, 3
      %p446 = por %p444, %p445
      %p447 = scmp.ne.s32.totalorder %s439, %s442
      %p448 = scmp.eq.s32.totalorder %s53, 0
      %p449 = por %p447, %p448
      %p450 = scmp.ne.s32.totalorder %s439, %s442
      %p451 = scmp.eq.s32.totalorder %s58, 3
      %p452 = por %p450, %p451
      %p453 = scmp.ne.s32.totalorder %s442, %s443
      %p454 = scmp.eq.s32.totalorder %s58, 0
      %p455 = por %p453, %p454
      %p456 = scmp.ne.s32.totalorder %s442, %s443
      %p457 = scmp.eq.s32.totalorder %s59, 3
      %p458 = por %p456, %p457
      %p460 = scmp.ne.s32.totalorder %s443, %s459
      %p461 = scmp.eq.s32.totalorder %s59, 0
      %p462 = por %p460, %p461
      %s463 = ssub.s32 %s61, %s68
      %p464 = scmp.eq.s32.totalorder %s463, 0
      %s466 = sadd.s32 %s465, 1
      %s467 = scalar_select %p464, %s465, %s466
      %p470 = pneg %p464
      %p471 = scmp.eq.s32.totalorder %s53, 3
      %p472 = por %p470, %p471
      %p473 = scmp.ne.s32.totalorder %s465, %s468
      %p474 = scmp.eq.s32.totalorder %s53, 0
      %p475 = por %p473, %p474
      %p476 = scmp.ne.s32.totalorder %s465, %s468
      %p477 = scmp.eq.s32.totalorder %s58, 3
      %p478 = por %p476, %p477
      %p479 = scmp.ne.s32.totalorder %s468, %s469
      %p480 = scmp.eq.s32.totalorder %s58, 0
      %p481 = por %p479, %p480
      %p482 = scmp.ne.s32.totalorder %s468, %s469
      %p483 = scmp.eq.s32.totalorder %s59, 3
      %p484 = por %p482, %p483
      %p486 = scmp.ne.s32.totalorder %s469, %s485
      %p487 = scmp.eq.s32.totalorder %s59, 0
      %p488 = por %p486, %p487
      %s489 = ssub.s32 %s61, %s68
      %p490 = scmp.eq.s32.totalorder %s489, 0
      %s492 = sadd.s32 %s491, 1
      %s493 = scalar_select %p490, %s491, %s492
      %p496 = pneg %p490
      %p497 = scmp.eq.s32.totalorder %s53, 3
      %p498 = por %p496, %p497
      %p499 = scmp.ne.s32.totalorder %s491, %s494
      %p500 = scmp.eq.s32.totalorder %s53, 0
      %p501 = por %p499, %p500
      %p502 = scmp.ne.s32.totalorder %s491, %s494
      %p503 = scmp.eq.s32.totalorder %s58, 3
      %p504 = por %p502, %p503
      %p505 = scmp.ne.s32.totalorder %s494, %s495
      %p506 = scmp.eq.s32.totalorder %s58, 0
      %p507 = por %p505, %p506
      %p508 = scmp.ne.s32.totalorder %s494, %s495
      %p509 = scmp.eq.s32.totalorder %s59, 3
      %p510 = por %p508, %p509
      %p512 = scmp.ne.s32.totalorder %s495, %s511
      %p513 = scmp.eq.s32.totalorder %s59, 0
      %p514 = por %p512, %p513
      %s515 = ssub.s32 %s61, %s68
      %p516 = scmp.eq.s32.totalorder %s515, 0
      %s518 = sadd.s32 %s517, 1
      %s519 = scalar_select %p516, %s517, %s518
      %p522 = pneg %p516
      %p523 = scmp.eq.s32.totalorder %s53, 3
      %p524 = por %p522, %p523
      %p525 = scmp.ne.s32.totalorder %s517, %s520
      %p526 = scmp.eq.s32.totalorder %s53, 0
      %p527 = por %p525, %p526
      %p528 = scmp.ne.s32.totalorder %s517, %s520
      %p529 = scmp.eq.s32.totalorder %s58, 3
      %p530 = por %p528, %p529
      %p531 = scmp.ne.s32.totalorder %s520, %s521
      %p532 = scmp.eq.s32.totalorder %s58, 0
      %p533 = por %p531, %p532
      %p534 = scmp.ne.s32.totalorder %s520, %s521
      %p535 = scmp.eq.s32.totalorder %s59, 3
      %p536 = por %p534, %p535
      %p538 = scmp.ne.s32.totalorder %s521, %s537
      %p539 = scmp.eq.s32.totalorder %s59, 0
      %p540 = por %p538, %p539
      %s541 = ssub.s32 %s61, %s68
      %p542 = scmp.eq.s32.totalorder %s541, 0
      %s544 = sadd.s32 %s543, 1
      %s545 = scalar_select %p542, %s543, %s544
      %p548 = pneg %p542
      %p549 = scmp.eq.s32.totalorder %s53, 3
      %p550 = por %p548, %p549
      %p551 = scmp.ne.s32.totalorder %s543, %s546
      %p552 = scmp.eq.s32.totalorder %s53, 0
      %p553 = por %p551, %p552
      %p554 = scmp.ne.s32.totalorder %s543, %s546
      %p555 = scmp.eq.s32.totalorder %s58, 3
      %p556 = por %p554, %p555
      %p557 = scmp.ne.s32.totalorder %s546, %s547
      %p558 = scmp.eq.s32.totalorder %s58, 0
      %p559 = por %p557, %p558
      %p560 = scmp.ne.s32.totalorder %s546, %s547
      %p561 = scmp.eq.s32.totalorder %s59, 3
      %p562 = por %p560, %p561
      %p564 = scmp.ne.s32.totalorder %s547, %s563
      %p565 = scmp.eq.s32.totalorder %s59, 0
      %p566 = por %p564, %p565
      %s567 = ssub.s32 %s61, %s68
      %p568 = scmp.eq.s32.totalorder %s567, 0
      %s570 = sadd.s32 %s569, 1
      %s571 = scalar_select %p568, %s569, %s570
      %p574 = pneg %p568
      %p575 = scmp.eq.s32.totalorder %s53, 3
      %p576 = por %p574, %p575
      %p577 = scmp.ne.s32.totalorder %s569, %s572
      %p578 = scmp.eq.s32.totalorder %s53, 0
      %p579 = por %p577, %p578
      %p580 = scmp.ne.s32.totalorder %s569, %s572
      %p581 = scmp.eq.s32.totalorder %s58, 3
      %p582 = por %p580, %p581
      %p583 = scmp.ne.s32.totalorder %s572, %s573
      %p584 = scmp.eq.s32.totalorder %s58, 0
      %p585 = por %p583, %p584
      %p586 = scmp.ne.s32.totalorder %s572, %s573
      %p587 = scmp.eq.s32.totalorder %s59, 3
      %p588 = por %p586, %p587
      %p590 = scmp.ne.s32.totalorder %s573, %s589
      %p591 = scmp.eq.s32.totalorder %s59, 0
      %p592 = por %p590, %p591
      %s593 = ssub.s32 %s61, %s68
      %p594 = scmp.eq.s32.totalorder %s593, 0
      %s596 = sadd.s32 %s595, 1
      %s597 = scalar_select %p594, %s595, %s596
      %p600 = pneg %p594
      %p601 = scmp.eq.s32.totalorder %s53, 3
      %p602 = por %p600, %p601
      %p603 = scmp.ne.s32.totalorder %s595, %s598
      %p604 = scmp.eq.s32.totalorder %s53, 0
      %p605 = por %p603, %p604
      %p606 = scmp.ne.s32.totalorder %s595, %s598
      %p607 = scmp.eq.s32.totalorder %s58, 3
      %p608 = por %p606, %p607
      %p609 = scmp.ne.s32.totalorder %s598, %s599
      %p610 = scmp.eq.s32.totalorder %s58, 0
      %p611 = por %p609, %p610
      %p612 = scmp.ne.s32.totalorder %s598, %s599
      %p613 = scmp.eq.s32.totalorder %s59, 3
      %p614 = por %p612, %p613
      %p616 = scmp.ne.s32.totalorder %s599, %s615
      %p617 = scmp.eq.s32.totalorder %s59, 0
      %p618 = por %p616, %p617
      %s619 = ssub.s32 %s61, %s68
      %p620 = scmp.eq.s32.totalorder %s619, 0
      %s622 = sadd.s32 %s621, 1
      %s623 = scalar_select %p620, %s621, %s622
      %p626 = pneg %p620
      %p627 = scmp.eq.s32.totalorder %s53, 3
      %p628 = por %p626, %p627
      %p629 = scmp.ne.s32.totalorder %s621, %s624
      %p630 = scmp.eq.s32.totalorder %s53, 0
      %p631 = por %p629, %p630
      %p632 = scmp.ne.s32.totalorder %s621, %s624
      %p633 = scmp.eq.s32.totalorder %s58, 3
      %p634 = por %p632, %p633
      %p635 = scmp.ne.s32.totalorder %s624, %s625
      %p636 = scmp.eq.s32.totalorder %s58, 0
      %p637 = por %p635, %p636
      %p638 = scmp.ne.s32.totalorder %s624, %s625
      %p639 = scmp.eq.s32.totalorder %s59, 3
      %p640 = por %p638, %p639
      %p642 = scmp.ne.s32.totalorder %s625, %s641
      %p643 = scmp.eq.s32.totalorder %s59, 0
      %p644 = por %p642, %p643
      %s645 = ssub.s32 %s61, %s68
      %p646 = scmp.eq.s32.totalorder %s645, 0
      %s648 = sadd.s32 %s647, 1
      %s649 = scalar_select %p646, %s647, %s648
      %p652 = pneg %p646
      %p653 = scmp.eq.s32.totalorder %s53, 3
      %p654 = por %p652, %p653
      %p655 = scmp.ne.s32.totalorder %s647, %s650
      %p656 = scmp.eq.s32.totalorder %s53, 0
      %p657 = por %p655, %p656
      %p658 = scmp.ne.s32.totalorder %s647, %s650
      %p659 = scmp.eq.s32.totalorder %s58, 3
      %p660 = por %p658, %p659
      %p661 = scmp.ne.s32.totalorder %s650, %s651
      %p662 = scmp.eq.s32.totalorder %s58, 0
      %p663 = por %p661, %p662
      %p664 = scmp.ne.s32.totalorder %s650, %s651
      %p665 = scmp.eq.s32.totalorder %s59, 3
      %p666 = por %p664, %p665
      %p668 = scmp.ne.s32.totalorder %s651, %s667
      %p669 = scmp.eq.s32.totalorder %s59, 0
      %p670 = por %p668, %p669
      %s671 = ssub.s32 %s61, %s68
      %p672 = scmp.eq.s32.totalorder %s671, 0
      %s674 = sadd.s32 %s673, 1
      %s675 = scalar_select %p672, %s673, %s674
      %p678 = pneg %p672
      %p679 = scmp.eq.s32.totalorder %s53, 3
      %p680 = por %p678, %p679
      %p681 = scmp.ne.s32.totalorder %s673, %s676
      %p682 = scmp.eq.s32.totalorder %s53, 0
      %p683 = por %p681, %p682
      %p684 = scmp.ne.s32.totalorder %s673, %s676
      %p685 = scmp.eq.s32.totalorder %s58, 3
      %p686 = por %p684, %p685
      %p687 = scmp.ne.s32.totalorder %s676, %s677
      %p688 = scmp.eq.s32.totalorder %s58, 0
      %p689 = por %p687, %p688
      %p690 = scmp.ne.s32.totalorder %s676, %s677
      %p691 = scmp.eq.s32.totalorder %s59, 3
      %p692 = por %p690, %p691
      %p694 = scmp.ne.s32.totalorder %s677, %s693
      %p695 = scmp.eq.s32.totalorder %s59, 0
      %p696 = por %p694, %p695
      %s697 = ssub.s32 %s61, %s68
      %p698 = scmp.eq.s32.totalorder %s697, 0
      %s700 = sadd.s32 %s699, 1
      %s701 = scalar_select %p698, %s699, %s700
      %p704 = pneg %p698
      %p705 = scmp.eq.s32.totalorder %s53, 3
      %p706 = por %p704, %p705
      %p707 = scmp.ne.s32.totalorder %s699, %s702
      %p708 = scmp.eq.s32.totalorder %s53, 0
      %p709 = por %p707, %p708
      %p710 = scmp.ne.s32.totalorder %s699, %s702
      %p711 = scmp.eq.s32.totalorder %s58, 3
      %p712 = por %p710, %p711
      %p713 = scmp.ne.s32.totalorder %s702, %s703
      %p714 = scmp.eq.s32.totalorder %s58, 0
      %p715 = por %p713, %p714
      %p716 = scmp.ne.s32.totalorder %s702, %s703
      %p717 = scmp.eq.s32.totalorder %s59, 3
      %p718 = por %p716, %p717
      %p720 = scmp.ne.s32.totalorder %s703, %s719
      %p721 = scmp.eq.s32.totalorder %s59, 0
      %p722 = por %p720, %p721
      %s723 = ssub.s32 %s61, %s68
      %p724 = scmp.eq.s32.totalorder %s723, 0
      %s726 = sadd.s32 %s725, 1
      %s727 = scalar_select %p724, %s725, %s726
      %p730 = pneg %p724
      %p731 = scmp.eq.s32.totalorder %s53, 3
      %p732 = por %p730, %p731
      %p733 = scmp.ne.s32.totalorder %s725, %s728
      %p734 = scmp.eq.s32.totalorder %s53, 0
      %p735 = por %p733, %p734
      %p736 = scmp.ne.s32.totalorder %s725, %s728
      %p737 = scmp.eq.s32.totalorder %s58, 3
      %p738 = por %p736, %p737
      %p739 = scmp.ne.s32.totalorder %s728, %s729
      %p740 = scmp.eq.s32.totalorder %s58, 0
      %p741 = por %p739, %p740
      %p742 = scmp.ne.s32.totalorder %s728, %s729
      %p743 = scmp.eq.s32.totalorder %s59, 3
      %p744 = por %p742, %p743
      %p746 = scmp.ne.s32.totalorder %s729, %s745
      %p747 = scmp.eq.s32.totalorder %s59, 0
      %p748 = por %p746, %p747
      %s749 = ssub.s32 %s60, %s72
      %p750 = scmp.eq.s32.totalorder %s749, 0
      %s752 = sadd.s32 %s751, 1
      %s753 = scalar_select %p750, %s751, %s752
      %p756 = pneg %p750
      %p757 = scmp.eq.s32.totalorder %s53, 3
      %p758 = por %p756, %p757
      %p759 = scmp.ne.s32.totalorder %s751, %s754
      %p760 = scmp.eq.s32.totalorder %s53, 0
      %p761 = por %p759, %p760
      %p762 = scmp.ne.s32.totalorder %s751, %s754
      %p763 = scmp.eq.s32.totalorder %s58, 3
      %p764 = por %p762, %p763
      %p765 = scmp.ne.s32.totalorder %s754, %s755
      %p766 = scmp.eq.s32.totalorder %s58, 0
      %p767 = por %p765, %p766
      %p768 = scmp.ne.s32.totalorder %s754, %s755
      %p769 = scmp.eq.s32.totalorder %s59, 3
      %p770 = por %p768, %p769
      %p772 = scmp.ne.s32.totalorder %s755, %s771
      %p773 = scmp.eq.s32.totalorder %s59, 0
      %p774 = por %p772, %p773
      %p775 = scmp.le.s32.totalorder 1, %s53
      %p776 = scmp.lt.s32.totalorder %s53, 5
      %p777 = pnand %p775, %p776
      %p778 = pneg %p777
      // Predicated region
      $region9: #{tpu_custom_call.1} parent=5 // pred_check
        _
      $region10: #{tpu_custom_call.1} parent=5 // pred_check_branch
        %780 = sbr.rel (%p777) target = $region12
      $region11: #{tpu_custom_call.1} parent=5 // pred_region
        %s781 = ssub.s32 %s53, 1
      $region12: #{tpu_custom_call.1} parent=5 // pred_fallthru
        _
      %p782 = scmp.lt.s32.totalorder %s53, 4
      // Predicated region
      $region13: #{tpu_custom_call.1} parent=5 // pred_check
        %p783 = pneg %p782
      $region14: #{tpu_custom_call.1} parent=5 // pred_check_branch
        %785 = sbr.rel (%p783) target = $region16
      $region15: #{tpu_custom_call.1} parent=5 // pred_region
        // Predicated region
        $region17: #{tpu_custom_call.1} parent=15 // pred_check
          %p786 = pneg %p85
        $region18: #{tpu_custom_call.1} parent=15 // pred_check_branch
          %788 = sbr.rel (%p786) target = $region20
        $region19: #{tpu_custom_call.1} parent=15 // pred_region
          %s789 = sand.u32 %s75, 1
          %s790 = scalar_lea.sflag [#allocation5], %s789
          %s791 = sand.u32 %s75, 1
          %s792 = smul.addr %s791, 8
          %s793 = scalar_lea.vmem [#allocation4], %s792
          %795 = vsyncadd %s790, 0
          %s796 = smul.addr %s60, 8
          %s797 = scalar_lea.hbm %s0, %s796
          %s799 = sshll.u32 %s797, 4
          %s800 = int_to_ptr.hbm [resolvable:$true] %s799
          %s801 = sshll.u32 %s793, 4
          %s802 = int_to_ptr.vmem [resolvable:$true] %s801
          %804 = dma.hbm_to_vmem [thread:$0]  %s800, 128, %s802, %s790
        $region20: #{tpu_custom_call.1} parent=15 // pred_fallthru
          _
        // Predicated region
        $region21: #{tpu_custom_call.1} parent=15 // pred_check
          %p805 = pneg %p111
        $region22: #{tpu_custom_call.1} parent=15 // pred_check_branch
          %807 = sbr.rel (%p805) target = $region24
        $region23: #{tpu_custom_call.1} parent=15 // pred_region
          %s808 = sand.u32 %s53, 1
          %s809 = scalar_lea.sflag [#allocation8], %s808
          %s810 = sand.u32 %s101, 1
          %s811 = smul.addr %s810, 8
          %s812 = scalar_lea.vmem [#allocation7], %s811
          %814 = vsyncadd %s809, 0
          %s815 = smul.addr %s60, 8
          %s816 = scalar_lea.hbm %s1, %s815
          %s818 = sshll.u32 %s816, 4
          %s819 = int_to_ptr.hbm [resolvable:$true] %s818
          %s820 = sshll.u32 %s812, 4
          %s821 = int_to_ptr.vmem [resolvable:$true] %s820
          %823 = dma.hbm_to_vmem [thread:$0]  %s819, 128, %s821, %s809
        $region24: #{tpu_custom_call.1} parent=15 // pred_fallthru
          _
        // Predicated region
        $region25: #{tpu_custom_call.1} parent=15 // pred_check
          %p824 = pneg %p137
        $region26: #{tpu_custom_call.1} parent=15 // pred_check_branch
          %826 = sbr.rel (%p824) target = $region28
        $region27: #{tpu_custom_call.1} parent=15 // pred_region
          %p827 = scmp.lt.s32.totalorder %s61, 1
          %s828 = scalar_select %p827, %s61, 1
          %s829 = smul.addr %s828, 4
          %s830 = smul.addr %s829, 8
          %s831 = scalar_lea.vmem %s2, %s830
        $region28: #{tpu_custom_call.1} parent=15 // pred_fallthru
          _
        // Predicated region
        $region29: #{tpu_custom_call.1} parent=15 // pred_check
          %p832 = pneg %p163
        $region30: #{tpu_custom_call.1} parent=15 // pred_check_branch
          %834 = sbr.rel (%p832) target = $region32
        $region31: #{tpu_custom_call.1} parent=15 // pred_region
          %p835 = scmp.lt.s32.totalorder %s61, 1
          %s836 = scalar_select %p835, %s61, 1
          %s837 = smul.addr %s836, 4
          %s838 = smul.addr %s837, 8
          %s839 = scalar_lea.vmem %s3, %s838
        $region32: #{tpu_custom_call.1} parent=15 // pred_fallthru
          _
        // Predicated region
        $region33: #{tpu_custom_call.1} parent=15 // pred_check
          %p840 = pneg %p189
        $region34: #{tpu_custom_call.1} parent=15 // pred_check_branch
          %842 = sbr.rel (%p840) target = $region36
        $region35: #{tpu_custom_call.1} parent=15 // pred_region
          %p843 = scmp.lt.s32.totalorder %s61, 1
          %s844 = scalar_select %p843, %s61, 1
          %s845 = smul.addr %s844, 4
          %s846 = smul.addr %s845, 8
          %s847 = scalar_lea.vmem %s4, %s846
        $region36: #{tpu_custom_call.1} parent=15 // pred_fallthru
          _
        // Predicated region
        $region37: #{tpu_custom_call.1} parent=15 // pred_check
          %p848 = pneg %p215
        $region38: #{tpu_custom_call.1} parent=15 // pred_check_branch
          %850 = sbr.rel (%p848) target = $region40
        $region39: #{tpu_custom_call.1} parent=15 // pred_region
          %p851 = scmp.lt.s32.totalorder %s61, 1
          %s852 = scalar_select %p851, %s61, 1
          %s853 = smul.addr %s852, 4
          %s854 = smul.addr %s853, 8
          %s855 = scalar_lea.vmem %s5, %s854
        $region40: #{tpu_custom_call.1} parent=15 // pred_fallthru
          _
        // Predicated region
        $region41: #{tpu_custom_call.1} parent=15 // pred_check
          %p856 = pneg %p241
        $region42: #{tpu_custom_call.1} parent=15 // pred_check_branch
          %858 = sbr.rel (%p856) target = $region44
        $region43: #{tpu_custom_call.1} parent=15 // pred_region
          %p859 = scmp.lt.s32.totalorder %s61, 1
          %s860 = scalar_select %p859, %s61, 1
          %s861 = scalar_lea.vmem %s6, %s860
        $region44: #{tpu_custom_call.1} parent=15 // pred_fallthru
          _
        // Predicated region
        $region45: #{tpu_custom_call.1} parent=15 // pred_check
          %p862 = pneg %p267
        $region46: #{tpu_custom_call.1} parent=15 // pred_check_branch
          %864 = sbr.rel (%p862) target = $region48
        $region47: #{tpu_custom_call.1} parent=15 // pred_region
          %s865 = sand.u32 %s53, 1
          %s866 = scalar_lea.sflag [#allocation8], %s865
          %s867 = sand.u32 %s257, 1
          %s868 = scalar_lea.vmem [#allocation9], %s867
          %870 = vsyncadd %s866, 0
          %s871 = scalar_lea.hbm %s7, %s61
          %s873 = sshll.u32 %s871, 4
          %s874 = int_to_ptr.hbm [resolvable:$true] %s873
          %s875 = sshll.u32 %s868, 4
          %s876 = int_to_ptr.vmem [resolvable:$true] %s875
          %878 = dma.hbm_to_vmem [thread:$0]  %s874, 16, %s876, %s866
        $region48: #{tpu_custom_call.1} parent=15 // pred_fallthru
          _
        // Predicated region
        $region49: #{tpu_custom_call.1} parent=15 // pred_check
          %p879 = pneg %p293
        $region50: #{tpu_custom_call.1} parent=15 // pred_check_branch
          %881 = sbr.rel (%p879) target = $region52
        $region51: #{tpu_custom_call.1} parent=15 // pred_region
          %p882 = scmp.lt.s32.totalorder %s61, 1
          %s883 = scalar_select %p882, %s61, 1
          %s884 = scalar_lea.vmem %s8, %s883
        $region52: #{tpu_custom_call.1} parent=15 // pred_fallthru
          _
        // Predicated region
        $region53: #{tpu_custom_call.1} parent=15 // pred_check
          %p885 = pneg %p319
        $region54: #{tpu_custom_call.1} parent=15 // pred_check_branch
          %887 = sbr.rel (%p885) target = $region56
        $region55: #{tpu_custom_call.1} parent=15 // pred_region
          %p888 = scmp.lt.s32.totalorder %s61, 1
          %s889 = scalar_select %p888, %s61, 1
          %s890 = scalar_lea.vmem %s9, %s889
        $region56: #{tpu_custom_call.1} parent=15 // pred_fallthru
          _
        // Predicated region
        $region57: #{tpu_custom_call.1} parent=15 // pred_check
          %p891 = pneg %p345
        $region58: #{tpu_custom_call.1} parent=15 // pred_check_branch
          %893 = sbr.rel (%p891) target = $region60
        $region59: #{tpu_custom_call.1} parent=15 // pred_region
          %p894 = scmp.lt.s32.totalorder %s61, 1
          %s895 = scalar_select %p894, %s61, 1
          %s896 = smul.addr %s895, 4
          %s897 = smul.addr %s896, 8
          %s898 = scalar_lea.vmem %s10, %s897
        $region60: #{tpu_custom_call.1} parent=15 // pred_fallthru
          _
        // Predicated region
        $region61: #{tpu_custom_call.1} parent=15 // pred_check
          %p899 = pneg %p371
        $region62: #{tpu_custom_call.1} parent=15 // pred_check_branch
          %901 = sbr.rel (%p899) target = $region64
        $region63: #{tpu_custom_call.1} parent=15 // pred_region
          %s902 = sand.u32 %s53, 1
          %s903 = scalar_lea.sflag [#allocation11], %s902
          %s904 = sand.u32 %s361, 1
          %s905 = smul.addr %s904, 32
          %s906 = scalar_lea.vmem [#allocation10], %s905
          %908 = vsyncadd %s903, 0
          %s909 = smul.addr %s61, 4
          %s910 = smul.addr %s909, 8
          %s911 = scalar_lea.hbm %s11, %s910
          %s912 = sshll.u32 %s911, 4
          %s913 = int_to_ptr.hbm [resolvable:$true] %s912
          %s914 = sshll.u32 %s906, 4
          %s915 = int_to_ptr.vmem [resolvable:$true] %s914
          %920 = dma.hbm_to_vmem [thread:$0]  %s913, 512, %s915, %s903, 128, 128, 8
        $region64: #{tpu_custom_call.1} parent=15 // pred_fallthru
          _
        // Predicated region
        $region65: #{tpu_custom_call.1} parent=15 // pred_check
          %p921 = pneg %p397
        $region66: #{tpu_custom_call.1} parent=15 // pred_check_branch
          %923 = sbr.rel (%p921) target = $region68
        $region67: #{tpu_custom_call.1} parent=15 // pred_region
          %s924 = sand.u32 %s53, 1
          %s925 = scalar_lea.sflag [#allocation11], %s924
          %s926 = sand.u32 %s387, 1
          %s927 = smul.addr %s926, 32
          %s928 = scalar_lea.vmem [#allocation12], %s927
          %930 = vsyncadd %s925, 0
          %s931 = smul.addr %s61, 4
          %s932 = smul.addr %s931, 8
          %s933 = scalar_lea.hbm %s12, %s932
          %s934 = sshll.u32 %s933, 4
          %s935 = int_to_ptr.hbm [resolvable:$true] %s934
          %s936 = sshll.u32 %s928, 4
          %s937 = int_to_ptr.vmem [resolvable:$true] %s936
          %942 = dma.hbm_to_vmem [thread:$0]  %s935, 512, %s937, %s925, 128, 128, 8
        $region68: #{tpu_custom_call.1} parent=15 // pred_fallthru
          _
        // Predicated region
        $region69: #{tpu_custom_call.1} parent=15 // pred_check
          %p943 = pneg %p423
        $region70: #{tpu_custom_call.1} parent=15 // pred_check_branch
          %945 = sbr.rel (%p943) target = $region72
        $region71: #{tpu_custom_call.1} parent=15 // pred_region
          %s946 = sand.u32 %s53, 1
          %s947 = scalar_lea.sflag [#allocation14], %s946
          %s948 = sand.u32 %s413, 1
          %s949 = smul.addr %s948, 32
          %s950 = scalar_lea.vmem [#allocation13], %s949
          %952 = vsyncadd %s947, 0
          %s953 = smul.addr %s61, 4
          %s954 = smul.addr %s953, 8
          %s955 = scalar_lea.hbm %s13, %s954
          %s956 = sshll.u32 %s955, 4
          %s957 = int_to_ptr.hbm [resolvable:$true] %s956
          %s958 = sshll.u32 %s950, 4
          %s959 = int_to_ptr.vmem [resolvable:$true] %s958
          %964 = dma.hbm_to_vmem [thread:$0]  %s957, 512, %s959, %s947, 128, 128, 8
        $region72: #{tpu_custom_call.1} parent=15 // pred_fallthru
          _
        // Predicated region
        $region73: #{tpu_custom_call.1} parent=15 // pred_check
          %p965 = pneg %p449
        $region74: #{tpu_custom_call.1} parent=15 // pred_check_branch
          %967 = sbr.rel (%p965) target = $region76
        $region75: #{tpu_custom_call.1} parent=15 // pred_region
          %p968 = scmp.lt.s32.totalorder %s61, 1
          %s969 = scalar_select %p968, %s61, 1
          %s970 = scalar_lea.vmem %s14, %s969
        $region76: #{tpu_custom_call.1} parent=15 // pred_fallthru
          _
        // Predicated region
        $region77: #{tpu_custom_call.1} parent=15 // pred_check
          %p971 = pneg %p475
        $region78: #{tpu_custom_call.1} parent=15 // pred_check_branch
          %973 = sbr.rel (%p971) target = $region80
        $region79: #{tpu_custom_call.1} parent=15 // pred_region
          %p974 = scmp.lt.s32.totalorder %s61, 1
          %s975 = scalar_select %p974, %s61, 1
          %s976 = scalar_lea.vmem %s15, %s975
        $region80: #{tpu_custom_call.1} parent=15 // pred_fallthru
          _
        // Predicated region
        $region81: #{tpu_custom_call.1} parent=15 // pred_check
          %p977 = pneg %p501
        $region82: #{tpu_custom_call.1} parent=15 // pred_check_branch
          %979 = sbr.rel (%p977) target = $region84
        $region83: #{tpu_custom_call.1} parent=15 // pred_region
          %p980 = scmp.lt.s32.totalorder %s61, 1
          %s981 = scalar_select %p980, %s61, 1
          %s982 = scalar_lea.vmem %s16, %s981
        $region84: #{tpu_custom_call.1} parent=15 // pred_fallthru
          _
        // Predicated region
        $region85: #{tpu_custom_call.1} parent=15 // pred_check
          %p983 = pneg %p527
        $region86: #{tpu_custom_call.1} parent=15 // pred_check_branch
          %985 = sbr.rel (%p983) target = $region88
        $region87: #{tpu_custom_call.1} parent=15 // pred_region
          %p986 = scmp.lt.s32.totalorder %s61, 1
          %s987 = scalar_select %p986, %s61, 1
          %s988 = scalar_lea.vmem %s17, %s987
        $region88: #{tpu_custom_call.1} parent=15 // pred_fallthru
          _
        // Predicated region
        $region89: #{tpu_custom_call.1} parent=15 // pred_check
          %p989 = pneg %p553
        $region90: #{tpu_custom_call.1} parent=15 // pred_check_branch
          %991 = sbr.rel (%p989) target = $region92
        $region91: #{tpu_custom_call.1} parent=15 // pred_region
          %s992 = sand.u32 %s53, 1
          %s993 = scalar_lea.sflag [#allocation14], %s992
          %s994 = sand.u32 %s543, 1
          %s995 = scalar_lea.vmem [#allocation15], %s994
          %997 = vsyncadd %s993, 0
          %s998 = scalar_lea.hbm %s18, %s61
          %s1000 = sshll.u32 %s998, 4
          %s1001 = int_to_ptr.hbm [resolvable:$true] %s1000
          %s1002 = sshll.u32 %s995, 4
          %s1003 = int_to_ptr.vmem [resolvable:$true] %s1002
          %1005 = dma.hbm_to_vmem [thread:$0]  %s1001, 16, %s1003, %s993
        $region92: #{tpu_custom_call.1} parent=15 // pred_fallthru
          _
        // Predicated region
        $region93: #{tpu_custom_call.1} parent=15 // pred_check
          %p1006 = pneg %p579
        $region94: #{tpu_custom_call.1} parent=15 // pred_check_branch
          %1008 = sbr.rel (%p1006) target = $region96
        $region95: #{tpu_custom_call.1} parent=15 // pred_region
          %s1009 = sand.u32 %s53, 1
          %s1010 = scalar_lea.sflag [#allocation17], %s1009
          %s1011 = sand.u32 %s569, 1
          %s1012 = scalar_lea.vmem [#allocation16], %s1011
          %1014 = vsyncadd %s1010, 0
          %s1015 = scalar_lea.hbm %s19, %s61
          %s1017 = sshll.u32 %s1015, 4
          %s1018 = int_to_ptr.hbm [resolvable:$true] %s1017
          %s1019 = sshll.u32 %s1012, 4
          %s1020 = int_to_ptr.vmem [resolvable:$true] %s1019
          %1022 = dma.hbm_to_vmem [thread:$0]  %s1018, 16, %s1020, %s1010
        $region96: #{tpu_custom_call.1} parent=15 // pred_fallthru
          _
        // Predicated region
        $region97: #{tpu_custom_call.1} parent=15 // pred_check
          %p1023 = pneg %p605
        $region98: #{tpu_custom_call.1} parent=15 // pred_check_branch
          %1025 = sbr.rel (%p1023) target = $region100
        $region99: #{tpu_custom_call.1} parent=15 // pred_region
          %p1026 = scmp.lt.s32.totalorder %s61, 1
          %s1027 = scalar_select %p1026, %s61, 1
          %s1028 = scalar_lea.vmem %s20, %s1027
        $region100: #{tpu_custom_call.1} parent=15 // pred_fallthru
          _
        // Predicated region
        $region101: #{tpu_custom_call.1} parent=15 // pred_check
          %p1029 = pneg %p631
        $region102: #{tpu_custom_call.1} parent=15 // pred_check_branch
          %1031 = sbr.rel (%p1029) target = $region104
        $region103: #{tpu_custom_call.1} parent=15 // pred_region
          %p1032 = scmp.lt.s32.totalorder %s61, 1
          %s1033 = scalar_select %p1032, %s61, 1
          %s1034 = scalar_lea.vmem %s21, %s1033
        $region104: #{tpu_custom_call.1} parent=15 // pred_fallthru
          _
        // Predicated region
        $region105: #{tpu_custom_call.1} parent=15 // pred_check
          %p1035 = pneg %p657
        $region106: #{tpu_custom_call.1} parent=15 // pred_check_branch
          %1037 = sbr.rel (%p1035) target = $region108
        $region107: #{tpu_custom_call.1} parent=15 // pred_region
          %s1038 = sand.u32 %s53, 1
          %s1039 = scalar_lea.sflag [#allocation17], %s1038
          %s1040 = sand.u32 %s647, 1
          %s1041 = smul.addr %s1040, 32
          %s1042 = scalar_lea.vmem [#allocation18], %s1041
          %1044 = vsyncadd %s1039, 0
          %s1045 = smul.addr %s61, 4
          %s1046 = smul.addr %s1045, 8
          %s1047 = scalar_lea.hbm %s22, %s1046
          %s1048 = sshll.u32 %s1047, 4
          %s1049 = int_to_ptr.hbm [resolvable:$true] %s1048
          %s1050 = sshll.u32 %s1042, 4
          %s1051 = int_to_ptr.vmem [resolvable:$true] %s1050
          %1056 = dma.hbm_to_vmem [thread:$0]  %s1049, 512, %s1051, %s1039, 128, 128, 8
        $region108: #{tpu_custom_call.1} parent=15 // pred_fallthru
          _
        // Predicated region
        $region109: #{tpu_custom_call.1} parent=15 // pred_check
          %p1057 = pneg %p683
        $region110: #{tpu_custom_call.1} parent=15 // pred_check_branch
          %1059 = sbr.rel (%p1057) target = $region112
        $region111: #{tpu_custom_call.1} parent=15 // pred_region
          %s1060 = sand.u32 %s673, 1
          %s1061 = scalar_lea.sflag [#allocation20], %s1060
          %s1062 = sand.u32 %s673, 1
          %s1063 = scalar_lea.vmem [#allocation19], %s1062
          %1065 = vsyncadd %s1061, 0
          %s1066 = scalar_lea.hbm %s23, %s61
          %s1068 = sshll.u32 %s1066, 4
          %s1069 = int_to_ptr.hbm [resolvable:$true] %s1068
          %s1070 = sshll.u32 %s1063, 4
          %s1071 = int_to_ptr.vmem [resolvable:$true] %s1070
          %1073 = dma.hbm_to_vmem [thread:$0]  %s1069, 16, %s1071, %s1061
        $region112: #{tpu_custom_call.1} parent=15 // pred_fallthru
          _
        // Predicated region
        $region113: #{tpu_custom_call.1} parent=15 // pred_check
          %p1074 = pneg %p709
        $region114: #{tpu_custom_call.1} parent=15 // pred_check_branch
          %1076 = sbr.rel (%p1074) target = $region116
        $region115: #{tpu_custom_call.1} parent=15 // pred_region
          %p1077 = scmp.lt.s32.totalorder %s61, 1
          %s1078 = scalar_select %p1077, %s61, 1
          %s1079 = smul.addr %s1078, 16
          %s1080 = smul.addr %s1079, 8
          %s1081 = scalar_lea.vmem %s24, %s1080
        $region116: #{tpu_custom_call.1} parent=15 // pred_fallthru
          _
        // Predicated region
        $region117: #{tpu_custom_call.1} parent=15 // pred_check
          %p1082 = pneg %p735
        $region118: #{tpu_custom_call.1} parent=15 // pred_check_branch
          %1084 = sbr.rel (%p1082) target = $region120
        $region119: #{tpu_custom_call.1} parent=15 // pred_region
          %p1085 = scmp.lt.s32.totalorder %s61, 1
          %s1086 = scalar_select %p1085, %s61, 1
          %s1087 = scalar_lea.vmem %s25, %s1086
        $region120: #{tpu_custom_call.1} parent=15 // pred_fallthru
          _
      $region16: #{tpu_custom_call.1} parent=5 // pred_fallthru
        _
      %p1088 = scmp.le.s32.totalorder 1, %s53
      %p1089 = scmp.lt.s32.totalorder %s53, 5
      %p1090 = pnand %p1088, %p1089
      %p1091 = pneg %p1090
      // Predicated region
      $region121: #{tpu_custom_call.1} parent=5 // pred_check
        _
      $region122: #{tpu_custom_call.1} parent=5 // pred_check_branch
        %1093 = sbr.rel (%p1090) target = $region124
      $region123: #{tpu_custom_call.1} parent=5 // pred_region
        %s1094 = ssub.s32 %s53, 1
        %s1095 = sand.u32 %s78, 1
        %s1096 = scalar_lea.sflag [#allocation5], %s1095
        %s1097 = sand.u32 %s78, 1
        %s1098 = smul.addr %s1097, 8
        %s1099 = scalar_lea.vmem [#allocation4], %s1098
        // Predicated region
        $region125: #{tpu_custom_call.1} parent=123 // pred_check
          %p1100 = pneg %p91
        $region126: #{tpu_custom_call.1} parent=123 // pred_check_branch
          %1102 = sbr.rel (%p1100) target = $region128
        $region127: #{tpu_custom_call.1} parent=123 // pred_region
          %1104 = dma.done %s1096, 128
        $region128: #{tpu_custom_call.1} parent=123 // pred_fallthru
          _
        %s1105 = sand.u32 %s58, 1
        %s1106 = scalar_lea.sflag [#allocation8], %s1105
        %s1107 = sand.u32 %s104, 1
        %s1108 = smul.addr %s1107, 8
        %s1109 = scalar_lea.vmem [#allocation7], %s1108
        // Predicated region
        $region129: #{tpu_custom_call.1} parent=123 // pred_check
          %p1110 = pneg %p117
        $region130: #{tpu_custom_call.1} parent=123 // pred_check_branch
          %1112 = sbr.rel (%p1110) target = $region132
        $region131: #{tpu_custom_call.1} parent=123 // pred_region
          %1114 = dma.done %s1106, 128
        $region132: #{tpu_custom_call.1} parent=123 // pred_fallthru
          _
        %s1115 = sand.u32 %s58, 1
        %s1116 = scalar_lea.sflag [#allocation8], %s1115
        %s1117 = sand.u32 %s260, 1
        %s1118 = scalar_lea.vmem [#allocation9], %s1117
        // Predicated region
        $region133: #{tpu_custom_call.1} parent=123 // pred_check
          %p1119 = pneg %p273
        $region134: #{tpu_custom_call.1} parent=123 // pred_check_branch
          %1121 = sbr.rel (%p1119) target = $region136
        $region135: #{tpu_custom_call.1} parent=123 // pred_region
          %1123 = dma.done %s1116, 16
        $region136: #{tpu_custom_call.1} parent=123 // pred_fallthru
          _
        %s1124 = sand.u32 %s58, 1
        %s1125 = scalar_lea.sflag [#allocation11], %s1124
        %s1126 = sand.u32 %s364, 1
        %s1127 = smul.addr %s1126, 32
        %s1128 = scalar_lea.vmem [#allocation10], %s1127
        // Predicated region
        $region137: #{tpu_custom_call.1} parent=123 // pred_check
          %p1129 = pneg %p377
        $region138: #{tpu_custom_call.1} parent=123 // pred_check_branch
          %1131 = sbr.rel (%p1129) target = $region140
        $region139: #{tpu_custom_call.1} parent=123 // pred_region
          %1133 = dma.done %s1125, 512
        $region140: #{tpu_custom_call.1} parent=123 // pred_fallthru
          _
        %s1134 = sand.u32 %s58, 1
        %s1135 = scalar_lea.sflag [#allocation11], %s1134
        %s1136 = sand.u32 %s390, 1
        %s1137 = smul.addr %s1136, 32
        %s1138 = scalar_lea.vmem [#allocation12], %s1137
        // Predicated region
        $region141: #{tpu_custom_call.1} parent=123 // pred_check
          %p1139 = pneg %p403
        $region142: #{tpu_custom_call.1} parent=123 // pred_check_branch
          %1141 = sbr.rel (%p1139) target = $region144
        $region143: #{tpu_custom_call.1} parent=123 // pred_region
          %1143 = dma.done %s1135, 512
        $region144: #{tpu_custom_call.1} parent=123 // pred_fallthru
          _
        %s1144 = sand.u32 %s58, 1
        %s1145 = scalar_lea.sflag [#allocation14], %s1144
        %s1146 = sand.u32 %s416, 1
        %s1147 = smul.addr %s1146, 32
        %s1148 = scalar_lea.vmem [#allocation13], %s1147
        // Predicated region
        $region145: #{tpu_custom_call.1} parent=123 // pred_check
          %p1149 = pneg %p429
        $region146: #{tpu_custom_call.1} parent=123 // pred_check_branch
          %1151 = sbr.rel (%p1149) target = $region148
        $region147: #{tpu_custom_call.1} parent=123 // pred_region
          %1153 = dma.done %s1145, 512
        $region148: #{tpu_custom_call.1} parent=123 // pred_fallthru
          _
        %s1154 = sand.u32 %s58, 1
        %s1155 = scalar_lea.sflag [#allocation14], %s1154
        %s1156 = sand.u32 %s546, 1
        %s1157 = scalar_lea.vmem [#allocation15], %s1156
        // Predicated region
        $region149: #{tpu_custom_call.1} parent=123 // pred_check
          %p1158 = pneg %p559
        $region150: #{tpu_custom_call.1} parent=123 // pred_check_branch
          %1160 = sbr.rel (%p1158) target = $region152
        $region151: #{tpu_custom_call.1} parent=123 // pred_region
          %1162 = dma.done %s1155, 16
        $region152: #{tpu_custom_call.1} parent=123 // pred_fallthru
          _
        %s1163 = sand.u32 %s58, 1
        %s1164 = scalar_lea.sflag [#allocation17], %s1163
        %s1165 = sand.u32 %s572, 1
        %s1166 = scalar_lea.vmem [#allocation16], %s1165
        // Predicated region
        $region153: #{tpu_custom_call.1} parent=123 // pred_check
          %p1167 = pneg %p585
        $region154: #{tpu_custom_call.1} parent=123 // pred_check_branch
          %1169 = sbr.rel (%p1167) target = $region156
        $region155: #{tpu_custom_call.1} parent=123 // pred_region
          %1171 = dma.done %s1164, 16
        $region156: #{tpu_custom_call.1} parent=123 // pred_fallthru
          _
        %s1172 = sand.u32 %s58, 1
        %s1173 = scalar_lea.sflag [#allocation17], %s1172
        %s1174 = sand.u32 %s650, 1
        %s1175 = smul.addr %s1174, 32
        %s1176 = scalar_lea.vmem [#allocation18], %s1175
        // Predicated region
        $region157: #{tpu_custom_call.1} parent=123 // pred_check
          %p1177 = pneg %p663
        $region158: #{tpu_custom_call.1} parent=123 // pred_check_branch
          %1179 = sbr.rel (%p1177) target = $region160
        $region159: #{tpu_custom_call.1} parent=123 // pred_region
          %1181 = dma.done %s1173, 512
        $region160: #{tpu_custom_call.1} parent=123 // pred_fallthru
          _
        %s1182 = sand.u32 %s676, 1
        %s1183 = scalar_lea.sflag [#allocation20], %s1182
        %s1184 = sand.u32 %s676, 1
        %s1185 = scalar_lea.vmem [#allocation19], %s1184
        // Predicated region
        $region161: #{tpu_custom_call.1} parent=123 // pred_check
          %p1186 = pneg %p689
        $region162: #{tpu_custom_call.1} parent=123 // pred_check_branch
          %1188 = sbr.rel (%p1186) target = $region164
        $region163: #{tpu_custom_call.1} parent=123 // pred_region
          %1190 = dma.done %s1183, 16
        $region164: #{tpu_custom_call.1} parent=123 // pred_fallthru
          _
        %s1191 = sand.u32 %s78, 1
        %s1192 = scalar_lea.sflag [#allocation5], %s1191
        %s1193 = sand.u32 %s78, 1
        %s1194 = smul.addr %s1193, 8
        %s1195 = scalar_lea.vmem [#allocation4], %s1194
        %p1196 = pneg %p91
        %p1197 = pneg %p88
        %s1198 = sand.u32 %s58, 1
        %s1199 = scalar_lea.sflag [#allocation8], %s1198
        %s1200 = sand.u32 %s104, 1
        %s1201 = smul.addr %s1200, 8
        %s1202 = scalar_lea.vmem [#allocation7], %s1201
        %p1203 = pneg %p117
        %p1204 = pneg %p114
        %p1205 = scmp.lt.s32.totalorder %s63, 1
        %s1206 = scalar_select %p1205, %s63, 1
        %s1207 = smul.addr %s1206, 4
        %s1208 = smul.addr %s1207, 8
        %s1209 = scalar_lea.vmem %s2, %s1208
        %p1210 = pneg %p143
        %p1211 = pneg %p140
        %p1212 = scmp.lt.s32.totalorder %s63, 1
        %s1213 = scalar_select %p1212, %s63, 1
        %s1214 = smul.addr %s1213, 4
        %s1215 = smul.addr %s1214, 8
        %s1216 = scalar_lea.vmem %s3, %s1215
        %p1217 = pneg %p169
        %p1218 = pneg %p166
        %p1219 = scmp.lt.s32.totalorder %s63, 1
        %s1220 = scalar_select %p1219, %s63, 1
        %s1221 = smul.addr %s1220, 4
        %s1222 = smul.addr %s1221, 8
        %s1223 = scalar_lea.vmem %s4, %s1222
        %p1224 = pneg %p195
        %p1225 = pneg %p192
        %p1226 = scmp.lt.s32.totalorder %s63, 1
        %s1227 = scalar_select %p1226, %s63, 1
        %s1228 = smul.addr %s1227, 4
        %s1229 = smul.addr %s1228, 8
        %s1230 = scalar_lea.vmem %s5, %s1229
        %p1231 = pneg %p221
        %p1232 = pneg %p218
        %p1233 = scmp.lt.s32.totalorder %s63, 1
        %s1234 = scalar_select %p1233, %s63, 1
        %s1235 = scalar_lea.vmem %s6, %s1234
        %p1236 = pneg %p247
        %p1237 = pneg %p244
        %s1238 = sand.u32 %s58, 1
        %s1239 = scalar_lea.sflag [#allocation8], %s1238
        %s1240 = sand.u32 %s260, 1
        %s1241 = scalar_lea.vmem [#allocation9], %s1240
        %p1242 = pneg %p273
        %p1243 = pneg %p270
        %p1244 = scmp.lt.s32.totalorder %s63, 1
        %s1245 = scalar_select %p1244, %s63, 1
        %s1246 = scalar_lea.vmem %s8, %s1245
        %p1247 = pneg %p299
        %p1248 = pneg %p296
        %p1249 = scmp.lt.s32.totalorder %s63, 1
        %s1250 = scalar_select %p1249, %s63, 1
        %s1251 = scalar_lea.vmem %s9, %s1250
        %p1252 = pneg %p325
        %p1253 = pneg %p322
        %p1254 = scmp.lt.s32.totalorder %s63, 1
        %s1255 = scalar_select %p1254, %s63, 1
        %s1256 = smul.addr %s1255, 4
        %s1257 = smul.addr %s1256, 8
        %s1258 = scalar_lea.vmem %s10, %s1257
        %p1259 = pneg %p351
        %p1260 = pneg %p348
        %s1261 = sand.u32 %s58, 1
        %s1262 = scalar_lea.sflag [#allocation11], %s1261
        %s1263 = sand.u32 %s364, 1
        %s1264 = smul.addr %s1263, 32
        %s1265 = scalar_lea.vmem [#allocation10], %s1264
        %p1266 = pneg %p377
        %p1267 = pneg %p374
        %s1268 = sand.u32 %s58, 1
        %s1269 = scalar_lea.sflag [#allocation11], %s1268
        %s1270 = sand.u32 %s390, 1
        %s1271 = smul.addr %s1270, 32
        %s1272 = scalar_lea.vmem [#allocation12], %s1271
        %p1273 = pneg %p403
        %p1274 = pneg %p400
        %s1275 = sand.u32 %s58, 1
        %s1276 = scalar_lea.sflag [#allocation14], %s1275
        %s1277 = sand.u32 %s416, 1
        %s1278 = smul.addr %s1277, 32
        %s1279 = scalar_lea.vmem [#allocation13], %s1278
        %p1280 = pneg %p429
        %p1281 = pneg %p426
        %p1282 = scmp.lt.s32.totalorder %s63, 1
        %s1283 = scalar_select %p1282, %s63, 1
        %s1284 = scalar_lea.vmem %s14, %s1283
        %p1285 = pneg %p455
        %p1286 = pneg %p452
        %p1287 = scmp.lt.s32.totalorder %s63, 1
        %s1288 = scalar_select %p1287, %s63, 1
        %s1289 = scalar_lea.vmem %s15, %s1288
        %p1290 = pneg %p481
        %p1291 = pneg %p478
        %p1292 = scmp.lt.s32.totalorder %s63, 1
        %s1293 = scalar_select %p1292, %s63, 1
        %s1294 = scalar_lea.vmem %s16, %s1293
        %p1295 = pneg %p507
        %p1296 = pneg %p504
        %p1297 = scmp.lt.s32.totalorder %s63, 1
        %s1298 = scalar_select %p1297, %s63, 1
        %s1299 = scalar_lea.vmem %s17, %s1298
        %p1300 = pneg %p533
        %p1301 = pneg %p530
        %s1302 = sand.u32 %s58, 1
        %s1303 = scalar_lea.sflag [#allocation14], %s1302
        %s1304 = sand.u32 %s546, 1
        %s1305 = scalar_lea.vmem [#allocation15], %s1304
        %p1306 = pneg %p559
        %p1307 = pneg %p556
        %s1308 = sand.u32 %s58, 1
        %s1309 = scalar_lea.sflag [#allocation17], %s1308
        %s1310 = sand.u32 %s572, 1
        %s1311 = scalar_lea.vmem [#allocation16], %s1310
        %p1312 = pneg %p585
        %p1313 = pneg %p582
        %p1314 = scmp.lt.s32.totalorder %s63, 1
        %s1315 = scalar_select %p1314, %s63, 1
        %s1316 = scalar_lea.vmem %s20, %s1315
        %p1317 = pneg %p611
        %p1318 = pneg %p608
        %p1319 = scmp.lt.s32.totalorder %s63, 1
        %s1320 = scalar_select %p1319, %s63, 1
        %s1321 = scalar_lea.vmem %s21, %s1320
        %p1322 = pneg %p637
        %p1323 = pneg %p634
        %s1324 = sand.u32 %s58, 1
        %s1325 = scalar_lea.sflag [#allocation17], %s1324
        %s1326 = sand.u32 %s650, 1
        %s1327 = smul.addr %s1326, 32
        %s1328 = scalar_lea.vmem [#allocation18], %s1327
        %p1329 = pneg %p663
        %p1330 = pneg %p660
        %s1331 = sand.u32 %s676, 1
        %s1332 = scalar_lea.sflag [#allocation20], %s1331
        %s1333 = sand.u32 %s676, 1
        %s1334 = scalar_lea.vmem [#allocation19], %s1333
        %p1335 = pneg %p689
        %p1336 = pneg %p686
        %p1337 = scmp.lt.s32.totalorder %s63, 1
        %s1338 = scalar_select %p1337, %s63, 1
        %s1339 = smul.addr %s1338, 16
        %s1340 = smul.addr %s1339, 8
        %s1341 = scalar_lea.vmem %s24, %s1340
        %p1342 = pneg %p715
        %p1343 = pneg %p712
        %p1344 = scmp.lt.s32.totalorder %s63, 1
        %s1345 = scalar_select %p1344, %s63, 1
        %s1346 = scalar_lea.vmem %s25, %s1345
        %p1347 = pneg %p741
        %p1348 = pneg %p738
        %p1349 = pneg %p767
        %p1350 = pneg %p764
        %s1351 = sand.u32 %s754, 1
        %s1352 = scalar_lea.sflag [#allocation6], %s1351
        %s1353 = sand.u32 %s754, 1
        %s1354 = smul.addr %s1353, 8
        %s1355 = scalar_lea.vmem [#allocation21], %s1354
        %p1356 = scmp.lt.s32.totalorder %s63, 1
        %s1357 = scalar_select %p1356, %s63, 1
        %s1358 = smul.addr %s1357, 4
        %s1359 = smul.addr %s1358, 8
        %s1360 = scalar_lea.vmem %s2, %s1359
        %p1361 = scmp.lt.s32.totalorder %s63, 1
        %s1362 = scalar_select %p1361, %s63, 1
        %s1363 = smul.addr %s1362, 4
        %s1364 = smul.addr %s1363, 8
        %s1365 = scalar_lea.vmem %s3, %s1364
        %p1366 = scmp.lt.s32.totalorder %s63, 1
        %s1367 = scalar_select %p1366, %s63, 1
        %s1368 = smul.addr %s1367, 4
        %s1369 = smul.addr %s1368, 8
        %s1370 = scalar_lea.vmem %s4, %s1369
        %p1371 = scmp.lt.s32.totalorder %s63, 1
        %s1372 = scalar_select %p1371, %s63, 1
        %s1373 = smul.addr %s1372, 4
        %s1374 = smul.addr %s1373, 8
        %s1375 = scalar_lea.vmem %s5, %s1374
        %p1376 = scmp.lt.s32.totalorder %s63, 1
        %s1377 = scalar_select %p1376, %s63, 1
        %s1378 = scalar_lea.vmem %s6, %s1377
        %p1379 = scmp.lt.s32.totalorder %s63, 1
        %s1380 = scalar_select %p1379, %s63, 1
        %s1381 = scalar_lea.vmem %s8, %s1380
        %p1382 = scmp.lt.s32.totalorder %s63, 1
        %s1383 = scalar_select %p1382, %s63, 1
        %s1384 = scalar_lea.vmem %s9, %s1383
        %p1385 = scmp.lt.s32.totalorder %s63, 1
        %s1386 = scalar_select %p1385, %s63, 1
        %s1387 = smul.addr %s1386, 4
        %s1388 = smul.addr %s1387, 8
        %s1389 = scalar_lea.vmem %s10, %s1388
        %p1390 = scmp.lt.s32.totalorder %s63, 1
        %s1391 = scalar_select %p1390, %s63, 1
        %s1392 = scalar_lea.vmem %s14, %s1391
        %p1393 = scmp.lt.s32.totalorder %s63, 1
        %s1394 = scalar_select %p1393, %s63, 1
        %s1395 = scalar_lea.vmem %s15, %s1394
        %p1396 = scmp.lt.s32.totalorder %s63, 1
        %s1397 = scalar_select %p1396, %s63, 1
        %s1398 = scalar_lea.vmem %s16, %s1397
        %p1399 = scmp.lt.s32.totalorder %s63, 1
        %s1400 = scalar_select %p1399, %s63, 1
        %s1401 = scalar_lea.vmem %s17, %s1400
        %p1402 = scmp.lt.s32.totalorder %s63, 1
        %s1403 = scalar_select %p1402, %s63, 1
        %s1404 = scalar_lea.vmem %s20, %s1403
        %p1405 = scmp.lt.s32.totalorder %s63, 1
        %s1406 = scalar_select %p1405, %s63, 1
        %s1407 = scalar_lea.vmem %s21, %s1406
        %p1408 = scmp.lt.s32.totalorder %s63, 1
        %s1409 = scalar_select %p1408, %s63, 1
        %s1410 = smul.addr %s1409, 16
        %s1411 = smul.addr %s1410, 8
        %s1412 = scalar_lea.vmem %s24, %s1411
        %p1413 = scmp.lt.s32.totalorder %s63, 1
        %s1414 = scalar_select %p1413, %s63, 1
        %s1415 = scalar_lea.vmem %s25, %s1414
        %p1416 = scmp.eq.s32.totalorder %s63, 0
        // Predicated region
        $region165: #{tpu_custom_call.1} parent=123 // pred_check
          %p1417 = pneg %p1416
        $region166: #{tpu_custom_call.1} parent=123 // pred_check_branch
          %1419 = sbr.rel (%p1417) target = $region168
        $region167: #{tpu_custom_call.1} parent=123 // pred_region
          %v1420 = vld [vmem:[%s1099] sm:$0xff]
          %vm1421 = vcmask 261120
          %1422 = vst.msk [vmem:[#allocation2] sm:$0xff] %vm1421, %v1420
        $region168: #{tpu_custom_call.1} parent=123 // pred_fallthru
          _
        %v1423 = vld [vmem:[#allocation2] sm:$0xff]
        %v1424 = vld [vmem:[%s1109] sm:$0xff]
        %v1425 = vld [vmem:[%s1360] sm:$0xff]
        %v1426 = vld [vmem:[%s1360 + $0x8] sm:$0xff]
        %v1427 = vld [vmem:[%s1360 + $0x10] sm:$0xff]
        %v1428 = vld [vmem:[%s1360 + $0x18] sm:$0xff]
        %v1429 = vld [vmem:[%s1365] sm:$0xff]
        %v1430 = vld [vmem:[%s1365 + $0x8] sm:$0xff]
        %v1431 = vld [vmem:[%s1365 + $0x10] sm:$0xff]
        %v1432 = vld [vmem:[%s1365 + $0x18] sm:$0xff]
        %v1433 = vld [vmem:[%s1370] sm:$0xff]
        %v1434 = vld [vmem:[%s1370 + $0x8] sm:$0xff]
        %v1435 = vld [vmem:[%s1370 + $0x10] sm:$0xff]
        %v1436 = vld [vmem:[%s1370 + $0x18] sm:$0xff]
        %v1437 = vld [vmem:[%s1375] sm:$0xff]
        %v1438 = vld [vmem:[%s1375 + $0x8] sm:$0xff]
        %v1439 = vld [vmem:[%s1375 + $0x10] sm:$0xff]
        %v1440 = vld [vmem:[%s1375 + $0x18] sm:$0xff]
        %v1441 = vld [vmem:[%s1378] sm:$0x1]
        %v1442 = vld [vmem:[%s1118] sm:$0x1]
        %v1443 = vld [vmem:[%s1381] sm:$0x1]
        %v1444 = vld [vmem:[%s1384] sm:$0x1]
        %v1446 = vperm.slane %v1441, 0
        %vm1448 = vcmask 261120
        %v1450 = vsel %vm1448, %v1423, 0
        %1452 = vmatpush.msra.mxu0 0.0
        %1453 = vmatpush.msra.mxu0 0.0
        %1454 = vmatpush.msra.mxu0 0.0
        %1455 = vmatpush.msra.mxu0 0.0
        %1456 = vmatpush.msra.mxu0 0.0
        %1457 = vmatpush.msra.mxu0 0.0
        %1458 = vmatpush.msra.mxu0 0.0
        %1459 = vmatpush.msra.mxu0 0.0
        %1460 = vmatpush.msra.mxu0 0.0
        %1461 = vmatpush.msra.mxu0 0.0
        %1462 = vmatpush.msra.mxu0 0.0
        %1463 = vmatpush.msra.mxu0 0.0
        %1464 = vmatpush.msra.mxu0 %v1428
        %1465 = vmatpush.msra.mxu0 %v1427
        %1466 = vmatpush.msra.mxu0 %v1426
        %1467 = vmatpush.msra.mxu0 %v1425
        %1468 = vmatmul.f32.gmra.mxu0 %v1450
        %v1469 = vpop.f32.mrf.mxu0
        %v1470 = vadd.f32 %v1446, %v1469
        %1471 = vdwg.mxu0
        %v1473 = vperm.slane %v1442, 0
        %1475 = vmatpush.msra.mxu0 0.0
        %1476 = vmatpush.msra.mxu0 0.0
        %1477 = vmatpush.msra.mxu0 0.0
        %1478 = vmatpush.msra.mxu0 0.0
        %1479 = vmatpush.msra.mxu0 0.0
        %1480 = vmatpush.msra.mxu0 0.0
        %1481 = vmatpush.msra.mxu0 0.0
        %1482 = vmatpush.msra.mxu0 0.0
        %1483 = vmatpush.msra.mxu0 0.0
        %1484 = vmatpush.msra.mxu0 0.0
        %1485 = vmatpush.msra.mxu0 0.0
        %1486 = vmatpush.msra.mxu0 0.0
        %1487 = vmatpush.msra.mxu0 %v1432
        %1488 = vmatpush.msra.mxu0 %v1431
        %1489 = vmatpush.msra.mxu0 %v1430
        %1490 = vmatpush.msra.mxu0 %v1429
        %1491 = vmatmul.f32.gmra.mxu0 %v1450
        %v1492 = vpop.f32.mrf.mxu0
        %v1493 = vadd.f32 %v1473, %v1492
        %1494 = vdwg.mxu0
        %v1496 = vperm.slane %v1443, 0
        %1498 = vmatpush.msra.mxu0 0.0
        %1499 = vmatpush.msra.mxu0 0.0
        %1500 = vmatpush.msra.mxu0 0.0
        %1501 = vmatpush.msra.mxu0 0.0
        %1502 = vmatpush.msra.mxu0 0.0
        %1503 = vmatpush.msra.mxu0 0.0
        %1504 = vmatpush.msra.mxu0 0.0
        %1505 = vmatpush.msra.mxu0 0.0
        %1506 = vmatpush.msra.mxu0 0.0
        %1507 = vmatpush.msra.mxu0 0.0
        %1508 = vmatpush.msra.mxu0 0.0
        %1509 = vmatpush.msra.mxu0 0.0
        %1510 = vmatpush.msra.mxu0 %v1436
        %1511 = vmatpush.msra.mxu0 %v1435
        %1512 = vmatpush.msra.mxu0 %v1434
        %1513 = vmatpush.msra.mxu0 %v1433
        %1514 = vmatmul.f32.gmra.mxu0 %v1450
        %v1515 = vpop.f32.mrf.mxu0
        %v1516 = vadd.f32 %v1496, %v1515
        %1517 = vdwg.mxu0
        %vm1518 = vcmask 64512
        %v1520 = vsel %vm1518, %v1470, 0
        %v1523 = vsel %vm1518, %v1493, 0
        %1525 = vmatpush.xpose.msra.mxu0 0.0
        %1526 = vmatpush.xpose.msra.mxu0 0.0
        %1527 = vmatpush.xpose.msra.mxu0 0.0
        %1528 = vmatpush.xpose.msra.mxu0 0.0
        %1529 = vmatpush.xpose.msra.mxu0 0.0
        %1530 = vmatpush.xpose.msra.mxu0 0.0
        %1531 = vmatpush.xpose.msra.mxu0 0.0
        %1532 = vmatpush.xpose.msra.mxu0 0.0
        %1533 = vmatpush.xpose.msra.mxu0 0.0
        %1534 = vmatpush.xpose.msra.mxu0 0.0
        %1535 = vmatpush.xpose.msra.mxu0 0.0
        %1536 = vmatpush.xpose.msra.mxu0 0.0
        %1537 = vmatpush.xpose.msra.mxu0 0.0
        %1538 = vmatpush.xpose.msra.mxu0 0.0
        %1539 = vmatpush.xpose.msra.mxu0 0.0
        %1540 = vmatpush.xpose.msra.mxu0 %v1523
        %1541 = vmatmul.f32.gmra.mxu0 %v1520
        %v1542 = vpop.f32.mrf.mxu0
        %v1543 = vadd.f32 0.0, %v1542
        %1544 = vdwg.mxu0
        %v1545 = vmul.f32 %v1543, 0.35355338
        %v1546 = vsel %vm1518, %v1545, -inf
        %1547 = vmax.xlane.f32.xlu0 %v1546
        %v1548 = vpop.xlane.xlu0 %1547
        %v1549 = vsub.f32 %v1545, %v1548
        %v1550 = vmul.f32 %v1549, 1.442695
        %v1551 = vpow.pop %v1550
        %v1552 = vsel %vm1518, %v1551, 0.0
        %1553 = vadd.xlane.f32.xlu0 %v1552
        %v1554 = vpop.xlane.xlu0 %1553
        %v1555 = vrcp.pop %v1554
        %v1556 = vmul.f32 %v1551, %v1555
        %v1558 = vsel %vm1518, %v1556, 0
        %1560 = vmatpush.msra.mxu0 0.0
        %1561 = vmatpush.msra.mxu0 0.0
        %1562 = vmatpush.msra.mxu0 0.0
        %1563 = vmatpush.msra.mxu0 0.0
        %1564 = vmatpush.msra.mxu0 0.0
        %1565 = vmatpush.msra.mxu0 0.0
        %1566 = vmatpush.msra.mxu0 0.0
        %1567 = vmatpush.msra.mxu0 0.0
        %1568 = vmatpush.msra.mxu0 0.0
        %1569 = vmatpush.msra.mxu0 0.0
        %1570 = vmatpush.msra.mxu0 0.0
        %1571 = vmatpush.msra.mxu0 0.0
        %1572 = vmatpush.msra.mxu0 0.0
        %1573 = vmatpush.msra.mxu0 0.0
        %1574 = vmatpush.msra.mxu0 0.0
        %1575 = vmatpush.msra.mxu0 %v1516
        %1576 = vmatmul.f32.gmra.mxu0 %v1558
        %v1577 = vpop.f32.mrf.mxu0
        %v1578 = vadd.f32 0.0, %v1577
        %1579 = vdwg.mxu0
        %1580 = vst.msk [vmem:[#allocation3] sm:$0xff] %vm1518, %v1578
        %1581 = vrot.lane.b32.xlu0 %v1470, 120
        %v1582 = vpop.permute.xlu0 %1581
        %1583 = vrot.lane.b32.xlu0 %v1493, 120
        %v1584 = vpop.permute.xlu0 %1583
        %v1585 = vsel %vm1518, %v1582, 0
        %v1587 = vsel %vm1518, %v1584, 0
        %1589 = vmatpush.xpose.msra.mxu0 0.0
        %1590 = vmatpush.xpose.msra.mxu0 0.0
        %1591 = vmatpush.xpose.msra.mxu0 0.0
        %1592 = vmatpush.xpose.msra.mxu0 0.0
        %1593 = vmatpush.xpose.msra.mxu0 0.0
        %1594 = vmatpush.xpose.msra.mxu0 0.0
        %1595 = vmatpush.xpose.msra.mxu0 0.0
        %1596 = vmatpush.xpose.msra.mxu0 0.0
        %1597 = vmatpush.xpose.msra.mxu0 0.0
        %1598 = vmatpush.xpose.msra.mxu0 0.0
        %1599 = vmatpush.xpose.msra.mxu0 0.0
        %1600 = vmatpush.xpose.msra.mxu0 0.0
        %1601 = vmatpush.xpose.msra.mxu0 0.0
        %1602 = vmatpush.xpose.msra.mxu0 0.0
        %1603 = vmatpush.xpose.msra.mxu0 0.0
        %1604 = vmatpush.xpose.msra.mxu0 %v1587
        %1605 = vmatmul.f32.gmra.mxu0 %v1585
        %v1606 = vpop.f32.mrf.mxu0
        %v1607 = vadd.f32 0.0, %v1606
        %1608 = vdwg.mxu0
        %v1609 = vmul.f32 %v1607, 0.35355338
        %v1610 = vsel %vm1518, %v1609, -inf
        %1611 = vmax.xlane.f32.xlu0 %v1610
        %v1612 = vpop.xlane.xlu0 %1611
        %v1613 = vsub.f32 %v1609, %v1612
        %v1614 = vmul.f32 %v1613, 1.442695
        %v1615 = vpow.pop %v1614
        %v1616 = vsel %vm1518, %v1615, 0.0
        %1617 = vadd.xlane.f32.xlu0 %v1616
        %v1618 = vpop.xlane.xlu0 %1617
        %v1619 = vrcp.pop %v1618
        %v1620 = vmul.f32 %v1615, %v1619
        %1622 = vrot.lane.b32.xlu0 %v1516, 120
        %v1623 = vpop.permute.xlu0 %1622
        %v1626 = vsel %vm1518, %v1620, 0
        %1628 = vmatpush.msra.mxu0 0.0
        %1629 = vmatpush.msra.mxu0 0.0
        %1630 = vmatpush.msra.mxu0 0.0
        %1631 = vmatpush.msra.mxu0 0.0
        %1632 = vmatpush.msra.mxu0 0.0
        %1633 = vmatpush.msra.mxu0 0.0
        %1634 = vmatpush.msra.mxu0 0.0
        %1635 = vmatpush.msra.mxu0 0.0
        %1636 = vmatpush.msra.mxu0 0.0
        %1637 = vmatpush.msra.mxu0 0.0
        %1638 = vmatpush.msra.mxu0 0.0
        %1639 = vmatpush.msra.mxu0 0.0
        %1640 = vmatpush.msra.mxu0 0.0
        %1641 = vmatpush.msra.mxu0 0.0
        %1642 = vmatpush.msra.mxu0 0.0
        %1643 = vmatpush.msra.mxu0 %v1623
        %1644 = vmatmul.f32.gmra.mxu0 %v1626
        %v1645 = vpop.f32.mrf.mxu0
        %v1646 = vadd.f32 0.0, %v1645
        %1647 = vdwg.mxu0
        %1649 = vrot.lane.b32.xlu0 %v1646, 8
        %v1650 = vpop.permute.xlu0 %1649
        %vm1652 = vcmask 130112
        %1653 = vst.msk [vmem:[#allocation3] sm:$0xff] %vm1652, %v1650
        %1654 = vrot.lane.b32.xlu0 %v1470, 112
        %v1655 = vpop.permute.xlu0 %1654
        %1656 = vrot.lane.b32.xlu0 %v1493, 112
        %v1657 = vpop.permute.xlu0 %1656
        %v1658 = vsel %vm1518, %v1655, 0
        %v1660 = vsel %vm1518, %v1657, 0
        %1662 = vmatpush.xpose.msra.mxu0 0.0
        %1663 = vmatpush.xpose.msra.mxu0 0.0
        %1664 = vmatpush.xpose.msra.mxu0 0.0
        %1665 = vmatpush.xpose.msra.mxu0 0.0
        %1666 = vmatpush.xpose.msra.mxu0 0.0
        %1667 = vmatpush.xpose.msra.mxu0 0.0
        %1668 = vmatpush.xpose.msra.mxu0 0.0
        %1669 = vmatpush.xpose.msra.mxu0 0.0
        %1670 = vmatpush.xpose.msra.mxu0 0.0
        %1671 = vmatpush.xpose.msra.mxu0 0.0
        %1672 = vmatpush.xpose.msra.mxu0 0.0
        %1673 = vmatpush.xpose.msra.mxu0 0.0
        %1674 = vmatpush.xpose.msra.mxu0 0.0
        %1675 = vmatpush.xpose.msra.mxu0 0.0
        %1676 = vmatpush.xpose.msra.mxu0 0.0
        %1677 = vmatpush.xpose.msra.mxu0 %v1660
        %1678 = vmatmul.f32.gmra.mxu0 %v1658
        %v1679 = vpop.f32.mrf.mxu0
        %v1680 = vadd.f32 0.0, %v1679
        %1681 = vdwg.mxu0
        %v1682 = vmul.f32 %v1680, 0.35355338
        %v1683 = vsel %vm1518, %v1682, -inf
        %1684 = vmax.xlane.f32.xlu0 %v1683
        %v1685 = vpop.xlane.xlu0 %1684
        %v1686 = vsub.f32 %v1682, %v1685
        %v1687 = vmul.f32 %v1686, 1.442695
        %v1688 = vpow.pop %v1687
        %v1689 = vsel %vm1518, %v1688, 0.0
        %1690 = vadd.xlane.f32.xlu0 %v1689
        %v1691 = vpop.xlane.xlu0 %1690
        %v1692 = vrcp.pop %v1691
        %v1693 = vmul.f32 %v1688, %v1692
        %1694 = vrot.lane.b32.xlu0 %v1516, 112
        %v1695 = vpop.permute.xlu0 %1694
        %v1698 = vsel %vm1518, %v1693, 0
        %1700 = vmatpush.msra.mxu0 0.0
        %1701 = vmatpush.msra.mxu0 0.0
        %1702 = vmatpush.msra.mxu0 0.0
        %1703 = vmatpush.msra.mxu0 0.0
        %1704 = vmatpush.msra.mxu0 0.0
        %1705 = vmatpush.msra.mxu0 0.0
        %1706 = vmatpush.msra.mxu0 0.0
        %1707 = vmatpush.msra.mxu0 0.0
        %1708 = vmatpush.msra.mxu0 0.0
        %1709 = vmatpush.msra.mxu0 0.0
        %1710 = vmatpush.msra.mxu0 0.0
        %1711 = vmatpush.msra.mxu0 0.0
        %1712 = vmatpush.msra.mxu0 0.0
        %1713 = vmatpush.msra.mxu0 0.0
        %1714 = vmatpush.msra.mxu0 0.0
        %1715 = vmatpush.msra.mxu0 %v1695
        %1716 = vmatmul.f32.gmra.mxu0 %v1698
        %v1717 = vpop.f32.mrf.mxu0
        %v1718 = vadd.f32 0.0, %v1717
        %1719 = vdwg.mxu0
        %1721 = vrot.lane.b32.xlu0 %v1718, 16
        %v1722 = vpop.permute.xlu0 %1721
        %vm1724 = vcmask 195712
        %1725 = vst.msk [vmem:[#allocation3] sm:$0xff] %vm1724, %v1722
        %1726 = vrot.lane.b32.xlu0 %v1470, 104
        %v1727 = vpop.permute.xlu0 %1726
        %1728 = vrot.lane.b32.xlu0 %v1493, 104
        %v1729 = vpop.permute.xlu0 %1728
        %v1730 = vsel %vm1518, %v1727, 0
        %v1732 = vsel %vm1518, %v1729, 0
        %1734 = vmatpush.xpose.msra.mxu0 0.0
        %1735 = vmatpush.xpose.msra.mxu0 0.0
        %1736 = vmatpush.xpose.msra.mxu0 0.0
        %1737 = vmatpush.xpose.msra.mxu0 0.0
        %1738 = vmatpush.xpose.msra.mxu0 0.0
        %1739 = vmatpush.xpose.msra.mxu0 0.0
        %1740 = vmatpush.xpose.msra.mxu0 0.0
        %1741 = vmatpush.xpose.msra.mxu0 0.0
        %1742 = vmatpush.xpose.msra.mxu0 0.0
        %1743 = vmatpush.xpose.msra.mxu0 0.0
        %1744 = vmatpush.xpose.msra.mxu0 0.0
        %1745 = vmatpush.xpose.msra.mxu0 0.0
        %1746 = vmatpush.xpose.msra.mxu0 0.0
        %1747 = vmatpush.xpose.msra.mxu0 0.0
        %1748 = vmatpush.xpose.msra.mxu0 0.0
        %1749 = vmatpush.xpose.msra.mxu0 %v1732
        %1750 = vmatmul.f32.gmra.mxu0 %v1730
        %v1751 = vpop.f32.mrf.mxu0
        %v1752 = vadd.f32 0.0, %v1751
        %1753 = vdwg.mxu0
        %v1754 = vmul.f32 %v1752, 0.35355338
        %v1755 = vsel %vm1518, %v1754, -inf
        %1756 = vmax.xlane.f32.xlu0 %v1755
        %v1757 = vpop.xlane.xlu0 %1756
        %v1758 = vsub.f32 %v1754, %v1757
        %v1759 = vmul.f32 %v1758, 1.442695
        %v1760 = vpow.pop %v1759
        %v1761 = vsel %vm1518, %v1760, 0.0
        %1762 = vadd.xlane.f32.xlu0 %v1761
        %v1763 = vpop.xlane.xlu0 %1762
        %v1764 = vrcp.pop %v1763
        %v1765 = vmul.f32 %v1760, %v1764
        %1766 = vrot.lane.b32.xlu0 %v1516, 104
        %v1767 = vpop.permute.xlu0 %1766
        %v1770 = vsel %vm1518, %v1765, 0
        %1772 = vmatpush.msra.mxu0 0.0
        %1773 = vmatpush.msra.mxu0 0.0
        %1774 = vmatpush.msra.mxu0 0.0
        %1775 = vmatpush.msra.mxu0 0.0
        %1776 = vmatpush.msra.mxu0 0.0
        %1777 = vmatpush.msra.mxu0 0.0
        %1778 = vmatpush.msra.mxu0 0.0
        %1779 = vmatpush.msra.mxu0 0.0
        %1780 = vmatpush.msra.mxu0 0.0
        %1781 = vmatpush.msra.mxu0 0.0
        %1782 = vmatpush.msra.mxu0 0.0
        %1783 = vmatpush.msra.mxu0 0.0
        %1784 = vmatpush.msra.mxu0 0.0
        %1785 = vmatpush.msra.mxu0 0.0
        %1786 = vmatpush.msra.mxu0 0.0
        %1787 = vmatpush.msra.mxu0 %v1767
        %1788 = vmatmul.f32.gmra.mxu0 %v1770
        %v1789 = vpop.f32.mrf.mxu0
        %v1790 = vadd.f32 0.0, %v1789
        %1791 = vdwg.mxu0
        %1793 = vrot.lane.b32.xlu0 %v1790, 24
        %v1794 = vpop.permute.xlu0 %1793
        %vm1796 = vcmask 261312
        %1797 = vst.msk [vmem:[#allocation3] sm:$0xff] %vm1796, %v1794
        %v1798 = vld [vmem:[#allocation3] sm:$0xff]
        %v1800 = vperm.slane %v1444, 0
        %v1803 = vsel %vm1448, %v1798, 0
        %1805 = vmatpush.msra.mxu0 0.0
        %1806 = vmatpush.msra.mxu0 0.0
        %1807 = vmatpush.msra.mxu0 0.0
        %1808 = vmatpush.msra.mxu0 0.0
        %1809 = vmatpush.msra.mxu0 0.0
        %1810 = vmatpush.msra.mxu0 0.0
        %1811 = vmatpush.msra.mxu0 0.0
        %1812 = vmatpush.msra.mxu0 0.0
        %1813 = vmatpush.msra.mxu0 0.0
        %1814 = vmatpush.msra.mxu0 0.0
        %1815 = vmatpush.msra.mxu0 0.0
        %1816 = vmatpush.msra.mxu0 0.0
        %1817 = vmatpush.msra.mxu0 %v1440
        %1818 = vmatpush.msra.mxu0 %v1439
        %1819 = vmatpush.msra.mxu0 %v1438
        %1820 = vmatpush.msra.mxu0 %v1437
        %1821 = vmatmul.f32.gmra.mxu0 %v1803
        %v1822 = vpop.f32.mrf.mxu0
        %v1823 = vadd.f32 %v1800, %v1822
        %1824 = vdwg.mxu0
        %v1825 = vadd.f32 %v1823, %v1423
        %v1826 = vld [vmem:[%s1157] sm:$0x1]
        %v1827 = vld [vmem:[%s1166] sm:$0x1]
        %v1828 = vsel %vm1448, %v1825, 0.0
        %1829 = vadd.xlane.f32.xlu0 %v1828
        %v1830 = vpop.xlane.xlu0 %1829
        %v1831 = vrcp.pop 32.0
        %v1832 = vmul.f32 32.0, %v1831
        %v1833 = vsub.f32 1.0, %v1832
        %v1834 = vmul.f32 %v1831, %v1833
        %v1835 = vadd.f32 %v1831, %v1834
        %vm1836 = vweird.f32 %v1831
        %v1837 = vsel %vm1836, %v1831, %v1835
        %v1838 = vmul.f32 %v1830, %v1837
        %v1839 = vsub.f32 %v1825, %v1838
        %v1840 = vmul.f32 %v1839, %v1839
        %v1841 = vsel %vm1448, %v1840, 0.0
        %1842 = vadd.xlane.f32.xlu0 %v1841
        %v1843 = vpop.xlane.xlu0 %1842
        %v1844 = vmul.f32 %v1843, %v1837
        %v1845 = vadd.f32 %v1844, 1e-05
        %v1846 = vrsqrt.pop %v1845
        %v1847 = vmul.f32 %v1846, %v1845
        %v1848 = vmul.f32 %v1847, %v1846
        %v1849 = vmul.f32 0.5, %v1848
        %v1850 = vsub.f32 1.5, %v1849
        %v1851 = vmul.f32 %v1846, %v1850
        %vm1852 = vweird.f32 %v1845
        %vm1853 = vweird.f32 %v1846
        %vm1854 = vmor %vm1852, %vm1853
        %v1855 = vsel %vm1854, %v1846, %v1851
        %v1856 = vmul.f32 %v1839, %v1855
        %v1858 = vperm.slane %v1826, 0
        %v1860 = vmul.f32 %v1856, %v1858
        %v1862 = vperm.slane %v1827, 0
        %v1864 = vadd.f32 %v1860, %v1862
        %v1865 = vld [vmem:[%s1389] sm:$0xff]
        %v1866 = vld [vmem:[%s1389 + $0x8] sm:$0xff]
        %v1867 = vld [vmem:[%s1389 + $0x10] sm:$0xff]
        %v1868 = vld [vmem:[%s1389 + $0x18] sm:$0xff]
        %v1869 = vld [vmem:[%s1128] sm:$0xff]
        %v1870 = vld [vmem:[%s1128 + $0x8] sm:$0xff]
        %v1871 = vld [vmem:[%s1128 + $0x10] sm:$0xff]
        %v1872 = vld [vmem:[%s1128 + $0x18] sm:$0xff]
        %v1873 = vld [vmem:[%s1138] sm:$0xff]
        %v1874 = vld [vmem:[%s1138 + $0x8] sm:$0xff]
        %v1875 = vld [vmem:[%s1138 + $0x10] sm:$0xff]
        %v1876 = vld [vmem:[%s1138 + $0x18] sm:$0xff]
        %v1877 = vld [vmem:[%s1148] sm:$0xff]
        %v1878 = vld [vmem:[%s1148 + $0x8] sm:$0xff]
        %v1879 = vld [vmem:[%s1148 + $0x10] sm:$0xff]
        %v1880 = vld [vmem:[%s1148 + $0x18] sm:$0xff]
        %v1881 = vld [vmem:[%s1392] sm:$0x1]
        %v1882 = vld [vmem:[%s1395] sm:$0x1]
        %v1883 = vld [vmem:[%s1398] sm:$0x1]
        %v1884 = vld [vmem:[%s1401] sm:$0x1]
        %v1886 = vperm.slane %v1881, 0
        %v1889 = vsel %vm1448, %v1864, 0
        %1891 = vmatpush.msra.mxu0 0.0
        %1892 = vmatpush.msra.mxu0 0.0
        %1893 = vmatpush.msra.mxu0 0.0
        %1894 = vmatpush.msra.mxu0 0.0
        %1895 = vmatpush.msra.mxu0 0.0
        %1896 = vmatpush.msra.mxu0 0.0
        %1897 = vmatpush.msra.mxu0 0.0
        %1898 = vmatpush.msra.mxu0 0.0
        %1899 = vmatpush.msra.mxu0 0.0
        %1900 = vmatpush.msra.mxu0 0.0
        %1901 = vmatpush.msra.mxu0 0.0
        %1902 = vmatpush.msra.mxu0 0.0
        %1903 = vmatpush.msra.mxu0 %v1868
        %1904 = vmatpush.msra.mxu0 %v1867
        %1905 = vmatpush.msra.mxu0 %v1866
        %1906 = vmatpush.msra.mxu0 %v1865
        %1907 = vmatmul.f32.gmra.mxu0 %v1889
        %v1908 = vpop.f32.mrf.mxu0
        %v1909 = vadd.f32 %v1886, %v1908
        %1910 = vdwg.mxu0
        %v1912 = vperm.slane %v1882, 0
        %v1915 = vsel %vm1448, %v1424, 0
        %1917 = vmatpush.msra.mxu0 0.0
        %1918 = vmatpush.msra.mxu0 0.0
        %1919 = vmatpush.msra.mxu0 0.0
        %1920 = vmatpush.msra.mxu0 0.0
        %1921 = vmatpush.msra.mxu0 0.0
        %1922 = vmatpush.msra.mxu0 0.0
        %1923 = vmatpush.msra.mxu0 0.0
        %1924 = vmatpush.msra.mxu0 0.0
        %1925 = vmatpush.msra.mxu0 0.0
        %1926 = vmatpush.msra.mxu0 0.0
        %1927 = vmatpush.msra.mxu0 0.0
        %1928 = vmatpush.msra.mxu0 0.0
        %1929 = vmatpush.msra.mxu0 %v1872
        %1930 = vmatpush.msra.mxu0 %v1871
        %1931 = vmatpush.msra.mxu0 %v1870
        %1932 = vmatpush.msra.mxu0 %v1869
        %1933 = vmatmul.f32.gmra.mxu0 %v1915
        %v1934 = vpop.f32.mrf.mxu0
        %v1935 = vadd.f32 %v1912, %v1934
        %1936 = vdwg.mxu0
        %v1938 = vperm.slane %v1883, 0
        %1940 = vmatpush.msra.mxu0 0.0
        %1941 = vmatpush.msra.mxu0 0.0
        %1942 = vmatpush.msra.mxu0 0.0
        %1943 = vmatpush.msra.mxu0 0.0
        %1944 = vmatpush.msra.mxu0 0.0
        %1945 = vmatpush.msra.mxu0 0.0
        %1946 = vmatpush.msra.mxu0 0.0
        %1947 = vmatpush.msra.mxu0 0.0
        %1948 = vmatpush.msra.mxu0 0.0
        %1949 = vmatpush.msra.mxu0 0.0
        %1950 = vmatpush.msra.mxu0 0.0
        %1951 = vmatpush.msra.mxu0 0.0
        %1952 = vmatpush.msra.mxu0 %v1876
        %1953 = vmatpush.msra.mxu0 %v1875
        %1954 = vmatpush.msra.mxu0 %v1874
        %1955 = vmatpush.msra.mxu0 %v1873
        %1956 = vmatmul.f32.gmra.mxu0 %v1915
        %v1957 = vpop.f32.mrf.mxu0
        %v1958 = vadd.f32 %v1938, %v1957
        %1959 = vdwg.mxu0
        %v1961 = vsel %vm1518, %v1909, 0
        %v1964 = vsel %vm1518, %v1935, 0
        %1966 = vmatpush.xpose.msra.mxu0 0.0
        %1967 = vmatpush.xpose.msra.mxu0 0.0
        %1968 = vmatpush.xpose.msra.mxu0 0.0
        %1969 = vmatpush.xpose.msra.mxu0 0.0
        %1970 = vmatpush.xpose.msra.mxu0 0.0
        %1971 = vmatpush.xpose.msra.mxu0 0.0
        %1972 = vmatpush.xpose.msra.mxu0 0.0
        %1973 = vmatpush.xpose.msra.mxu0 0.0
        %1974 = vmatpush.xpose.msra.mxu0 0.0
        %1975 = vmatpush.xpose.msra.mxu0 0.0
        %1976 = vmatpush.xpose.msra.mxu0 0.0
        %1977 = vmatpush.xpose.msra.mxu0 0.0
        %1978 = vmatpush.xpose.msra.mxu0 0.0
        %1979 = vmatpush.xpose.msra.mxu0 0.0
        %1980 = vmatpush.xpose.msra.mxu0 0.0
        %1981 = vmatpush.xpose.msra.mxu0 %v1964
        %1982 = vmatmul.f32.gmra.mxu0 %v1961
        %v1983 = vpop.f32.mrf.mxu0
        %v1984 = vadd.f32 0.0, %v1983
        %1985 = vdwg.mxu0
        %v1986 = vmul.f32 %v1984, 0.35355338
        %v1987 = vsel %vm1518, %v1986, -inf
        %1988 = vmax.xlane.f32.xlu0 %v1987
        %v1989 = vpop.xlane.xlu0 %1988
        %v1990 = vsub.f32 %v1986, %v1989
        %v1991 = vmul.f32 %v1990, 1.442695
        %v1992 = vpow.pop %v1991
        %v1993 = vsel %vm1518, %v1992, 0.0
        %1994 = vadd.xlane.f32.xlu0 %v1993
        %v1995 = vpop.xlane.xlu0 %1994
        %v1996 = vrcp.pop %v1995
        %v1997 = vmul.f32 %v1992, %v1996
        %v1999 = vsel %vm1518, %v1997, 0
        %2001 = vmatpush.msra.mxu0 0.0
        %2002 = vmatpush.msra.mxu0 0.0
        %2003 = vmatpush.msra.mxu0 0.0
        %2004 = vmatpush.msra.mxu0 0.0
        %2005 = vmatpush.msra.mxu0 0.0
        %2006 = vmatpush.msra.mxu0 0.0
        %2007 = vmatpush.msra.mxu0 0.0
        %2008 = vmatpush.msra.mxu0 0.0
        %2009 = vmatpush.msra.mxu0 0.0
        %2010 = vmatpush.msra.mxu0 0.0
        %2011 = vmatpush.msra.mxu0 0.0
        %2012 = vmatpush.msra.mxu0 0.0
        %2013 = vmatpush.msra.mxu0 0.0
        %2014 = vmatpush.msra.mxu0 0.0
        %2015 = vmatpush.msra.mxu0 0.0
        %2016 = vmatpush.msra.mxu0 %v1958
        %2017 = vmatmul.f32.gmra.mxu0 %v1999
        %v2018 = vpop.f32.mrf.mxu0
        %v2019 = vadd.f32 0.0, %v2018
        %2020 = vdwg.mxu0
        %2021 = vst.msk [vmem:[#allocation3] sm:$0xff] %vm1518, %v2019
        %2022 = vrot.lane.b32.xlu0 %v1909, 120
        %v2023 = vpop.permute.xlu0 %2022
        %2024 = vrot.lane.b32.xlu0 %v1935, 120
        %v2025 = vpop.permute.xlu0 %2024
        %v2026 = vsel %vm1518, %v2023, 0
        %v2028 = vsel %vm1518, %v2025, 0
        %2030 = vmatpush.xpose.msra.mxu0 0.0
        %2031 = vmatpush.xpose.msra.mxu0 0.0
        %2032 = vmatpush.xpose.msra.mxu0 0.0
        %2033 = vmatpush.xpose.msra.mxu0 0.0
        %2034 = vmatpush.xpose.msra.mxu0 0.0
        %2035 = vmatpush.xpose.msra.mxu0 0.0
        %2036 = vmatpush.xpose.msra.mxu0 0.0
        %2037 = vmatpush.xpose.msra.mxu0 0.0
        %2038 = vmatpush.xpose.msra.mxu0 0.0
        %2039 = vmatpush.xpose.msra.mxu0 0.0
        %2040 = vmatpush.xpose.msra.mxu0 0.0
        %2041 = vmatpush.xpose.msra.mxu0 0.0
        %2042 = vmatpush.xpose.msra.mxu0 0.0
        %2043 = vmatpush.xpose.msra.mxu0 0.0
        %2044 = vmatpush.xpose.msra.mxu0 0.0
        %2045 = vmatpush.xpose.msra.mxu0 %v2028
        %2046 = vmatmul.f32.gmra.mxu0 %v2026
        %v2047 = vpop.f32.mrf.mxu0
        %v2048 = vadd.f32 0.0, %v2047
        %2049 = vdwg.mxu0
        %v2050 = vmul.f32 %v2048, 0.35355338
        %v2051 = vsel %vm1518, %v2050, -inf
        %2052 = vmax.xlane.f32.xlu0 %v2051
        %v2053 = vpop.xlane.xlu0 %2052
        %v2054 = vsub.f32 %v2050, %v2053
        %v2055 = vmul.f32 %v2054, 1.442695
        %v2056 = vpow.pop %v2055
        %v2057 = vsel %vm1518, %v2056, 0.0
        %2058 = vadd.xlane.f32.xlu0 %v2057
        %v2059 = vpop.xlane.xlu0 %2058
        %v2060 = vrcp.pop %v2059
        %v2061 = vmul.f32 %v2056, %v2060
        %2063 = vrot.lane.b32.xlu0 %v1958, 120
        %v2064 = vpop.permute.xlu0 %2063
        %v2067 = vsel %vm1518, %v2061, 0
        %2069 = vmatpush.msra.mxu0 0.0
        %2070 = vmatpush.msra.mxu0 0.0
        %2071 = vmatpush.msra.mxu0 0.0
        %2072 = vmatpush.msra.mxu0 0.0
        %2073 = vmatpush.msra.mxu0 0.0
        %2074 = vmatpush.msra.mxu0 0.0
        %2075 = vmatpush.msra.mxu0 0.0
        %2076 = vmatpush.msra.mxu0 0.0
        %2077 = vmatpush.msra.mxu0 0.0
        %2078 = vmatpush.msra.mxu0 0.0
        %2079 = vmatpush.msra.mxu0 0.0
        %2080 = vmatpush.msra.mxu0 0.0
        %2081 = vmatpush.msra.mxu0 0.0
        %2082 = vmatpush.msra.mxu0 0.0
        %2083 = vmatpush.msra.mxu0 0.0
        %2084 = vmatpush.msra.mxu0 %v2064
        %2085 = vmatmul.f32.gmra.mxu0 %v2067
        %v2086 = vpop.f32.mrf.mxu0
        %v2087 = vadd.f32 0.0, %v2086
        %2088 = vdwg.mxu0
        %2090 = vrot.lane.b32.xlu0 %v2087, 8
        %v2091 = vpop.permute.xlu0 %2090
        %2093 = vst.msk [vmem:[#allocation3] sm:$0xff] %vm1652, %v2091
        %2094 = vrot.lane.b32.xlu0 %v1909, 112
        %v2095 = vpop.permute.xlu0 %2094
        %2096 = vrot.lane.b32.xlu0 %v1935, 112
        %v2097 = vpop.permute.xlu0 %2096
        %v2098 = vsel %vm1518, %v2095, 0
        %v2100 = vsel %vm1518, %v2097, 0
        %2102 = vmatpush.xpose.msra.mxu0 0.0
        %2103 = vmatpush.xpose.msra.mxu0 0.0
        %2104 = vmatpush.xpose.msra.mxu0 0.0
        %2105 = vmatpush.xpose.msra.mxu0 0.0
        %2106 = vmatpush.xpose.msra.mxu0 0.0
        %2107 = vmatpush.xpose.msra.mxu0 0.0
        %2108 = vmatpush.xpose.msra.mxu0 0.0
        %2109 = vmatpush.xpose.msra.mxu0 0.0
        %2110 = vmatpush.xpose.msra.mxu0 0.0
        %2111 = vmatpush.xpose.msra.mxu0 0.0
        %2112 = vmatpush.xpose.msra.mxu0 0.0
        %2113 = vmatpush.xpose.msra.mxu0 0.0
        %2114 = vmatpush.xpose.msra.mxu0 0.0
        %2115 = vmatpush.xpose.msra.mxu0 0.0
        %2116 = vmatpush.xpose.msra.mxu0 0.0
        %2117 = vmatpush.xpose.msra.mxu0 %v2100
        %2118 = vmatmul.f32.gmra.mxu0 %v2098
        %v2119 = vpop.f32.mrf.mxu0
        %v2120 = vadd.f32 0.0, %v2119
        %2121 = vdwg.mxu0
        %v2122 = vmul.f32 %v2120, 0.35355338
        %v2123 = vsel %vm1518, %v2122, -inf
        %2124 = vmax.xlane.f32.xlu0 %v2123
        %v2125 = vpop.xlane.xlu0 %2124
        %v2126 = vsub.f32 %v2122, %v2125
        %v2127 = vmul.f32 %v2126, 1.442695
        %v2128 = vpow.pop %v2127
        %v2129 = vsel %vm1518, %v2128, 0.0
        %2130 = vadd.xlane.f32.xlu0 %v2129
        %v2131 = vpop.xlane.xlu0 %2130
        %v2132 = vrcp.pop %v2131
        %v2133 = vmul.f32 %v2128, %v2132
        %2134 = vrot.lane.b32.xlu0 %v1958, 112
        %v2135 = vpop.permute.xlu0 %2134
        %v2138 = vsel %vm1518, %v2133, 0
        %2140 = vmatpush.msra.mxu0 0.0
        %2141 = vmatpush.msra.mxu0 0.0
        %2142 = vmatpush.msra.mxu0 0.0
        %2143 = vmatpush.msra.mxu0 0.0
        %2144 = vmatpush.msra.mxu0 0.0
        %2145 = vmatpush.msra.mxu0 0.0
        %2146 = vmatpush.msra.mxu0 0.0
        %2147 = vmatpush.msra.mxu0 0.0
        %2148 = vmatpush.msra.mxu0 0.0
        %2149 = vmatpush.msra.mxu0 0.0
        %2150 = vmatpush.msra.mxu0 0.0
        %2151 = vmatpush.msra.mxu0 0.0
        %2152 = vmatpush.msra.mxu0 0.0
        %2153 = vmatpush.msra.mxu0 0.0
        %2154 = vmatpush.msra.mxu0 0.0
        %2155 = vmatpush.msra.mxu0 %v2135
        %2156 = vmatmul.f32.gmra.mxu0 %v2138
        %v2157 = vpop.f32.mrf.mxu0
        %v2158 = vadd.f32 0.0, %v2157
        %2159 = vdwg.mxu0
        %2161 = vrot.lane.b32.xlu0 %v2158, 16
        %v2162 = vpop.permute.xlu0 %2161
        %2164 = vst.msk [vmem:[#allocation3] sm:$0xff] %vm1724, %v2162
        %2165 = vrot.lane.b32.xlu0 %v1909, 104
        %v2166 = vpop.permute.xlu0 %2165
        %2167 = vrot.lane.b32.xlu0 %v1935, 104
        %v2168 = vpop.permute.xlu0 %2167
        %v2169 = vsel %vm1518, %v2166, 0
        %v2171 = vsel %vm1518, %v2168, 0
        %2173 = vmatpush.xpose.msra.mxu0 0.0
        %2174 = vmatpush.xpose.msra.mxu0 0.0
        %2175 = vmatpush.xpose.msra.mxu0 0.0
        %2176 = vmatpush.xpose.msra.mxu0 0.0
        %2177 = vmatpush.xpose.msra.mxu0 0.0
        %2178 = vmatpush.xpose.msra.mxu0 0.0
        %2179 = vmatpush.xpose.msra.mxu0 0.0
        %2180 = vmatpush.xpose.msra.mxu0 0.0
        %2181 = vmatpush.xpose.msra.mxu0 0.0
        %2182 = vmatpush.xpose.msra.mxu0 0.0
        %2183 = vmatpush.xpose.msra.mxu0 0.0
        %2184 = vmatpush.xpose.msra.mxu0 0.0
        %2185 = vmatpush.xpose.msra.mxu0 0.0
        %2186 = vmatpush.xpose.msra.mxu0 0.0
        %2187 = vmatpush.xpose.msra.mxu0 0.0
        %2188 = vmatpush.xpose.msra.mxu0 %v2171
        %2189 = vmatmul.f32.gmra.mxu0 %v2169
        %v2190 = vpop.f32.mrf.mxu0
        %v2191 = vadd.f32 0.0, %v2190
        %2192 = vdwg.mxu0
        %v2193 = vmul.f32 %v2191, 0.35355338
        %v2194 = vsel %vm1518, %v2193, -inf
        %2195 = vmax.xlane.f32.xlu0 %v2194
        %v2196 = vpop.xlane.xlu0 %2195
        %v2197 = vsub.f32 %v2193, %v2196
        %v2198 = vmul.f32 %v2197, 1.442695
        %v2199 = vpow.pop %v2198
        %v2200 = vsel %vm1518, %v2199, 0.0
        %2201 = vadd.xlane.f32.xlu0 %v2200
        %v2202 = vpop.xlane.xlu0 %2201
        %v2203 = vrcp.pop %v2202
        %v2204 = vmul.f32 %v2199, %v2203
        %2205 = vrot.lane.b32.xlu0 %v1958, 104
        %v2206 = vpop.permute.xlu0 %2205
        %v2209 = vsel %vm1518, %v2204, 0
        %2211 = vmatpush.msra.mxu0 0.0
        %2212 = vmatpush.msra.mxu0 0.0
        %2213 = vmatpush.msra.mxu0 0.0
        %2214 = vmatpush.msra.mxu0 0.0
        %2215 = vmatpush.msra.mxu0 0.0
        %2216 = vmatpush.msra.mxu0 0.0
        %2217 = vmatpush.msra.mxu0 0.0
        %2218 = vmatpush.msra.mxu0 0.0
        %2219 = vmatpush.msra.mxu0 0.0
        %2220 = vmatpush.msra.mxu0 0.0
        %2221 = vmatpush.msra.mxu0 0.0
        %2222 = vmatpush.msra.mxu0 0.0
        %2223 = vmatpush.msra.mxu0 0.0
        %2224 = vmatpush.msra.mxu0 0.0
        %2225 = vmatpush.msra.mxu0 0.0
        %2226 = vmatpush.msra.mxu0 %v2206
        %2227 = vmatmul.f32.gmra.mxu0 %v2209
        %v2228 = vpop.f32.mrf.mxu0
        %v2229 = vadd.f32 0.0, %v2228
        %2230 = vdwg.mxu0
        %2232 = vrot.lane.b32.xlu0 %v2229, 24
        %v2233 = vpop.permute.xlu0 %2232
        %2235 = vst.msk [vmem:[#allocation3] sm:$0xff] %vm1796, %v2233
        %v2236 = vld [vmem:[#allocation3] sm:$0xff]
        %v2238 = vperm.slane %v1884, 0
        %v2241 = vsel %vm1448, %v2236, 0
        %2243 = vmatpush.msra.mxu0 0.0
        %2244 = vmatpush.msra.mxu0 0.0
        %2245 = vmatpush.msra.mxu0 0.0
        %2246 = vmatpush.msra.mxu0 0.0
        %2247 = vmatpush.msra.mxu0 0.0
        %2248 = vmatpush.msra.mxu0 0.0
        %2249 = vmatpush.msra.mxu0 0.0
        %2250 = vmatpush.msra.mxu0 0.0
        %2251 = vmatpush.msra.mxu0 0.0
        %2252 = vmatpush.msra.mxu0 0.0
        %2253 = vmatpush.msra.mxu0 0.0
        %2254 = vmatpush.msra.mxu0 0.0
        %2255 = vmatpush.msra.mxu0 %v1880
        %2256 = vmatpush.msra.mxu0 %v1879
        %2257 = vmatpush.msra.mxu0 %v1878
        %2258 = vmatpush.msra.mxu0 %v1877
        %2259 = vmatmul.f32.gmra.mxu0 %v2241
        %v2260 = vpop.f32.mrf.mxu0
        %v2261 = vadd.f32 %v2238, %v2260
        %2262 = vdwg.mxu0
        %v2263 = vadd.f32 %v2261, %v1864
        %v2264 = vld [vmem:[%s1404] sm:$0x1]
        %v2265 = vld [vmem:[%s1407] sm:$0x1]
        %v2266 = vsel %vm1448, %v2263, 0.0
        %2267 = vadd.xlane.f32.xlu0 %v2266
        %v2268 = vpop.xlane.xlu0 %2267
        %v2269 = vmul.f32 %v2268, %v1837
        %v2270 = vsub.f32 %v2263, %v2269
        %v2271 = vmul.f32 %v2270, %v2270
        %v2272 = vsel %vm1448, %v2271, 0.0
        %2273 = vadd.xlane.f32.xlu0 %v2272
        %v2274 = vpop.xlane.xlu0 %2273
        %v2275 = vmul.f32 %v2274, %v1837
        %v2276 = vadd.f32 %v2275, 1e-05
        %v2277 = vrsqrt.pop %v2276
        %v2278 = vmul.f32 %v2277, %v2276
        %v2279 = vmul.f32 %v2278, %v2277
        %v2280 = vmul.f32 0.5, %v2279
        %v2281 = vsub.f32 1.5, %v2280
        %v2282 = vmul.f32 %v2277, %v2281
        %vm2283 = vweird.f32 %v2276
        %vm2284 = vweird.f32 %v2277
        %vm2285 = vmor %vm2283, %vm2284
        %v2286 = vsel %vm2285, %v2277, %v2282
        %v2287 = vmul.f32 %v2270, %v2286
        %v2289 = vperm.slane %v2264, 0
        %v2291 = vmul.f32 %v2287, %v2289
        %v2293 = vperm.slane %v2265, 0
        %v2295 = vadd.f32 %v2291, %v2293
        %v2296 = vld [vmem:[%s1176] sm:$0xff]
        %v2297 = vld [vmem:[%s1176 + $0x8] sm:$0xff]
        %v2298 = vld [vmem:[%s1176 + $0x10] sm:$0xff]
        %v2299 = vld [vmem:[%s1176 + $0x18] sm:$0xff]
        %v2300 = vld [vmem:[%s1185] sm:$0x1]
        %v2301 = vld [vmem:[%s1412] sm:$0xff]
        %v2302 = vld [vmem:[%s1412 + $0x8] sm:$0xff]
        %v2303 = vld [vmem:[%s1412 + $0x10] sm:$0xff]
        %v2304 = vld [vmem:[%s1412 + $0x18] sm:$0xff]
        %v2305 = vld [vmem:[%s1412 + $0x20] sm:$0xff]
        %v2306 = vld [vmem:[%s1412 + $0x28] sm:$0xff]
        %v2307 = vld [vmem:[%s1412 + $0x30] sm:$0xff]
        %v2308 = vld [vmem:[%s1412 + $0x38] sm:$0xff]
        %v2309 = vld [vmem:[%s1412 + $0x40] sm:$0xff]
        %v2310 = vld [vmem:[%s1412 + $0x48] sm:$0xff]
        %v2311 = vld [vmem:[%s1412 + $0x50] sm:$0xff]
        %v2312 = vld [vmem:[%s1412 + $0x58] sm:$0xff]
        %v2313 = vld [vmem:[%s1412 + $0x60] sm:$0xff]
        %v2314 = vld [vmem:[%s1412 + $0x68] sm:$0xff]
        %v2315 = vld [vmem:[%s1412 + $0x70] sm:$0xff]
        %v2316 = vld [vmem:[%s1412 + $0x78] sm:$0xff]
        %v2317 = vld [vmem:[%s1415] sm:$0x1]
        %v2319 = vperm.slane %v2300, 0
        %v2322 = vsel %vm1448, %v2295, 0
        %2324 = vmatpush.msra.mxu0 0.0
        %2325 = vmatpush.msra.mxu0 0.0
        %2326 = vmatpush.msra.mxu0 0.0
        %2327 = vmatpush.msra.mxu0 0.0
        %2328 = vmatpush.msra.mxu0 0.0
        %2329 = vmatpush.msra.mxu0 0.0
        %2330 = vmatpush.msra.mxu0 0.0
        %2331 = vmatpush.msra.mxu0 0.0
        %2332 = vmatpush.msra.mxu0 0.0
        %2333 = vmatpush.msra.mxu0 0.0
        %2334 = vmatpush.msra.mxu0 0.0
        %2335 = vmatpush.msra.mxu0 0.0
        %2336 = vmatpush.msra.mxu0 %v2299
        %2337 = vmatpush.msra.mxu0 %v2298
        %2338 = vmatpush.msra.mxu0 %v2297
        %2339 = vmatpush.msra.mxu0 %v2296
        %2340 = vmatmul.f32.gmra.mxu0 %v2322
        %v2341 = vpop.f32.mrf.mxu0
        %v2342 = vadd.f32 %v2319, %v2341
        %2343 = vdwg.mxu0
        %v2344 = vmax.f32 %v2342, 0.0
        %v2346 = vperm.slane %v2317, 0
        %2348 = vmatpush.msra.mxu0 %v2316
        %2349 = vmatpush.msra.mxu0 %v2315
        %2350 = vmatpush.msra.mxu0 %v2314
        %2351 = vmatpush.msra.mxu0 %v2313
        %2352 = vmatpush.msra.mxu0 %v2312
        %2353 = vmatpush.msra.mxu0 %v2311
        %2354 = vmatpush.msra.mxu0 %v2310
        %2355 = vmatpush.msra.mxu0 %v2309
        %2356 = vmatpush.msra.mxu0 %v2308
        %2357 = vmatpush.msra.mxu0 %v2307
        %2358 = vmatpush.msra.mxu0 %v2306
        %2359 = vmatpush.msra.mxu0 %v2305
        %2360 = vmatpush.msra.mxu0 %v2304
        %2361 = vmatpush.msra.mxu0 %v2303
        %2362 = vmatpush.msra.mxu0 %v2302
        %2363 = vmatpush.msra.mxu0 %v2301
        %2364 = vmatmul.f32.gmra.mxu0 %v2344
        %v2365 = vpop.f32.mrf.mxu0
        %v2366 = vadd.f32 %v2346, %v2365
        %2367 = vdwg.mxu0
        %2368 = vst.msk [vmem:[#allocation2] sm:$0xff] %vm1448, %v2366
        %p2369 = scmp.eq.s32.totalorder %s63, 1
        // Predicated region
        $region169: #{tpu_custom_call.1} parent=123 // pred_check
          %p2370 = pneg %p2369
        $region170: #{tpu_custom_call.1} parent=123 // pred_check_branch
          %2372 = sbr.rel (%p2370) target = $region172
        $region171: #{tpu_custom_call.1} parent=123 // pred_region
          %2373 = vst.msk [vmem:[%s1355] sm:$0xff] %vm1448, %v2366
        $region172: #{tpu_custom_call.1} parent=123 // pred_fallthru
          _
        %s2374 = sand.u32 %s754, 1
        %s2375 = scalar_lea.sflag [#allocation6], %s2374
        %s2376 = sand.u32 %s754, 1
        %s2377 = smul.addr %s2376, 8
        %s2378 = scalar_lea.vmem [#allocation21], %s2377
        // Predicated region
        $region173: #{tpu_custom_call.1} parent=123 // pred_check
          %p2379 = pneg %p764
        $region174: #{tpu_custom_call.1} parent=123 // pred_check_branch
          %2381 = sbr.rel (%p2379) target = $region176
        $region175: #{tpu_custom_call.1} parent=123 // pred_region
          %2383 = vsyncadd %s2375, 0
          %s2384 = smul.addr %s62, 8
          %s2385 = scalar_lea.hbm %s26, %s2384
          %s2387 = sshll.u32 %s2378, 4
          %s2388 = int_to_ptr.vmem [resolvable:$true] %s2387
          %s2389 = sshll.u32 %s2385, 4
          %s2390 = int_to_ptr.hbm [resolvable:$true] %s2389
          %2392 = dma.vmem_to_hbm [thread:$0]  %s2388, 128, %s2390, %s2375
        $region176: #{tpu_custom_call.1} parent=123 // pred_fallthru
          _
      $region124: #{tpu_custom_call.1} parent=5 // pred_fallthru
        _
      %p2393 = scmp.le.s32.totalorder 2, %s53
      // Predicated region
      $region177: #{tpu_custom_call.1} parent=5 // pred_check
        %p2394 = pneg %p2393
      $region178: #{tpu_custom_call.1} parent=5 // pred_check_branch
        %2396 = sbr.rel (%p2394) target = $region180
      $region179: #{tpu_custom_call.1} parent=5 // pred_region
        %s2397 = ssub.s32 %s53, 2
        // Predicated region
        $region181: #{tpu_custom_call.1} parent=179 // pred_check
          %p2398 = pneg %p770
        $region182: #{tpu_custom_call.1} parent=179 // pred_check_branch
          %2400 = sbr.rel (%p2398) target = $region184
        $region183: #{tpu_custom_call.1} parent=179 // pred_region
          %s2401 = sand.u32 %s755, 1
          %s2402 = scalar_lea.sflag [#allocation6], %s2401
          %s2403 = sand.u32 %s755, 1
          %s2404 = smul.addr %s2403, 8
          %s2405 = scalar_lea.vmem [#allocation21], %s2404
          %2407 = dma.done %s2402, 128
        $region184: #{tpu_custom_call.1} parent=179 // pred_fallthru
          _
      $region180: #{tpu_custom_call.1} parent=5 // pred_fallthru
        _
    $region6: #{tpu_custom_call.1} parent=1 // loop_footer
      %s57 = sadd.s32 1, %s53
    $region7: #{tpu_custom_call.1} parent=1 // loop_footer_branch
      %52 = sbr.rel target = $region3
    $region8: #{tpu_custom_call.1} parent=1 // loop_exit
      _
    %2408 = vsyncpa [#allocation5], 1
    %s2409 = scalar_lea.sflag [#allocation5], 1
    %2410 = vsyncpa %s2409, 1
    %2411 = vsyncpa [#allocation8], 1
    %s2412 = scalar_lea.sflag [#allocation8], 1
    %2413 = vsyncpa %s2412, 1
    %2414 = vsyncpa [#allocation11], 1
    %s2415 = scalar_lea.sflag [#allocation11], 1
    %2416 = vsyncpa %s2415, 1
    %2417 = vsyncpa [#allocation14], 1
    %s2418 = scalar_lea.sflag [#allocation14], 1
    %2419 = vsyncpa %s2418, 1
    %2420 = vsyncpa [#allocation17], 1
    %s2421 = scalar_lea.sflag [#allocation17], 1
    %2422 = vsyncpa %s2421, 1
    %2423 = vsyncpa [#allocation20], 1
    %s2424 = scalar_lea.sflag [#allocation20], 1
    %2425 = vsyncpa %s2424, 1
    %2426 = vsyncpa [#allocation6], 1
    %s2427 = scalar_lea.sflag [#allocation6], 1
    %2428 = vsyncpa %s2427, 1

</llo_original>
